<compile_context>
chip_gen: v6e
topology: v6e:2x2x1
jax: 0.10.0
libtpu: 0.0.40
codegen_flags: <defaults>
</compile_context>

<pallas_src>
import functools

import jax
import jax.numpy as jnp
from jax.experimental import pallas as pl
from jax.experimental.pallas import tpu as pltpu


# ----------------------------- configuration --------------------------------
B = 2            # batch of windows
N = 16           # tokens per window
DIM = 32         # channel dim
NUM_HEADS = 4
HEAD_DIM = DIM // NUM_HEADS
MLP_RATIO = 4.0
HIDDEN = int(DIM * MLP_RATIO)
LN_EPS = 1e-5
# NOTE: the PyTorch module scales by dim**-0.5 (full dim, NOT head_dim).
SCALE = DIM ** (-0.5)


def _layernorm(x, gamma, beta):
    # x: (M, C), gamma/beta: (1, C); f32 math.
    mu = jnp.mean(x, axis=-1, keepdims=True)
    var = jnp.mean((x - mu) ** 2, axis=-1, keepdims=True)
    return (x - mu) * jax.lax.rsqrt(var + LN_EPS) * gamma + beta


def _gelu_exact(x):
    # PyTorch nn.GELU() default (erf-based, exact).
    return 0.5 * x * (1.0 + jax.lax.erf(x * (1.0 / jnp.sqrt(2.0).astype(x.dtype))))


# --------------------------------- kernel ------------------------------------
def swin_block_kernel(
    x_ref,                                   # (Bc*N, C) f32
    g1_ref, b1_ref,                          # (1, C) norm1
    wq_ref, bq_ref,                          # (H, C, Dh), (H, 1, Dh)  (scale folded in)
    wk_ref, bk_ref,                          # (H, C, Dh), (H, 1, Dh)
    wv_ref, bv_ref,                          # (H, C, Dh), (H, 1, Dh)
    wproj_ref, bproj_ref,                    # (H, Dh, C), (1, C)
    g2_ref, b2_ref,                          # (1, C) norm2
    wfc1_ref, bfc1_ref,                      # (C, HIDDEN), (1, HIDDEN)
    wfc2_ref, bfc2_ref,                      # (HIDDEN, C), (1, C)
    o_ref,                                   # (Bc*N, C) f32
    *, bc, n, c, nh, compute_dtype,
):
    dh = c // nh
    m = bc * n

    x = x_ref[...]                                        # (M, C) f32

    def mm(a, w, bias):
        # MXU matmul with f32 accumulation; activation cast to the weight
        # dtype (bf16 on v6e/v7x path, no-op on the f32 path).
        return jnp.dot(a.astype(w.dtype), w,
                       preferred_element_type=jnp.float32) + bias

    # ---------------- norm1 + multi-head window attention + residual ---------
    xn = _layernorm(x, g1_ref[...], b1_ref[...])          # (M, C) f32
    xn_mx = xn.astype(compute_dtype)                      # hoisted single cast

    attn_acc = jnp.zeros((m, c), jnp.float32)
    for h in range(nh):                                   # unrolled at trace time
        # Per-head projections via leading-dim weight indexing: no 8-wide lane
        # slices of the activations, no concat.
        q = mm(xn_mx, wq_ref[h], bq_ref[h]).reshape(bc, n, dh)   # scale pre-folded
        k = mm(xn_mx, wk_ref[h], bk_ref[h]).reshape(bc, n, dh)
        v = mm(xn_mx, wv_ref[h], bv_ref[h]).reshape(bc, n, dh)

        # Batched (per-window) attention, f32 softmax math.
        s = jnp.einsum("bnd,bmd->bnm",
                       q.astype(compute_dtype), k.astype(compute_dtype),
                       preferred_element_type=jnp.float32)       # (Bc, N, N)
        s = s - jnp.max(s, axis=-1, keepdims=True)
        p = jnp.exp(s)
        p = p * pl.reciprocal(jnp.sum(p, axis=-1, keepdims=True), approx=True)

        ctx = jnp.einsum("bnm,bmd->bnd",
                         p.astype(compute_dtype), v.astype(compute_dtype),
                         preferred_element_type=jnp.float32)     # (Bc, N, Dh)

        # Fold this head directly into the output projection (replaces concat).
        attn_acc = attn_acc + jnp.dot(
            ctx.reshape(m, dh).astype(compute_dtype), wproj_ref[h],
            preferred_element_type=jnp.float32)

    x1 = x + attn_acc + bproj_ref[...]                    # residual 1

    # --------------------------- norm2 + MLP + residual ----------------------
    xn2 = _layernorm(x1, g2_ref[...], b2_ref[...])
    hdn = mm(xn2, wfc1_ref[...], bfc1_ref[...])           # (M, HIDDEN)
    hdn = _gelu_exact(hdn)
    mlp = mm(hdn, wfc2_ref[...], bfc2_ref[...])           # (M, C)

    o_ref[...] = x1 + mlp


# ------------------------- parameter preparation -----------------------------
def make_params(key):
    """PyTorch-equivalent parameters (Linear weights pre-transposed to (in, out))."""
    ks = jax.random.split(key, 8)
    s = 0.05
    return {
        "g1": jnp.ones((1, DIM), jnp.float32),
        "b1": jnp.zeros((1, DIM), jnp.float32),
        "wqkv": (s * jax.random.normal(ks[0], (DIM, 3 * DIM))).astype(jnp.float32),
        "bqkv": (s * jax.random.normal(ks[1], (1, 3 * DIM))).astype(jnp.float32),
        "wproj": (s * jax.random.normal(ks[2], (DIM, DIM))).astype(jnp.float32),
        "bproj": (s * jax.random.normal(ks[3], (1, DIM))).astype(jnp.float32),
        "g2": jnp.ones((1, DIM), jnp.float32),
        "b2": jnp.zeros((1, DIM), jnp.float32),
        "wfc1": (s * jax.random.normal(ks[4], (DIM, HIDDEN))).astype(jnp.float32),
        "bfc1": (s * jax.random.normal(ks[5], (1, HIDDEN))).astype(jnp.float32),
        "wfc2": (s * jax.random.normal(ks[6], (HIDDEN, DIM))).astype(jnp.float32),
        "bfc2": (s * jax.random.normal(ks[7], (1, DIM))).astype(jnp.float32),
    }


def prepare_kernel_params(p, compute_dtype=jnp.float32):
    """One-time parameter transform (weight-loading time, not per call):
    per-head QKV layout, attention scale folded into Q, wproj -> (H, Dh, C),
    matmul weights cast to compute_dtype (bf16 for v6e/v7x MXU).  Biases and
    LayerNorm affine params stay f32."""
    C = p["wproj"].shape[0]
    nh, dh = NUM_HEADS, C // NUM_HEADS
    wqkv, bqkv = p["wqkv"], p["bqkv"]

    def per_head(w_cols, b_cols, scale=1.0):
        w = (w_cols * scale).reshape(C, nh, dh).transpose(1, 0, 2)   # (H, C, Dh)
        b = (b_cols * scale).reshape(1, nh, dh).transpose(1, 0, 2)   # (H, 1, Dh)
        return w.astype(compute_dtype), b.astype(jnp.float32)

    wq, bq = per_head(wqkv[:, 0 * C:1 * C], bqkv[:, 0 * C:1 * C], SCALE)
    wk, bk = per_head(wqkv[:, 1 * C:2 * C], bqkv[:, 1 * C:2 * C])
    wv, bv = per_head(wqkv[:, 2 * C:3 * C], bqkv[:, 2 * C:3 * C])

    return {
        "g1": p["g1"], "b1": p["b1"],
        "wq": wq, "bq": bq, "wk": wk, "bk": bk, "wv": wv, "bv": bv,
        "wproj": p["wproj"].reshape(nh, dh, C).astype(compute_dtype),
        "bproj": p["bproj"],
        "g2": p["g2"], "b2": p["b2"],
        "wfc1": p["wfc1"].astype(compute_dtype), "bfc1": p["bfc1"],
        "wfc2": p["wfc2"].astype(compute_dtype), "bfc2": p["bfc2"],
    }


# --------------------------------- wrapper ------------------------------------
_WEIGHT_ORDER = ("g1", "b1", "wq", "bq", "wk", "bk", "wv", "bv",
                 "wproj", "bproj", "g2", "b2", "wfc1", "bfc1", "wfc2", "bfc2")


def _full_block_spec(arr):
    nd = arr.ndim
    return pl.BlockSpec(arr.shape, lambda g, nd=nd: (0,) * nd)


def swin_transformer_block(x, params, *, compute_dtype=jnp.float32, num_blocks=1):
    """x: (B, N, C) float32; params: PyTorch-equivalent params from make_params.

    num_blocks=1 -> single grid step (best on single-TC v5e/v6e).
    num_blocks=2 on v7x splits windows across the two TensorCores via the
    "parallel" grid axis.
    """
    Bn, Nn, Cn = x.shape
    assert Bn % num_blocks == 0
    bc = Bn // num_blocks
    m_blk = bc * Nn

    kp = prepare_kernel_params(params, compute_dtype)
    weight_args = [kp[k] for k in _WEIGHT_ORDER]
    nh = kp["wq"].shape[0]

    x2d = x.reshape(Bn * Nn, Cn)                         # free, host-side reshape

    kernel = functools.partial(
        swin_block_kernel, bc=bc, n=Nn, c=Cn, nh=nh, compute_dtype=compute_dtype)

    in_specs = [pl.BlockSpec((m_blk, Cn), lambda g: (g, 0))]
    in_specs += [_full_block_spec(a) for a in weight_args]

    out2d = pl.pallas_call(
        kernel,
        out_shape=jax.ShapeDtypeStruct((Bn * Nn, Cn), jnp.float32),
        grid=(num_blocks,),
        in_specs=in_specs,
        out_specs=pl.BlockSpec((m_blk, Cn), lambda g: (g, 0)),
        compiler_params=pltpu.CompilerParams(
            dimension_semantics=("parallel",)),
    )(x2d, *weight_args)

    return out2d.reshape(Bn, Nn, Cn)


# ------------------------- pure-JAX reference (check) ------------------------
def reference_forward(x, p):
    Bn, Nn, Cn = x.shape
    nh, dh = NUM_HEADS, Cn // NUM_HEADS

    def ln(v, g, b):
        mu = jnp.mean(v, axis=-1, keepdims=True)
        var = jnp.mean((v - mu) ** 2, axis=-1, keepdims=True)
        return (v - mu) / jnp.sqrt(var + LN_EPS) * g + b

    shortcut = x
    xn = ln(x, p["g1"], p["b1"])
    qkv = xn @ p["wqkv"] + p["bqkv"]                      # (B, N, 3C)
    qkv = qkv.reshape(Bn, Nn, 3, nh, dh).transpose(2, 0, 3, 1, 4)
    q, k, v = qkv[0], qkv[1], qkv[2]                      # (B, H, N, Dh)
    q = q * SCALE
    attn = jnp.einsum("bhqd,bhkd->bhqk", q, k)
    attn = jax.nn.softmax(attn, axis=-1)
    out = jnp.einsum("bhqk,bhkd->bhqd", attn, v)
    out = out.transpose(0, 2, 1, 3).reshape(Bn, Nn, Cn)
    out = out @ p["wproj"] + p["bproj"]
    x1 = shortcut + out

    xn2 = ln(x1, p["g2"], p["b2"])
    h = xn2 @ p["wfc1"] + p["bfc1"]
    h = jax.nn.gelu(h, approximate=False)
    mlp = h @ p["wfc2"] + p["bfc2"]
    return x1 + mlp


if __name__ == "__main__":
    key = jax.random.PRNGKey(0)
    kx, kp = jax.random.split(key)
    x = jax.random.normal(kx, (B, N, DIM), dtype=jnp.float32)
    params = make_params(kp)

    ref = reference_forward(x, params)

    # Full-f32 path: exact module semantics (tolerance covers the approx
    # EUP reciprocal used for the softmax denominator).
    out_f32 = jax.block_until_ready(
        swin_transformer_block(x, params, compute_dtype=jnp.float32))
    assert out_f32.shape == (B, N, DIM)
    assert jnp.allclose(out_f32, ref, atol=1e-3, rtol=1e-3), "f32 mismatch vs reference"

    # bf16-fed-MXU path (recommended on v6e/v7x); looser tolerance for bf16 matmuls.
    out_bf16 = jax.block_until_ready(
        swin_transformer_block(x, params, compute_dtype=jnp.bfloat16))
    assert jnp.allclose(out_bf16, ref, atol=2e-2, rtol=2e-2), "bf16 mismatch vs reference"

    print("KERNEL_OK")
</pallas_src>

<mosaic_0001>
module attributes {stable_mosaic.version = 11 : i64} {
  func.func @swin_block_kernel(%arg0: i32, %arg1: memref<32x32xf32, #tpu.memory_space<vmem>>, %arg2: memref<1x32xf32, #tpu.memory_space<vmem>>, %arg3: memref<1x32xf32, #tpu.memory_space<vmem>>, %arg4: memref<4x32x8xf32, #tpu.memory_space<vmem>>, %arg5: memref<4x1x8xf32, #tpu.memory_space<vmem>>, %arg6: memref<4x32x8xf32, #tpu.memory_space<vmem>>, %arg7: memref<4x1x8xf32, #tpu.memory_space<vmem>>, %arg8: memref<4x32x8xf32, #tpu.memory_space<vmem>>, %arg9: memref<4x1x8xf32, #tpu.memory_space<vmem>>, %arg10: memref<4x8x32xf32, #tpu.memory_space<vmem>>, %arg11: memref<1x32xf32, #tpu.memory_space<vmem>>, %arg12: memref<1x32xf32, #tpu.memory_space<vmem>>, %arg13: memref<1x32xf32, #tpu.memory_space<vmem>>, %arg14: memref<32x128xf32, #tpu.memory_space<vmem>>, %arg15: memref<1x128xf32, #tpu.memory_space<vmem>>, %arg16: memref<128x32xf32, #tpu.memory_space<vmem>>, %arg17: memref<1x32xf32, #tpu.memory_space<vmem>>, %arg18: memref<32x32xf32, #tpu.memory_space<vmem>>) attributes {dimension_semantics = [#tpu.dimension_semantics<parallel>], iteration_bounds = array<i64: 1>, scalar_prefetch = 0 : i64, scratch_operands = 0 : i64, tpu.core_type = #tpu.core_type<tc>, window_params = [{transform_indices = @transform_0, window_bounds = array<i64: 32, 32>}, {pipeline_mode = #tpu.pipeline_mode<synchronous>, transform_indices = @transform_1, window_bounds = array<i64: 1, 32>}, {pipeline_mode = #tpu.pipeline_mode<synchronous>, transform_indices = @transform_2, window_bounds = array<i64: 1, 32>}, {pipeline_mode = #tpu.pipeline_mode<synchronous>, transform_indices = @transform_3, window_bounds = array<i64: 4, 32, 8>}, {pipeline_mode = #tpu.pipeline_mode<synchronous>, transform_indices = @transform_4, window_bounds = array<i64: 4, 1, 8>}, {pipeline_mode = #tpu.pipeline_mode<synchronous>, transform_indices = @transform_5, window_bounds = array<i64: 4, 32, 8>}, {pipeline_mode = #tpu.pipeline_mode<synchronous>, transform_indices = @transform_6, window_bounds = array<i64: 4, 1, 8>}, {pipeline_mode = #tpu.pipeline_mode<synchronous>, transform_indices = @transform_7, window_bounds = array<i64: 4, 32, 8>}, {pipeline_mode = #tpu.pipeline_mode<synchronous>, transform_indices = @transform_8, window_bounds = array<i64: 4, 1, 8>}, {pipeline_mode = #tpu.pipeline_mode<synchronous>, transform_indices = @transform_9, window_bounds = array<i64: 4, 8, 32>}, {pipeline_mode = #tpu.pipeline_mode<synchronous>, transform_indices = @transform_10, window_bounds = array<i64: 1, 32>}, {pipeline_mode = #tpu.pipeline_mode<synchronous>, transform_indices = @transform_11, window_bounds = array<i64: 1, 32>}, {pipeline_mode = #tpu.pipeline_mode<synchronous>, transform_indices = @transform_12, window_bounds = array<i64: 1, 32>}, {pipeline_mode = #tpu.pipeline_mode<synchronous>, transform_indices = @transform_13, window_bounds = array<i64: 32, 128>}, {pipeline_mode = #tpu.pipeline_mode<synchronous>, transform_indices = @transform_14, window_bounds = array<i64: 1, 128>}, {pipeline_mode = #tpu.pipeline_mode<synchronous>, transform_indices = @transform_15, window_bounds = array<i64: 128, 32>}, {pipeline_mode = #tpu.pipeline_mode<synchronous>, transform_indices = @transform_16, window_bounds = array<i64: 1, 32>}, {transform_indices = @transform_17, window_bounds = array<i64: 32, 32>}]} {
    %c0 = arith.constant 0 : index
    %c0_0 = arith.constant 0 : index
    %0 = vector.load %arg1[%c0, %c0_0] : memref<32x32xf32, #tpu.memory_space<vmem>>, vector<32x32xf32>
    %c0_1 = arith.constant 0 : index
    %c0_2 = arith.constant 0 : index
    %1 = vector.load %arg2[%c0_1, %c0_2] : memref<1x32xf32, #tpu.memory_space<vmem>>, vector<1x32xf32>
    %c0_3 = arith.constant 0 : index
    %c0_4 = arith.constant 0 : index
    %2 = vector.load %arg3[%c0_3, %c0_4] : memref<1x32xf32, #tpu.memory_space<vmem>>, vector<1x32xf32>
    %cst = arith.constant dense<0.000000e+00> : vector<32xf32>
    %3 = vector.multi_reduction <add>, %0, %cst [1] : vector<32x32xf32> to vector<32xf32>
    %4 = vector.shape_cast %3 : vector<32xf32> to vector<32x1xf32>
    %cst_5 = arith.constant 3.200000e+01 : f32
    %5 = vector.broadcast %cst_5 : f32 to vector<32x1xf32>
    %6 = arith.divf %4, %5 : vector<32x1xf32>
    %7 = vector.broadcast %6 : vector<32x1xf32> to vector<32x32xf32>
    %8 = arith.subf %0, %7 : vector<32x32xf32>
    %9 = arith.mulf %8, %8 : vector<32x32xf32>
    %cst_6 = arith.constant dense<0.000000e+00> : vector<32xf32>
    %10 = vector.multi_reduction <add>, %9, %cst_6 [1] : vector<32x32xf32> to vector<32xf32>
    %11 = vector.shape_cast %10 : vector<32xf32> to vector<32x1xf32>
    %cst_7 = arith.constant 3.200000e+01 : f32
    %12 = vector.broadcast %cst_7 : f32 to vector<32x1xf32>
    %13 = arith.divf %11, %12 : vector<32x1xf32>
    %14 = vector.broadcast %6 : vector<32x1xf32> to vector<32x32xf32>
    %15 = arith.subf %0, %14 : vector<32x32xf32>
    %cst_8 = arith.constant 9.99999974E-6 : f32
    %16 = vector.broadcast %cst_8 : f32 to vector<32x1xf32>
    %17 = arith.addf %13, %16 : vector<32x1xf32>
    %18 = math.rsqrt %17 : vector<32x1xf32>
    %19 = vector.broadcast %18 : vector<32x1xf32> to vector<32x32xf32>
    %20 = arith.mulf %15, %19 : vector<32x32xf32>
    %21 = vector.broadcast %1 : vector<1x32xf32> to vector<32x32xf32>
    %22 = arith.mulf %20, %21 : vector<32x32xf32>
    %23 = vector.broadcast %2 : vector<1x32xf32> to vector<32x32xf32>
    %24 = arith.addf %22, %23 : vector<32x32xf32>
    %cst_9 = arith.constant 0.000000e+00 : f32
    %25 = vector.broadcast %cst_9 : f32 to vector<32x32xf32>
    %c0_10 = arith.constant 0 : index
    %c0_11 = arith.constant 0 : index
    %c0_12 = arith.constant 0 : index
    %26 = vector.load %arg4[%c0_10, %c0_11, %c0_12] : memref<4x32x8xf32, #tpu.memory_space<vmem>>, vector<1x32x8xf32>
    %27 = vector.shape_cast %26 : vector<1x32x8xf32> to vector<32x8xf32>
    %c0_13 = arith.constant 0 : index
    %c0_14 = arith.constant 0 : index
    %c0_15 = arith.constant 0 : index
    %28 = vector.load %arg5[%c0_13, %c0_14, %c0_15] : memref<4x1x8xf32, #tpu.memory_space<vmem>>, vector<1x1x8xf32>
    %29 = vector.shape_cast %28 : vector<1x1x8xf32> to vector<1x8xf32>
    %cst_16 = arith.constant dense<0.000000e+00> : vector<32x8xf32>
    %30 = tpu.matmul %24, %27, %cst_16 {dimension_numbers = #tpu.dot_dimension_numbers<[1], [0], [0], [1], [0, 0, 1, 1], [], []>} : vector<32x32xf32>, vector<32x8xf32>, vector<32x8xf32> -> vector<32x8xf32>
    %31 = vector.broadcast %29 : vector<1x8xf32> to vector<32x8xf32>
    %32 = arith.addf %30, %31 : vector<32x8xf32>
    %33 = vector.shape_cast %32 : vector<32x8xf32> to vector<2x16x8xf32>
    %c0_17 = arith.constant 0 : index
    %c0_18 = arith.constant 0 : index
    %c0_19 = arith.constant 0 : index
    %34 = vector.load %arg6[%c0_17, %c0_18, %c0_19] : memref<4x32x8xf32, #tpu.memory_space<vmem>>, vector<1x32x8xf32>
    %35 = vector.shape_cast %34 : vector<1x32x8xf32> to vector<32x8xf32>
    %c0_20 = arith.constant 0 : index
    %c0_21 = arith.constant 0 : index
    %c0_22 = arith.constant 0 : index
    %36 = vector.load %arg7[%c0_20, %c0_21, %c0_22] : memref<4x1x8xf32, #tpu.memory_space<vmem>>, vector<1x1x8xf32>
    %37 = vector.shape_cast %36 : vector<1x1x8xf32> to vector<1x8xf32>
    %cst_23 = arith.constant dense<0.000000e+00> : vector<32x8xf32>
    %38 = tpu.matmul %24, %35, %cst_23 {dimension_numbers = #tpu.dot_dimension_numbers<[1], [0], [0], [1], [0, 0, 1, 1], [], []>} : vector<32x32xf32>, vector<32x8xf32>, vector<32x8xf32> -> vector<32x8xf32>
    %39 = vector.broadcast %37 : vector<1x8xf32> to vector<32x8xf32>
    %40 = arith.addf %38, %39 : vector<32x8xf32>
    %41 = vector.shape_cast %40 : vector<32x8xf32> to vector<2x16x8xf32>
    %c0_24 = arith.constant 0 : index
    %c0_25 = arith.constant 0 : index
    %c0_26 = arith.constant 0 : index
    %42 = vector.load %arg8[%c0_24, %c0_25, %c0_26] : memref<4x32x8xf32, #tpu.memory_space<vmem>>, vector<1x32x8xf32>
    %43 = vector.shape_cast %42 : vector<1x32x8xf32> to vector<32x8xf32>
    %c0_27 = arith.constant 0 : index
    %c0_28 = arith.constant 0 : index
    %c0_29 = arith.constant 0 : index
    %44 = vector.load %arg9[%c0_27, %c0_28, %c0_29] : memref<4x1x8xf32, #tpu.memory_space<vmem>>, vector<1x1x8xf32>
    %45 = vector.shape_cast %44 : vector<1x1x8xf32> to vector<1x8xf32>
    %cst_30 = arith.constant dense<0.000000e+00> : vector<32x8xf32>
    %46 = tpu.matmul %24, %43, %cst_30 {dimension_numbers = #tpu.dot_dimension_numbers<[1], [0], [0], [1], [0, 0, 1, 1], [], []>} : vector<32x32xf32>, vector<32x8xf32>, vector<32x8xf32> -> vector<32x8xf32>
    %47 = vector.broadcast %45 : vector<1x8xf32> to vector<32x8xf32>
    %48 = arith.addf %46, %47 : vector<32x8xf32>
    %49 = vector.shape_cast %48 : vector<32x8xf32> to vector<2x16x8xf32>
    "tpu.trace_start"() <{level = 10 : i32, message = "bnd,bmd->bnm"}> : () -> ()
    %cst_31 = arith.constant dense<0.000000e+00> : vector<2x16x16xf32>
    %50 = tpu.matmul %33, %41, %cst_31 {dimension_numbers = #tpu.dot_dimension_numbers<[2], [2], [1], [1], [0, 0, 0, 1, 1, 1], [0], [0]>} : vector<2x16x8xf32>, vector<2x16x8xf32>, vector<2x16x16xf32> -> vector<2x16x16xf32>
    "tpu.trace_stop"() : () -> ()
    %cst_32 = arith.constant dense<0xFF800000> : vector<2x16xf32>
    %51 = vector.multi_reduction <maximumf>, %50, %cst_32 [2] : vector<2x16x16xf32> to vector<2x16xf32>
    %52 = vector.shape_cast %51 : vector<2x16xf32> to vector<2x16x1xf32>
    %53 = vector.broadcast %52 : vector<2x16x1xf32> to vector<2x16x16xf32>
    %54 = arith.subf %50, %53 : vector<2x16x16xf32>
    %55 = math.exp %54 : vector<2x16x16xf32>
    %cst_33 = arith.constant dense<0.000000e+00> : vector<2x16xf32>
    %56 = vector.multi_reduction <add>, %55, %cst_33 [2] : vector<2x16x16xf32> to vector<2x16xf32>
    %57 = vector.shape_cast %56 : vector<2x16xf32> to vector<2x16x1xf32>
    %58 = tpu.reciprocal %57 {approx = true} : vector<2x16x1xf32> -> vector<2x16x1xf32>
    %59 = vector.broadcast %58 : vector<2x16x1xf32> to vector<2x16x16xf32>
    %60 = arith.mulf %55, %59 : vector<2x16x16xf32>
    "tpu.trace_start"() <{level = 10 : i32, message = "bnm,bmd->bnd"}> : () -> ()
    %cst_34 = arith.constant dense<0.000000e+00> : vector<2x16x8xf32>
    %61 = tpu.matmul %60, %49, %cst_34 {dimension_numbers = #tpu.dot_dimension_numbers<[2], [1], [1], [2], [0, 0, 0, 1, 1, 2], [0], [0]>} : vector<2x16x16xf32>, vector<2x16x8xf32>, vector<2x16x8xf32> -> vector<2x16x8xf32>
    "tpu.trace_stop"() : () -> ()
    %62 = vector.shape_cast %61 : vector<2x16x8xf32> to vector<32x8xf32>
    %c0_35 = arith.constant 0 : index
    %c0_36 = arith.constant 0 : index
    %c0_37 = arith.constant 0 : index
    %63 = vector.load %arg10[%c0_35, %c0_36, %c0_37] : memref<4x8x32xf32, #tpu.memory_space<vmem>>, vector<1x8x32xf32>
    %64 = vector.shape_cast %63 : vector<1x8x32xf32> to vector<8x32xf32>
    %cst_38 = arith.constant dense<0.000000e+00> : vector<32x32xf32>
    %65 = tpu.matmul %62, %64, %cst_38 {dimension_numbers = #tpu.dot_dimension_numbers<[1], [0], [0], [1], [0, 0, 1, 1], [], []>} : vector<32x8xf32>, vector<8x32xf32>, vector<32x32xf32> -> vector<32x32xf32>
    %66 = arith.addf %25, %65 : vector<32x32xf32>
    %c1 = arith.constant 1 : index
    %c0_39 = arith.constant 0 : index
    %c0_40 = arith.constant 0 : index
    %67 = vector.load %arg4[%c1, %c0_39, %c0_40] : memref<4x32x8xf32, #tpu.memory_space<vmem>>, vector<1x32x8xf32>
    %68 = vector.shape_cast %67 : vector<1x32x8xf32> to vector<32x8xf32>
    %c1_41 = arith.constant 1 : index
    %c0_42 = arith.constant 0 : index
    %c0_43 = arith.constant 0 : index
    %69 = vector.load %arg5[%c1_41, %c0_42, %c0_43] : memref<4x1x8xf32, #tpu.memory_space<vmem>>, vector<1x1x8xf32>
    %70 = vector.shape_cast %69 : vector<1x1x8xf32> to vector<1x8xf32>
    %cst_44 = arith.constant dense<0.000000e+00> : vector<32x8xf32>
    %71 = tpu.matmul %24, %68, %cst_44 {dimension_numbers = #tpu.dot_dimension_numbers<[1], [0], [0], [1], [0, 0, 1, 1], [], []>} : vector<32x32xf32>, vector<32x8xf32>, vector<32x8xf32> -> vector<32x8xf32>
    %72 = vector.broadcast %70 : vector<1x8xf32> to vector<32x8xf32>
    %73 = arith.addf %71, %72 : vector<32x8xf32>
    %74 = vector.shape_cast %73 : vector<32x8xf32> to vector<2x16x8xf32>
    %c1_45 = arith.constant 1 : index
    %c0_46 = arith.constant 0 : index
    %c0_47 = arith.constant 0 : index
    %75 = vector.load %arg6[%c1_45, %c0_46, %c0_47] : memref<4x32x8xf32, #tpu.memory_space<vmem>>, vector<1x32x8xf32>
    %76 = vector.shape_cast %75 : vector<1x32x8xf32> to vector<32x8xf32>
    %c1_48 = arith.constant 1 : index
    %c0_49 = arith.constant 0 : index
    %c0_50 = arith.constant 0 : index
    %77 = vector.load %arg7[%c1_48, %c0_49, %c0_50] : memref<4x1x8xf32, #tpu.memory_space<vmem>>, vector<1x1x8xf32>
    %78 = vector.shape_cast %77 : vector<1x1x8xf32> to vector<1x8xf32>
    %cst_51 = arith.constant dense<0.000000e+00> : vector<32x8xf32>
    %79 = tpu.matmul %24, %76, %cst_51 {dimension_numbers = #tpu.dot_dimension_numbers<[1], [0], [0], [1], [0, 0, 1, 1], [], []>} : vector<32x32xf32>, vector<32x8xf32>, vector<32x8xf32> -> vector<32x8xf32>
    %80 = vector.broadcast %78 : vector<1x8xf32> to vector<32x8xf32>
    %81 = arith.addf %79, %80 : vector<32x8xf32>
    %82 = vector.shape_cast %81 : vector<32x8xf32> to vector<2x16x8xf32>
    %c1_52 = arith.constant 1 : index
    %c0_53 = arith.constant 0 : index
    %c0_54 = arith.constant 0 : index
    %83 = vector.load %arg8[%c1_52, %c0_53, %c0_54] : memref<4x32x8xf32, #tpu.memory_space<vmem>>, vector<1x32x8xf32>
    %84 = vector.shape_cast %83 : vector<1x32x8xf32> to vector<32x8xf32>
    %c1_55 = arith.constant 1 : index
    %c0_56 = arith.constant 0 : index
    %c0_57 = arith.constant 0 : index
    %85 = vector.load %arg9[%c1_55, %c0_56, %c0_57] : memref<4x1x8xf32, #tpu.memory_space<vmem>>, vector<1x1x8xf32>
    %86 = vector.shape_cast %85 : vector<1x1x8xf32> to vector<1x8xf32>
    %cst_58 = arith.constant dense<0.000000e+00> : vector<32x8xf32>
    %87 = tpu.matmul %24, %84, %cst_58 {dimension_numbers = #tpu.dot_dimension_numbers<[1], [0], [0], [1], [0, 0, 1, 1], [], []>} : vector<32x32xf32>, vector<32x8xf32>, vector<32x8xf32> -> vector<32x8xf32>
    %88 = vector.broadcast %86 : vector<1x8xf32> to vector<32x8xf32>
    %89 = arith.addf %87, %88 : vector<32x8xf32>
    %90 = vector.shape_cast %89 : vector<32x8xf32> to vector<2x16x8xf32>
    "tpu.trace_start"() <{level = 10 : i32, message = "bnd,bmd->bnm"}> : () -> ()
    %cst_59 = arith.constant dense<0.000000e+00> : vector<2x16x16xf32>
    %91 = tpu.matmul %74, %82, %cst_59 {dimension_numbers = #tpu.dot_dimension_numbers<[2], [2], [1], [1], [0, 0, 0, 1, 1, 1], [0], [0]>} : vector<2x16x8xf32>, vector<2x16x8xf32>, vector<2x16x16xf32> -> vector<2x16x16xf32>
    "tpu.trace_stop"() : () -> ()
    %cst_60 = arith.constant dense<0xFF800000> : vector<2x16xf32>
    %92 = vector.multi_reduction <maximumf>, %91, %cst_60 [2] : vector<2x16x16xf32> to vector<2x16xf32>
    %93 = vector.shape_cast %92 : vector<2x16xf32> to vector<2x16x1xf32>
    %94 = vector.broadcast %93 : vector<2x16x1xf32> to vector<2x16x16xf32>
    %95 = arith.subf %91, %94 : vector<2x16x16xf32>
    %96 = math.exp %95 : vector<2x16x16xf32>
    %cst_61 = arith.constant dense<0.000000e+00> : vector<2x16xf32>
    %97 = vector.multi_reduction <add>, %96, %cst_61 [2] : vector<2x16x16xf32> to vector<2x16xf32>
    %98 = vector.shape_cast %97 : vector<2x16xf32> to vector<2x16x1xf32>
    %99 = tpu.reciprocal %98 {approx = true} : vector<2x16x1xf32> -> vector<2x16x1xf32>
    %100 = vector.broadcast %99 : vector<2x16x1xf32> to vector<2x16x16xf32>
    %101 = arith.mulf %96, %100 : vector<2x16x16xf32>
    "tpu.trace_start"() <{level = 10 : i32, message = "bnm,bmd->bnd"}> : () -> ()
    %cst_62 = arith.constant dense<0.000000e+00> : vector<2x16x8xf32>
    %102 = tpu.matmul %101, %90, %cst_62 {dimension_numbers = #tpu.dot_dimension_numbers<[2], [1], [1], [2], [0, 0, 0, 1, 1, 2], [0], [0]>} : vector<2x16x16xf32>, vector<2x16x8xf32>, vector<2x16x8xf32> -> vector<2x16x8xf32>
    "tpu.trace_stop"() : () -> ()
    %103 = vector.shape_cast %102 : vector<2x16x8xf32> to vector<32x8xf32>
    %c1_63 = arith.constant 1 : index
    %c0_64 = arith.constant 0 : index
    %c0_65 = arith.constant 0 : index
    %104 = vector.load %arg10[%c1_63, %c0_64, %c0_65] : memref<4x8x32xf32, #tpu.memory_space<vmem>>, vector<1x8x32xf32>
    %105 = vector.shape_cast %104 : vector<1x8x32xf32> to vector<8x32xf32>
    %cst_66 = arith.constant dense<0.000000e+00> : vector<32x32xf32>
    %106 = tpu.matmul %103, %105, %cst_66 {dimension_numbers = #tpu.dot_dimension_numbers<[1], [0], [0], [1], [0, 0, 1, 1], [], []>} : vector<32x8xf32>, vector<8x32xf32>, vector<32x32xf32> -> vector<32x32xf32>
    %107 = arith.addf %66, %106 : vector<32x32xf32>
    %c2 = arith.constant 2 : index
    %c0_67 = arith.constant 0 : index
    %c0_68 = arith.constant 0 : index
    %108 = vector.load %arg4[%c2, %c0_67, %c0_68] : memref<4x32x8xf32, #tpu.memory_space<vmem>>, vector<1x32x8xf32>
    %109 = vector.shape_cast %108 : vector<1x32x8xf32> to vector<32x8xf32>
    %c2_69 = arith.constant 2 : index
    %c0_70 = arith.constant 0 : index
    %c0_71 = arith.constant 0 : index
    %110 = vector.load %arg5[%c2_69, %c0_70, %c0_71] : memref<4x1x8xf32, #tpu.memory_space<vmem>>, vector<1x1x8xf32>
    %111 = vector.shape_cast %110 : vector<1x1x8xf32> to vector<1x8xf32>
    %cst_72 = arith.constant dense<0.000000e+00> : vector<32x8xf32>
    %112 = tpu.matmul %24, %109, %cst_72 {dimension_numbers = #tpu.dot_dimension_numbers<[1], [0], [0], [1], [0, 0, 1, 1], [], []>} : vector<32x32xf32>, vector<32x8xf32>, vector<32x8xf32> -> vector<32x8xf32>
    %113 = vector.broadcast %111 : vector<1x8xf32> to vector<32x8xf32>
    %114 = arith.addf %112, %113 : vector<32x8xf32>
    %115 = vector.shape_cast %114 : vector<32x8xf32> to vector<2x16x8xf32>
    %c2_73 = arith.constant 2 : index
    %c0_74 = arith.constant 0 : index
    %c0_75 = arith.constant 0 : index
    %116 = vector.load %arg6[%c2_73, %c0_74, %c0_75] : memref<4x32x8xf32, #tpu.memory_space<vmem>>, vector<1x32x8xf32>
    %117 = vector.shape_cast %116 : vector<1x32x8xf32> to vector<32x8xf32>
    %c2_76 = arith.constant 2 : index
    %c0_77 = arith.constant 0 : index
    %c0_78 = arith.constant 0 : index
    %118 = vector.load %arg7[%c2_76, %c0_77, %c0_78] : memref<4x1x8xf32, #tpu.memory_space<vmem>>, vector<1x1x8xf32>
    %119 = vector.shape_cast %118 : vector<1x1x8xf32> to vector<1x8xf32>
    %cst_79 = arith.constant dense<0.000000e+00> : vector<32x8xf32>
    %120 = tpu.matmul %24, %117, %cst_79 {dimension_numbers = #tpu.dot_dimension_numbers<[1], [0], [0], [1], [0, 0, 1, 1], [], []>} : vector<32x32xf32>, vector<32x8xf32>, vector<32x8xf32> -> vector<32x8xf32>
    %121 = vector.broadcast %119 : vector<1x8xf32> to vector<32x8xf32>
    %122 = arith.addf %120, %121 : vector<32x8xf32>
    %123 = vector.shape_cast %122 : vector<32x8xf32> to vector<2x16x8xf32>
    %c2_80 = arith.constant 2 : index
    %c0_81 = arith.constant 0 : index
    %c0_82 = arith.constant 0 : index
    %124 = vector.load %arg8[%c2_80, %c0_81, %c0_82] : memref<4x32x8xf32, #tpu.memory_space<vmem>>, vector<1x32x8xf32>
    %125 = vector.shape_cast %124 : vector<1x32x8xf32> to vector<32x8xf32>
    %c2_83 = arith.constant 2 : index
    %c0_84 = arith.constant 0 : index
    %c0_85 = arith.constant 0 : index
    %126 = vector.load %arg9[%c2_83, %c0_84, %c0_85] : memref<4x1x8xf32, #tpu.memory_space<vmem>>, vector<1x1x8xf32>
    %127 = vector.shape_cast %126 : vector<1x1x8xf32> to vector<1x8xf32>
    %cst_86 = arith.constant dense<0.000000e+00> : vector<32x8xf32>
    %128 = tpu.matmul %24, %125, %cst_86 {dimension_numbers = #tpu.dot_dimension_numbers<[1], [0], [0], [1], [0, 0, 1, 1], [], []>} : vector<32x32xf32>, vector<32x8xf32>, vector<32x8xf32> -> vector<32x8xf32>
    %129 = vector.broadcast %127 : vector<1x8xf32> to vector<32x8xf32>
    %130 = arith.addf %128, %129 : vector<32x8xf32>
    %131 = vector.shape_cast %130 : vector<32x8xf32> to vector<2x16x8xf32>
    "tpu.trace_start"() <{level = 10 : i32, message = "bnd,bmd->bnm"}> : () -> ()
    %cst_87 = arith.constant dense<0.000000e+00> : vector<2x16x16xf32>
    %132 = tpu.matmul %115, %123, %cst_87 {dimension_numbers = #tpu.dot_dimension_numbers<[2], [2], [1], [1], [0, 0, 0, 1, 1, 1], [0], [0]>} : vector<2x16x8xf32>, vector<2x16x8xf32>, vector<2x16x16xf32> -> vector<2x16x16xf32>
    "tpu.trace_stop"() : () -> ()
    %cst_88 = arith.constant dense<0xFF800000> : vector<2x16xf32>
    %133 = vector.multi_reduction <maximumf>, %132, %cst_88 [2] : vector<2x16x16xf32> to vector<2x16xf32>
    %134 = vector.shape_cast %133 : vector<2x16xf32> to vector<2x16x1xf32>
    %135 = vector.broadcast %134 : vector<2x16x1xf32> to vector<2x16x16xf32>
    %136 = arith.subf %132, %135 : vector<2x16x16xf32>
    %137 = math.exp %136 : vector<2x16x16xf32>
    %cst_89 = arith.constant dense<0.000000e+00> : vector<2x16xf32>
    %138 = vector.multi_reduction <add>, %137, %cst_89 [2] : vector<2x16x16xf32> to vector<2x16xf32>
    %139 = vector.shape_cast %138 : vector<2x16xf32> to vector<2x16x1xf32>
    %140 = tpu.reciprocal %139 {approx = true} : vector<2x16x1xf32> -> vector<2x16x1xf32>
    %141 = vector.broadcast %140 : vector<2x16x1xf32> to vector<2x16x16xf32>
    %142 = arith.mulf %137, %141 : vector<2x16x16xf32>
    "tpu.trace_start"() <{level = 10 : i32, message = "bnm,bmd->bnd"}> : () -> ()
    %cst_90 = arith.constant dense<0.000000e+00> : vector<2x16x8xf32>
    %143 = tpu.matmul %142, %131, %cst_90 {dimension_numbers = #tpu.dot_dimension_numbers<[2], [1], [1], [2], [0, 0, 0, 1, 1, 2], [0], [0]>} : vector<2x16x16xf32>, vector<2x16x8xf32>, vector<2x16x8xf32> -> vector<2x16x8xf32>
    "tpu.trace_stop"() : () -> ()
    %144 = vector.shape_cast %143 : vector<2x16x8xf32> to vector<32x8xf32>
    %c2_91 = arith.constant 2 : index
    %c0_92 = arith.constant 0 : index
    %c0_93 = arith.constant 0 : index
    %145 = vector.load %arg10[%c2_91, %c0_92, %c0_93] : memref<4x8x32xf32, #tpu.memory_space<vmem>>, vector<1x8x32xf32>
    %146 = vector.shape_cast %145 : vector<1x8x32xf32> to vector<8x32xf32>
    %cst_94 = arith.constant dense<0.000000e+00> : vector<32x32xf32>
    %147 = tpu.matmul %144, %146, %cst_94 {dimension_numbers = #tpu.dot_dimension_numbers<[1], [0], [0], [1], [0, 0, 1, 1], [], []>} : vector<32x8xf32>, vector<8x32xf32>, vector<32x32xf32> -> vector<32x32xf32>
    %148 = arith.addf %107, %147 : vector<32x32xf32>
    %c3 = arith.constant 3 : index
    %c0_95 = arith.constant 0 : index
    %c0_96 = arith.constant 0 : index
    %149 = vector.load %arg4[%c3, %c0_95, %c0_96] : memref<4x32x8xf32, #tpu.memory_space<vmem>>, vector<1x32x8xf32>
    %150 = vector.shape_cast %149 : vector<1x32x8xf32> to vector<32x8xf32>
    %c3_97 = arith.constant 3 : index
    %c0_98 = arith.constant 0 : index
    %c0_99 = arith.constant 0 : index
    %151 = vector.load %arg5[%c3_97, %c0_98, %c0_99] : memref<4x1x8xf32, #tpu.memory_space<vmem>>, vector<1x1x8xf32>
    %152 = vector.shape_cast %151 : vector<1x1x8xf32> to vector<1x8xf32>
    %cst_100 = arith.constant dense<0.000000e+00> : vector<32x8xf32>
    %153 = tpu.matmul %24, %150, %cst_100 {dimension_numbers = #tpu.dot_dimension_numbers<[1], [0], [0], [1], [0, 0, 1, 1], [], []>} : vector<32x32xf32>, vector<32x8xf32>, vector<32x8xf32> -> vector<32x8xf32>
    %154 = vector.broadcast %152 : vector<1x8xf32> to vector<32x8xf32>
    %155 = arith.addf %153, %154 : vector<32x8xf32>
    %156 = vector.shape_cast %155 : vector<32x8xf32> to vector<2x16x8xf32>
    %c3_101 = arith.constant 3 : index
    %c0_102 = arith.constant 0 : index
    %c0_103 = arith.constant 0 : index
    %157 = vector.load %arg6[%c3_101, %c0_102, %c0_103] : memref<4x32x8xf32, #tpu.memory_space<vmem>>, vector<1x32x8xf32>
    %158 = vector.shape_cast %157 : vector<1x32x8xf32> to vector<32x8xf32>
    %c3_104 = arith.constant 3 : index
    %c0_105 = arith.constant 0 : index
    %c0_106 = arith.constant 0 : index
    %159 = vector.load %arg7[%c3_104, %c0_105, %c0_106] : memref<4x1x8xf32, #tpu.memory_space<vmem>>, vector<1x1x8xf32>
    %160 = vector.shape_cast %159 : vector<1x1x8xf32> to vector<1x8xf32>
    %cst_107 = arith.constant dense<0.000000e+00> : vector<32x8xf32>
    %161 = tpu.matmul %24, %158, %cst_107 {dimension_numbers = #tpu.dot_dimension_numbers<[1], [0], [0], [1], [0, 0, 1, 1], [], []>} : vector<32x32xf32>, vector<32x8xf32>, vector<32x8xf32> -> vector<32x8xf32>
    %162 = vector.broadcast %160 : vector<1x8xf32> to vector<32x8xf32>
    %163 = arith.addf %161, %162 : vector<32x8xf32>
    %164 = vector.shape_cast %163 : vector<32x8xf32> to vector<2x16x8xf32>
    %c3_108 = arith.constant 3 : index
    %c0_109 = arith.constant 0 : index
    %c0_110 = arith.constant 0 : index
    %165 = vector.load %arg8[%c3_108, %c0_109, %c0_110] : memref<4x32x8xf32, #tpu.memory_space<vmem>>, vector<1x32x8xf32>
    %166 = vector.shape_cast %165 : vector<1x32x8xf32> to vector<32x8xf32>
    %c3_111 = arith.constant 3 : index
    %c0_112 = arith.constant 0 : index
    %c0_113 = arith.constant 0 : index
    %167 = vector.load %arg9[%c3_111, %c0_112, %c0_113] : memref<4x1x8xf32, #tpu.memory_space<vmem>>, vector<1x1x8xf32>
    %168 = vector.shape_cast %167 : vector<1x1x8xf32> to vector<1x8xf32>
    %cst_114 = arith.constant dense<0.000000e+00> : vector<32x8xf32>
    %169 = tpu.matmul %24, %166, %cst_114 {dimension_numbers = #tpu.dot_dimension_numbers<[1], [0], [0], [1], [0, 0, 1, 1], [], []>} : vector<32x32xf32>, vector<32x8xf32>, vector<32x8xf32> -> vector<32x8xf32>
    %170 = vector.broadcast %168 : vector<1x8xf32> to vector<32x8xf32>
    %171 = arith.addf %169, %170 : vector<32x8xf32>
    %172 = vector.shape_cast %171 : vector<32x8xf32> to vector<2x16x8xf32>
    "tpu.trace_start"() <{level = 10 : i32, message = "bnd,bmd->bnm"}> : () -> ()
    %cst_115 = arith.constant dense<0.000000e+00> : vector<2x16x16xf32>
    %173 = tpu.matmul %156, %164, %cst_115 {dimension_numbers = #tpu.dot_dimension_numbers<[2], [2], [1], [1], [0, 0, 0, 1, 1, 1], [0], [0]>} : vector<2x16x8xf32>, vector<2x16x8xf32>, vector<2x16x16xf32> -> vector<2x16x16xf32>
    "tpu.trace_stop"() : () -> ()
    %cst_116 = arith.constant dense<0xFF800000> : vector<2x16xf32>
    %174 = vector.multi_reduction <maximumf>, %173, %cst_116 [2] : vector<2x16x16xf32> to vector<2x16xf32>
    %175 = vector.shape_cast %174 : vector<2x16xf32> to vector<2x16x1xf32>
    %176 = vector.broadcast %175 : vector<2x16x1xf32> to vector<2x16x16xf32>
    %177 = arith.subf %173, %176 : vector<2x16x16xf32>
    %178 = math.exp %177 : vector<2x16x16xf32>
    %cst_117 = arith.constant dense<0.000000e+00> : vector<2x16xf32>
    %179 = vector.multi_reduction <add>, %178, %cst_117 [2] : vector<2x16x16xf32> to vector<2x16xf32>
    %180 = vector.shape_cast %179 : vector<2x16xf32> to vector<2x16x1xf32>
    %181 = tpu.reciprocal %180 {approx = true} : vector<2x16x1xf32> -> vector<2x16x1xf32>
    %182 = vector.broadcast %181 : vector<2x16x1xf32> to vector<2x16x16xf32>
    %183 = arith.mulf %178, %182 : vector<2x16x16xf32>
    "tpu.trace_start"() <{level = 10 : i32, message = "bnm,bmd->bnd"}> : () -> ()
    %cst_118 = arith.constant dense<0.000000e+00> : vector<2x16x8xf32>
    %184 = tpu.matmul %183, %172, %cst_118 {dimension_numbers = #tpu.dot_dimension_numbers<[2], [1], [1], [2], [0, 0, 0, 1, 1, 2], [0], [0]>} : vector<2x16x16xf32>, vector<2x16x8xf32>, vector<2x16x8xf32> -> vector<2x16x8xf32>
    "tpu.trace_stop"() : () -> ()
    %185 = vector.shape_cast %184 : vector<2x16x8xf32> to vector<32x8xf32>
    %c3_119 = arith.constant 3 : index
    %c0_120 = arith.constant 0 : index
    %c0_121 = arith.constant 0 : index
    %186 = vector.load %arg10[%c3_119, %c0_120, %c0_121] : memref<4x8x32xf32, #tpu.memory_space<vmem>>, vector<1x8x32xf32>
    %187 = vector.shape_cast %186 : vector<1x8x32xf32> to vector<8x32xf32>
    %cst_122 = arith.constant dense<0.000000e+00> : vector<32x32xf32>
    %188 = tpu.matmul %185, %187, %cst_122 {dimension_numbers = #tpu.dot_dimension_numbers<[1], [0], [0], [1], [0, 0, 1, 1], [], []>} : vector<32x8xf32>, vector<8x32xf32>, vector<32x32xf32> -> vector<32x32xf32>
    %189 = arith.addf %148, %188 : vector<32x32xf32>
    %190 = arith.addf %0, %189 : vector<32x32xf32>
    %c0_123 = arith.constant 0 : index
    %c0_124 = arith.constant 0 : index
    %191 = vector.load %arg11[%c0_123, %c0_124] : memref<1x32xf32, #tpu.memory_space<vmem>>, vector<1x32xf32>
    %192 = vector.broadcast %191 : vector<1x32xf32> to vector<32x32xf32>
    %193 = arith.addf %190, %192 : vector<32x32xf32>
    %c0_125 = arith.constant 0 : index
    %c0_126 = arith.constant 0 : index
    %194 = vector.load %arg12[%c0_125, %c0_126] : memref<1x32xf32, #tpu.memory_space<vmem>>, vector<1x32xf32>
    %c0_127 = arith.constant 0 : index
    %c0_128 = arith.constant 0 : index
    %195 = vector.load %arg13[%c0_127, %c0_128] : memref<1x32xf32, #tpu.memory_space<vmem>>, vector<1x32xf32>
    %cst_129 = arith.constant dense<0.000000e+00> : vector<32xf32>
    %196 = vector.multi_reduction <add>, %193, %cst_129 [1] : vector<32x32xf32> to vector<32xf32>
    %197 = vector.shape_cast %196 : vector<32xf32> to vector<32x1xf32>
    %cst_130 = arith.constant 3.200000e+01 : f32
    %198 = vector.broadcast %cst_130 : f32 to vector<32x1xf32>
    %199 = arith.divf %197, %198 : vector<32x1xf32>
    %200 = vector.broadcast %199 : vector<32x1xf32> to vector<32x32xf32>
    %201 = arith.subf %193, %200 : vector<32x32xf32>
    %202 = arith.mulf %201, %201 : vector<32x32xf32>
    %cst_131 = arith.constant dense<0.000000e+00> : vector<32xf32>
    %203 = vector.multi_reduction <add>, %202, %cst_131 [1] : vector<32x32xf32> to vector<32xf32>
    %204 = vector.shape_cast %203 : vector<32xf32> to vector<32x1xf32>
    %cst_132 = arith.constant 3.200000e+01 : f32
    %205 = vector.broadcast %cst_132 : f32 to vector<32x1xf32>
    %206 = arith.divf %204, %205 : vector<32x1xf32>
    %207 = vector.broadcast %199 : vector<32x1xf32> to vector<32x32xf32>
    %208 = arith.subf %193, %207 : vector<32x32xf32>
    %cst_133 = arith.constant 9.99999974E-6 : f32
    %209 = vector.broadcast %cst_133 : f32 to vector<32x1xf32>
    %210 = arith.addf %206, %209 : vector<32x1xf32>
    %211 = math.rsqrt %210 : vector<32x1xf32>
    %212 = vector.broadcast %211 : vector<32x1xf32> to vector<32x32xf32>
    %213 = arith.mulf %208, %212 : vector<32x32xf32>
    %214 = vector.broadcast %194 : vector<1x32xf32> to vector<32x32xf32>
    %215 = arith.mulf %213, %214 : vector<32x32xf32>
    %216 = vector.broadcast %195 : vector<1x32xf32> to vector<32x32xf32>
    %217 = arith.addf %215, %216 : vector<32x32xf32>
    %c0_134 = arith.constant 0 : index
    %c0_135 = arith.constant 0 : index
    %218 = vector.load %arg14[%c0_134, %c0_135] : memref<32x128xf32, #tpu.memory_space<vmem>>, vector<32x128xf32>
    %c0_136 = arith.constant 0 : index
    %c0_137 = arith.constant 0 : index
    %219 = vector.load %arg15[%c0_136, %c0_137] : memref<1x128xf32, #tpu.memory_space<vmem>>, vector<1x128xf32>
    %cst_138 = arith.constant dense<0.000000e+00> : vector<32x128xf32>
    %220 = tpu.matmul %217, %218, %cst_138 {dimension_numbers = #tpu.dot_dimension_numbers<[1], [0], [0], [1], [0, 0, 1, 1], [], []>} : vector<32x32xf32>, vector<32x128xf32>, vector<32x128xf32> -> vector<32x128xf32>
    %221 = vector.broadcast %219 : vector<1x128xf32> to vector<32x128xf32>
    %222 = arith.addf %220, %221 : vector<32x128xf32>
    %cst_139 = arith.constant 5.000000e-01 : f32
    %223 = vector.broadcast %cst_139 : f32 to vector<32x128xf32>
    %224 = arith.mulf %223, %222 : vector<32x128xf32>
    %cst_140 = arith.constant 2.000000e+00 : f32
    %225 = math.sqrt %cst_140 : f32
    %cst_141 = arith.constant 1.000000e+00 : f32
    %226 = arith.divf %cst_141, %225 : f32
    %227 = vector.broadcast %226 : f32 to vector<32x128xf32>
    %228 = arith.mulf %222, %227 : vector<32x128xf32>
    %229 = math.erf %228 : vector<32x128xf32>
    %cst_142 = arith.constant 1.000000e+00 : f32
    %230 = vector.broadcast %cst_142 : f32 to vector<32x128xf32>
    %231 = arith.addf %230, %229 : vector<32x128xf32>
    %232 = arith.mulf %224, %231 : vector<32x128xf32>
    %c0_143 = arith.constant 0 : index
    %c0_144 = arith.constant 0 : index
    %233 = vector.load %arg16[%c0_143, %c0_144] : memref<128x32xf32, #tpu.memory_space<vmem>>, vector<128x32xf32>
    %c0_145 = arith.constant 0 : index
    %c0_146 = arith.constant 0 : index
    %234 = vector.load %arg17[%c0_145, %c0_146] : memref<1x32xf32, #tpu.memory_space<vmem>>, vector<1x32xf32>
    %cst_147 = arith.constant dense<0.000000e+00> : vector<32x32xf32>
    %235 = tpu.matmul %232, %233, %cst_147 {dimension_numbers = #tpu.dot_dimension_numbers<[1], [0], [0], [1], [0, 0, 1, 1], [], []>} : vector<32x128xf32>, vector<128x32xf32>, vector<32x32xf32> -> vector<32x32xf32>
    %236 = vector.broadcast %234 : vector<1x32xf32> to vector<32x32xf32>
    %237 = arith.addf %235, %236 : vector<32x32xf32>
    %238 = arith.addf %193, %237 : vector<32x32xf32>
    %c0_148 = arith.constant 0 : index
    %c0_149 = arith.constant 0 : index
    %239 = vector.load %arg18[%c0_148, %c0_149] : memref<32x32xf32, #tpu.memory_space<vmem>>, vector<32x32xf32>
    tpu.vector_store %arg18[%c0_148, %c0_149], %238 {strides = array<i32>} : memref<32x32xf32, #tpu.memory_space<vmem>>, vector<32x32xf32>,
    return
  }
  func.func @transform_0(%arg0: i32) -> (i32, i32) {
    %c0_i32 = arith.constant 0 : i32
    %c0_i32_0 = arith.constant 0 : i32
    return %arg0, %c0_i32 : i32, i32
  }
  func.func @transform_1(%arg0: i32) -> (i32, i32) {
    %c0_i32 = arith.constant 0 : i32
    %c0_i32_0 = arith.constant 0 : i32
    %c0_i32_1 = arith.constant 0 : i32
    return %c0_i32, %c0_i32_0 : i32, i32
  }
  func.func @transform_2(%arg0: i32) -> (i32, i32) {
    %c0_i32 = arith.constant 0 : i32
    %c0_i32_0 = arith.constant 0 : i32
    %c0_i32_1 = arith.constant 0 : i32
    return %c0_i32, %c0_i32_0 : i32, i32
  }
  func.func @transform_3(%arg0: i32) -> (i32, i32, i32) {
    %c0_i32 = arith.constant 0 : i32
    %c0_i32_0 = arith.constant 0 : i32
    %c0_i32_1 = arith.constant 0 : i32
    %c0_i32_2 = arith.constant 0 : i32
    return %c0_i32, %c0_i32_0, %c0_i32_1 : i32, i32, i32
  }
  func.func @transform_4(%arg0: i32) -> (i32, i32, i32) {
    %c0_i32 = arith.constant 0 : i32
    %c0_i32_0 = arith.constant 0 : i32
    %c0_i32_1 = arith.constant 0 : i32
    %c0_i32_2 = arith.constant 0 : i32
    return %c0_i32, %c0_i32_0, %c0_i32_1 : i32, i32, i32
  }
  func.func @transform_5(%arg0: i32) -> (i32, i32, i32) {
    %c0_i32 = arith.constant 0 : i32
    %c0_i32_0 = arith.constant 0 : i32
    %c0_i32_1 = arith.constant 0 : i32
    %c0_i32_2 = arith.constant 0 : i32
    return %c0_i32, %c0_i32_0, %c0_i32_1 : i32, i32, i32
  }
  func.func @transform_6(%arg0: i32) -> (i32, i32, i32) {
    %c0_i32 = arith.constant 0 : i32
    %c0_i32_0 = arith.constant 0 : i32
    %c0_i32_1 = arith.constant 0 : i32
    %c0_i32_2 = arith.constant 0 : i32
    return %c0_i32, %c0_i32_0, %c0_i32_1 : i32, i32, i32
  }
  func.func @transform_7(%arg0: i32) -> (i32, i32, i32) {
    %c0_i32 = arith.constant 0 : i32
    %c0_i32_0 = arith.constant 0 : i32
    %c0_i32_1 = arith.constant 0 : i32
    %c0_i32_2 = arith.constant 0 : i32
    return %c0_i32, %c0_i32_0, %c0_i32_1 : i32, i32, i32
  }
  func.func @transform_8(%arg0: i32) -> (i32, i32, i32) {
    %c0_i32 = arith.constant 0 : i32
    %c0_i32_0 = arith.constant 0 : i32
    %c0_i32_1 = arith.constant 0 : i32
    %c0_i32_2 = arith.constant 0 : i32
    return %c0_i32, %c0_i32_0, %c0_i32_1 : i32, i32, i32
  }
  func.func @transform_9(%arg0: i32) -> (i32, i32, i32) {
    %c0_i32 = arith.constant 0 : i32
    %c0_i32_0 = arith.constant 0 : i32
    %c0_i32_1 = arith.constant 0 : i32
    %c0_i32_2 = arith.constant 0 : i32
    return %c0_i32, %c0_i32_0, %c0_i32_1 : i32, i32, i32
  }
  func.func @transform_10(%arg0: i32) -> (i32, i32) {
    %c0_i32 = arith.constant 0 : i32
    %c0_i32_0 = arith.constant 0 : i32
    %c0_i32_1 = arith.constant 0 : i32
    return %c0_i32, %c0_i32_0 : i32, i32
  }
  func.func @transform_11(%arg0: i32) -> (i32, i32) {
    %c0_i32 = arith.constant 0 : i32
    %c0_i32_0 = arith.constant 0 : i32
    %c0_i32_1 = arith.constant 0 : i32
    return %c0_i32, %c0_i32_0 : i32, i32
  }
  func.func @transform_12(%arg0: i32) -> (i32, i32) {
    %c0_i32 = arith.constant 0 : i32
    %c0_i32_0 = arith.constant 0 : i32
    %c0_i32_1 = arith.constant 0 : i32
    return %c0_i32, %c0_i32_0 : i32, i32
  }
  func.func @transform_13(%arg0: i32) -> (i32, i32) {
    %c0_i32 = arith.constant 0 : i32
    %c0_i32_0 = arith.constant 0 : i32
    %c0_i32_1 = arith.constant 0 : i32
    return %c0_i32, %c0_i32_0 : i32, i32
  }
  func.func @transform_14(%arg0: i32) -> (i32, i32) {
    %c0_i32 = arith.constant 0 : i32
    %c0_i32_0 = arith.constant 0 : i32
    %c0_i32_1 = arith.constant 0 : i32
    return %c0_i32, %c0_i32_0 : i32, i32
  }
  func.func @transform_15(%arg0: i32) -> (i32, i32) {
    %c0_i32 = arith.constant 0 : i32
    %c0_i32_0 = arith.constant 0 : i32
    %c0_i32_1 = arith.constant 0 : i32
    return %c0_i32, %c0_i32_0 : i32, i32
  }
  func.func @transform_16(%arg0: i32) -> (i32, i32) {
    %c0_i32 = arith.constant 0 : i32
    %c0_i32_0 = arith.constant 0 : i32
    %c0_i32_1 = arith.constant 0 : i32
    return %c0_i32, %c0_i32_0 : i32, i32
  }
  func.func @transform_17(%arg0: i32) -> (i32, i32) {
    %c0_i32 = arith.constant 0 : i32
    %c0_i32_0 = arith.constant 0 : i32
    return %arg0, %c0_i32 : i32, i32
  }
}

</mosaic_0001>

<llo_original>
// kernel: tpu_custom_call.1
$region0: #{tpu_custom_call.1}
  #allocation0 [shape = 'u32[]', space=smem, size = 0x4, offset = 0x4, fixed_abs, tag = 'smem constant byte address 0x4 - core index']
  #allocation1 [shape = 'u32[144,128]{1,0:T(1,128)}', space=vmem, size = 0x12000, scoped, tag = 'internal scratch']
  %s0 = inlined_call_operand.vmem [shape: f32[32,32], index: 0, kind: input, shape index: {}]
  %s1 = inlined_call_operand.vmem [shape: f32[1,32], index: 1, kind: input, shape index: {}]
  %s2 = inlined_call_operand.vmem [shape: f32[1,32], index: 2, kind: input, shape index: {}]
  %s3 = inlined_call_operand.vmem [shape: f32[4,32,8], index: 3, kind: input, shape index: {}]
  %s4 = inlined_call_operand.vmem [shape: f32[4,1,8], index: 4, kind: input, shape index: {}]
  %s5 = inlined_call_operand.vmem [shape: f32[4,32,8], index: 5, kind: input, shape index: {}]
  %s6 = inlined_call_operand.vmem [shape: f32[4,1,8], index: 6, kind: input, shape index: {}]
  %s7 = inlined_call_operand.vmem [shape: f32[4,32,8], index: 7, kind: input, shape index: {}]
  %s8 = inlined_call_operand.vmem [shape: f32[4,1,8], index: 8, kind: input, shape index: {}]
  %s9 = inlined_call_operand.vmem [shape: f32[4,8,32], index: 9, kind: input, shape index: {}]
  %s10 = inlined_call_operand.vmem [shape: f32[1,32], index: 10, kind: input, shape index: {}]
  %s11 = inlined_call_operand.vmem [shape: f32[1,32], index: 11, kind: input, shape index: {}]
  %s12 = inlined_call_operand.vmem [shape: f32[1,32], index: 12, kind: input, shape index: {}]
  %s13 = inlined_call_operand.vmem [shape: f32[32,128], index: 13, kind: input, shape index: {}]
  %s14 = inlined_call_operand.vmem [shape: f32[1,128], index: 14, kind: input, shape index: {}]
  %s15 = inlined_call_operand.vmem [shape: f32[128,32], index: 15, kind: input, shape index: {}]
  %s16 = inlined_call_operand.vmem [shape: f32[1,32], index: 16, kind: input, shape index: {}]
  %s17 = inlined_call_operand.hbm [shape: f32[32,32], index: 17, kind: output, shape index: {}]
  %s18 = sld [smem:[#allocation0]]
  $region78: #{tpu_custom_call.1} parent=0
    _
  %s20 = ssub.s32 1, %s18
  %s21 = scalar_select 0, %s20, %s18
  $region1: #{tpu_custom_call.1} parent=0
    #allocation2 [shape = 'u8[16384]{0}', space=vmem, size = 0x4000, scoped, tag = 'output window, operand 0, single buffered']
    #allocation3 [shape = 's32[1]{0}', space=sflag, size = 0x4, scoped, tag = 'scoped memory for tpu_custom_call.1']
    %22 = vsyncpa [#allocation3], 0
    // Predicated region
    $region2: #{tpu_custom_call.1} parent=1 // pred_check
      _
    $region3: #{tpu_custom_call.1} parent=1 // pred_check_branch
      %24 = sbr.rel (0) target = $region5
    $region4: #{tpu_custom_call.1} parent=1 // pred_region
      _
    $region5: #{tpu_custom_call.1} parent=1 // pred_fallthru
      _
    // Predicated region
    $region6: #{tpu_custom_call.1} parent=1 // pred_check
      _
    $region7: #{tpu_custom_call.1} parent=1 // pred_check_branch
      %26 = sbr.rel (0) target = $region9
    $region8: #{tpu_custom_call.1} parent=1 // pred_region
      _
    $region9: #{tpu_custom_call.1} parent=1 // pred_fallthru
      _
    // Predicated region
    $region10: #{tpu_custom_call.1} parent=1 // pred_check
      _
    $region11: #{tpu_custom_call.1} parent=1 // pred_check_branch
      %28 = sbr.rel (0) target = $region13
    $region12: #{tpu_custom_call.1} parent=1 // pred_region
      _
    $region13: #{tpu_custom_call.1} parent=1 // pred_fallthru
      _
    // Predicated region
    $region14: #{tpu_custom_call.1} parent=1 // pred_check
      _
    $region15: #{tpu_custom_call.1} parent=1 // pred_check_branch
      %30 = sbr.rel (0) target = $region17
    $region16: #{tpu_custom_call.1} parent=1 // pred_region
      _
    $region17: #{tpu_custom_call.1} parent=1 // pred_fallthru
      _
    // Predicated region
    $region18: #{tpu_custom_call.1} parent=1 // pred_check
      _
    $region19: #{tpu_custom_call.1} parent=1 // pred_check_branch
      %32 = sbr.rel (0) target = $region21
    $region20: #{tpu_custom_call.1} parent=1 // pred_region
      _
    $region21: #{tpu_custom_call.1} parent=1 // pred_fallthru
      _
    // Predicated region
    $region22: #{tpu_custom_call.1} parent=1 // pred_check
      _
    $region23: #{tpu_custom_call.1} parent=1 // pred_check_branch
      %34 = sbr.rel (0) target = $region25
    $region24: #{tpu_custom_call.1} parent=1 // pred_region
      _
    $region25: #{tpu_custom_call.1} parent=1 // pred_fallthru
      _
    // Predicated region
    $region26: #{tpu_custom_call.1} parent=1 // pred_check
      _
    $region27: #{tpu_custom_call.1} parent=1 // pred_check_branch
      %36 = sbr.rel (0) target = $region29
    $region28: #{tpu_custom_call.1} parent=1 // pred_region
      _
    $region29: #{tpu_custom_call.1} parent=1 // pred_fallthru
      _
    // Predicated region
    $region30: #{tpu_custom_call.1} parent=1 // pred_check
      _
    $region31: #{tpu_custom_call.1} parent=1 // pred_check_branch
      %38 = sbr.rel (0) target = $region33
    $region32: #{tpu_custom_call.1} parent=1 // pred_region
      _
    $region33: #{tpu_custom_call.1} parent=1 // pred_fallthru
      _
    // Predicated region
    $region34: #{tpu_custom_call.1} parent=1 // pred_check
      _
    $region35: #{tpu_custom_call.1} parent=1 // pred_check_branch
      %40 = sbr.rel (0) target = $region37
    $region36: #{tpu_custom_call.1} parent=1 // pred_region
      _
    $region37: #{tpu_custom_call.1} parent=1 // pred_fallthru
      _
    // Predicated region
    $region38: #{tpu_custom_call.1} parent=1 // pred_check
      _
    $region39: #{tpu_custom_call.1} parent=1 // pred_check_branch
      %42 = sbr.rel (0) target = $region41
    $region40: #{tpu_custom_call.1} parent=1 // pred_region
      _
    $region41: #{tpu_custom_call.1} parent=1 // pred_fallthru
      _
    // Predicated region
    $region42: #{tpu_custom_call.1} parent=1 // pred_check
      _
    $region43: #{tpu_custom_call.1} parent=1 // pred_check_branch
      %44 = sbr.rel (0) target = $region45
    $region44: #{tpu_custom_call.1} parent=1 // pred_region
      _
    $region45: #{tpu_custom_call.1} parent=1 // pred_fallthru
      _
    // Predicated region
    $region46: #{tpu_custom_call.1} parent=1 // pred_check
      _
    $region47: #{tpu_custom_call.1} parent=1 // pred_check_branch
      %46 = sbr.rel (0) target = $region49
    $region48: #{tpu_custom_call.1} parent=1 // pred_region
      _
    $region49: #{tpu_custom_call.1} parent=1 // pred_fallthru
      _
    // Predicated region
    $region50: #{tpu_custom_call.1} parent=1 // pred_check
      _
    $region51: #{tpu_custom_call.1} parent=1 // pred_check_branch
      %48 = sbr.rel (0) target = $region53
    $region52: #{tpu_custom_call.1} parent=1 // pred_region
      _
    $region53: #{tpu_custom_call.1} parent=1 // pred_fallthru
      _
    // Predicated region
    $region54: #{tpu_custom_call.1} parent=1 // pred_check
      _
    $region55: #{tpu_custom_call.1} parent=1 // pred_check_branch
      %50 = sbr.rel (0) target = $region57
    $region56: #{tpu_custom_call.1} parent=1 // pred_region
      _
    $region57: #{tpu_custom_call.1} parent=1 // pred_fallthru
      _
    // Predicated region
    $region58: #{tpu_custom_call.1} parent=1 // pred_check
      _
    $region59: #{tpu_custom_call.1} parent=1 // pred_check_branch
      %52 = sbr.rel (0) target = $region61
    $region60: #{tpu_custom_call.1} parent=1 // pred_region
      _
    $region61: #{tpu_custom_call.1} parent=1 // pred_fallthru
      _
    // Predicated region
    $region62: #{tpu_custom_call.1} parent=1 // pred_check
      _
    $region63: #{tpu_custom_call.1} parent=1 // pred_check_branch
      %54 = sbr.rel (0) target = $region65
    $region64: #{tpu_custom_call.1} parent=1 // pred_region
      _
    $region65: #{tpu_custom_call.1} parent=1 // pred_fallthru
      _
    // Predicated region
    $region66: #{tpu_custom_call.1} parent=1 // pred_check
      _
    $region67: #{tpu_custom_call.1} parent=1 // pred_check_branch
      %56 = sbr.rel (0) target = $region69
    $region68: #{tpu_custom_call.1} parent=1 // pred_region
      _
    $region69: #{tpu_custom_call.1} parent=1 // pred_fallthru
      _
    %v57 = vld [vmem:[%s0] sm:$0xff]
    %v58 = vld [vmem:[%s0 + $0x8] sm:$0xff]
    %v59 = vld [vmem:[%s0 + $0x10] sm:$0xff]
    %v60 = vld [vmem:[%s0 + $0x18] sm:$0xff]
    %v61 = vld [vmem:[%s1] sm:$0x1]
    %v62 = vld [vmem:[%s2] sm:$0x1]
    %vm63 = vcmask 261120
    %v64 = vsel %vm63, %v57, 0.0
    %65 = vadd.xlane.f32.xlu0 %v64
    %v66 = vpop.xlane.xlu0 %65
    %v67 = vsel %vm63, %v58, 0.0
    %68 = vadd.xlane.f32.xlu0 %v67
    %v69 = vpop.xlane.xlu0 %68
    %v70 = vsel %vm63, %v59, 0.0
    %71 = vadd.xlane.f32.xlu0 %v70
    %v72 = vpop.xlane.xlu0 %71
    %v73 = vsel %vm63, %v60, 0.0
    %74 = vadd.xlane.f32.xlu0 %v73
    %v75 = vpop.xlane.xlu0 %74
    %v76 = vrcp.pop 32.0
    %v77 = vmul.f32 %v66, %v76
    %v78 = vmul.f32 %v69, %v76
    %v79 = vmul.f32 %v72, %v76
    %v80 = vmul.f32 %v75, %v76
    %v81 = vsub.f32 %v57, %v77
    %v82 = vsub.f32 %v58, %v78
    %v83 = vsub.f32 %v59, %v79
    %v84 = vsub.f32 %v60, %v80
    %v85 = vmul.f32 %v81, %v81
    %v86 = vmul.f32 %v82, %v82
    %v87 = vmul.f32 %v83, %v83
    %v88 = vmul.f32 %v84, %v84
    %v89 = vsel %vm63, %v85, 0.0
    %90 = vadd.xlane.f32.xlu0 %v89
    %v91 = vpop.xlane.xlu0 %90
    %v92 = vsel %vm63, %v86, 0.0
    %93 = vadd.xlane.f32.xlu0 %v92
    %v94 = vpop.xlane.xlu0 %93
    %v95 = vsel %vm63, %v87, 0.0
    %96 = vadd.xlane.f32.xlu0 %v95
    %v97 = vpop.xlane.xlu0 %96
    %v98 = vsel %vm63, %v88, 0.0
    %99 = vadd.xlane.f32.xlu0 %v98
    %v100 = vpop.xlane.xlu0 %99
    %v101 = vmul.f32 %v91, %v76
    %v102 = vmul.f32 %v94, %v76
    %v103 = vmul.f32 %v97, %v76
    %v104 = vmul.f32 %v100, %v76
    %v105 = vadd.f32 %v101, 1e-05
    %v106 = vadd.f32 %v102, 1e-05
    %v107 = vadd.f32 %v103, 1e-05
    %v108 = vadd.f32 %v104, 1e-05
    %v109 = vrsqrt.pop %v105
    %v110 = vrsqrt.pop %v106
    %v111 = vrsqrt.pop %v107
    %v112 = vrsqrt.pop %v108
    %v113 = vmul.f32 %v81, %v109
    %v114 = vmul.f32 %v82, %v110
    %v115 = vmul.f32 %v83, %v111
    %v116 = vmul.f32 %v84, %v112
    %v118 = vlaneseq
    %v119 = vshrl.u32 %v118, 7
    %v120 = vsub.s32 0, %v119
    %v121 = vrot.slane %v61, %v120
    %v123 = vmul.f32 %v113, %v121
    %v124 = vmul.f32 %v114, %v121
    %v125 = vmul.f32 %v115, %v121
    %v126 = vmul.f32 %v116, %v121
    %v128 = vlaneseq
    %v129 = vshrl.u32 %v128, 7
    %v130 = vsub.s32 0, %v129
    %v131 = vrot.slane %v62, %v130
    %v133 = vadd.f32 %v123, %v131
    %v134 = vadd.f32 %v124, %v131
    %v135 = vadd.f32 %v125, %v131
    %v136 = vadd.f32 %v126, %v131
    %v137 = vld [vmem:[%s3] sm:$0xff]
    %v138 = vld [vmem:[%s3 + $0x8] sm:$0xff]
    %v139 = vld [vmem:[%s3 + $0x10] sm:$0xff]
    %v140 = vld [vmem:[%s3 + $0x18] sm:$0xff]
    %v141 = vld [vmem:[%s4] sm:$0x1]
    %v143 = vlaneseq
    %v144 = vshrl.u32 %v143, 7
    %v145 = vsub.s32 0, %v144
    %v146 = vrot.slane %v141, %v145
    %v149 = vsel %vm63, %v133, 0
    %v152 = vsel %vm63, %v134, 0
    %v155 = vsel %vm63, %v135, 0
    %v158 = vsel %vm63, %v136, 0
    %160 = vmatprep.subr.mxu0 0.0
    %161 = vmatpush1.msra.mxu0 0.0
    %162 = vmatprep.subr.mxu0 0.0
    %163 = vmatpush1.msra.mxu0 0.0
    %164 = vmatprep.subr.mxu0 0.0
    %165 = vmatpush1.msra.mxu0 0.0
    %166 = vmatprep.subr.mxu0 0.0
    %167 = vmatpush1.msra.mxu0 0.0
    %168 = vmatprep.subr.mxu0 0.0
    %169 = vmatpush1.msra.mxu0 0.0
    %170 = vmatprep.subr.mxu0 0.0
    %171 = vmatpush1.msra.mxu0 0.0
    %172 = vmatprep.subr.mxu0 0.0
    %173 = vmatpush1.msra.mxu0 0.0
    %174 = vmatprep.subr.mxu0 0.0
    %175 = vmatpush1.msra.mxu0 0.0
    %176 = vmatprep.subr.mxu0 0.0
    %177 = vmatpush1.msra.mxu0 0.0
    %178 = vmatprep.subr.mxu0 0.0
    %179 = vmatpush1.msra.mxu0 0.0
    %180 = vmatprep.subr.mxu0 0.0
    %181 = vmatpush1.msra.mxu0 0.0
    %182 = vmatprep.subr.mxu0 0.0
    %183 = vmatpush1.msra.mxu0 0.0
    %184 = vmatprep.subr.mxu0 0.0
    %185 = vmatpush1.msra.mxu0 %v140
    %186 = vmatprep.subr.mxu0 0.0
    %187 = vmatpush1.msra.mxu0 %v139
    %188 = vmatprep.subr.mxu0 0.0
    %189 = vmatpush1.msra.mxu0 %v138
    %190 = vmatprep.subr.mxu0 0.0
    %191 = vmatpush1.msra.mxu0 %v137
    %192 = vmatprep.subr.mxu0 0.0
    %193 = vmatpush2.msra.mxu0 0.0
    %194 = vmatprep.subr.mxu0 0.0
    %195 = vmatpush2.msra.mxu0 0.0
    %196 = vmatprep.subr.mxu0 0.0
    %197 = vmatpush2.msra.mxu0 0.0
    %198 = vmatprep.subr.mxu0 0.0
    %199 = vmatpush2.msra.mxu0 0.0
    %200 = vmatprep.subr.mxu0 0.0
    %201 = vmatpush2.msra.mxu0 0.0
    %202 = vmatprep.subr.mxu0 0.0
    %203 = vmatpush2.msra.mxu0 0.0
    %204 = vmatprep.subr.mxu0 0.0
    %205 = vmatpush2.msra.mxu0 0.0
    %206 = vmatprep.subr.mxu0 0.0
    %207 = vmatpush2.msra.mxu0 0.0
    %208 = vmatprep.subr.mxu0 0.0
    %209 = vmatpush2.msra.mxu0 0.0
    %210 = vmatprep.subr.mxu0 0.0
    %211 = vmatpush2.msra.mxu0 0.0
    %212 = vmatprep.subr.mxu0 0.0
    %213 = vmatpush2.msra.mxu0 0.0
    %214 = vmatprep.subr.mxu0 0.0
    %215 = vmatpush2.msra.mxu0 0.0
    %216 = vmatprep.subr.mxu0 0.0
    %217 = vmatpush2.msra.mxu0 0.0
    %218 = vmatprep.subr.mxu0 0.0
    %219 = vmatpush2.msra.mxu0 0.0
    %220 = vmatprep.subr.mxu0 0.0
    %221 = vmatpush2.msra.mxu0 0.0
    %222 = vmatprep.subr.mxu0 0.0
    %223 = vmatpush2.msra.mxu0 0.0
    %224 = vmatprep.mubr.f32.mxu0 0.0
    %225 = vmatmul.mubr.f32.gmra.mxu0 %v149
    %v226 = vpop.f32.mrf.mxu0
    %v227 = vadd.f32 %v146, %v226
    %v228 = vpop.f32.mrf.mxu0
    %229 = vmatprep.mubr.f32.mxu0 0.0
    %230 = vmatmul.mubr.f32.gmra.mxu0 %v152
    %v231 = vpop.f32.mrf.mxu0
    %v232 = vadd.f32 %v146, %v231
    %v233 = vpop.f32.mrf.mxu0
    %234 = vmatprep.mubr.f32.mxu0 0.0
    %235 = vmatmul.mubr.f32.gmra.mxu0 %v155
    %v236 = vpop.f32.mrf.mxu0
    %v237 = vadd.f32 %v146, %v236
    %v238 = vpop.f32.mrf.mxu0
    %239 = vmatprep.mubr.f32.mxu0 0.0
    %240 = vmatmul.mubr.f32.gmra.mxu0 %v158
    %v241 = vpop.f32.mrf.mxu0
    %v242 = vadd.f32 %v146, %v241
    %v243 = vpop.f32.mrf.mxu0
    %244 = vdwg.mxu0
    %v245 = vld [vmem:[%s5] sm:$0xff]
    %v246 = vld [vmem:[%s5 + $0x8] sm:$0xff]
    %v247 = vld [vmem:[%s5 + $0x10] sm:$0xff]
    %v248 = vld [vmem:[%s5 + $0x18] sm:$0xff]
    %v249 = vld [vmem:[%s6] sm:$0x1]
    %v251 = vlaneseq
    %v252 = vshrl.u32 %v251, 7
    %v253 = vsub.s32 0, %v252
    %v254 = vrot.slane %v249, %v253
    %256 = vmatprep.subr.mxu0 0.0
    %257 = vmatpush1.msra.mxu0 0.0
    %258 = vmatprep.subr.mxu0 0.0
    %259 = vmatpush1.msra.mxu0 0.0
    %260 = vmatprep.subr.mxu0 0.0
    %261 = vmatpush1.msra.mxu0 0.0
    %262 = vmatprep.subr.mxu0 0.0
    %263 = vmatpush1.msra.mxu0 0.0
    %264 = vmatprep.subr.mxu0 0.0
    %265 = vmatpush1.msra.mxu0 0.0
    %266 = vmatprep.subr.mxu0 0.0
    %267 = vmatpush1.msra.mxu0 0.0
    %268 = vmatprep.subr.mxu0 0.0
    %269 = vmatpush1.msra.mxu0 0.0
    %270 = vmatprep.subr.mxu0 0.0
    %271 = vmatpush1.msra.mxu0 0.0
    %272 = vmatprep.subr.mxu0 0.0
    %273 = vmatpush1.msra.mxu0 0.0
    %274 = vmatprep.subr.mxu0 0.0
    %275 = vmatpush1.msra.mxu0 0.0
    %276 = vmatprep.subr.mxu0 0.0
    %277 = vmatpush1.msra.mxu0 0.0
    %278 = vmatprep.subr.mxu0 0.0
    %279 = vmatpush1.msra.mxu0 0.0
    %280 = vmatprep.subr.mxu0 0.0
    %281 = vmatpush1.msra.mxu0 %v248
    %282 = vmatprep.subr.mxu0 0.0
    %283 = vmatpush1.msra.mxu0 %v247
    %284 = vmatprep.subr.mxu0 0.0
    %285 = vmatpush1.msra.mxu0 %v246
    %286 = vmatprep.subr.mxu0 0.0
    %287 = vmatpush1.msra.mxu0 %v245
    %288 = vmatprep.subr.mxu0 0.0
    %289 = vmatpush2.msra.mxu0 0.0
    %290 = vmatprep.subr.mxu0 0.0
    %291 = vmatpush2.msra.mxu0 0.0
    %292 = vmatprep.subr.mxu0 0.0
    %293 = vmatpush2.msra.mxu0 0.0
    %294 = vmatprep.subr.mxu0 0.0
    %295 = vmatpush2.msra.mxu0 0.0
    %296 = vmatprep.subr.mxu0 0.0
    %297 = vmatpush2.msra.mxu0 0.0
    %298 = vmatprep.subr.mxu0 0.0
    %299 = vmatpush2.msra.mxu0 0.0
    %300 = vmatprep.subr.mxu0 0.0
    %301 = vmatpush2.msra.mxu0 0.0
    %302 = vmatprep.subr.mxu0 0.0
    %303 = vmatpush2.msra.mxu0 0.0
    %304 = vmatprep.subr.mxu0 0.0
    %305 = vmatpush2.msra.mxu0 0.0
    %306 = vmatprep.subr.mxu0 0.0
    %307 = vmatpush2.msra.mxu0 0.0
    %308 = vmatprep.subr.mxu0 0.0
    %309 = vmatpush2.msra.mxu0 0.0
    %310 = vmatprep.subr.mxu0 0.0
    %311 = vmatpush2.msra.mxu0 0.0
    %312 = vmatprep.subr.mxu0 0.0
    %313 = vmatpush2.msra.mxu0 0.0
    %314 = vmatprep.subr.mxu0 0.0
    %315 = vmatpush2.msra.mxu0 0.0
    %316 = vmatprep.subr.mxu0 0.0
    %317 = vmatpush2.msra.mxu0 0.0
    %318 = vmatprep.subr.mxu0 0.0
    %319 = vmatpush2.msra.mxu0 0.0
    %320 = vmatprep.mubr.f32.mxu0 0.0
    %321 = vmatmul.mubr.f32.gmra.mxu0 %v149
    %v322 = vpop.f32.mrf.mxu0
    %v323 = vadd.f32 %v254, %v322
    %v324 = vpop.f32.mrf.mxu0
    %325 = vmatprep.mubr.f32.mxu0 0.0
    %326 = vmatmul.mubr.f32.gmra.mxu0 %v152
    %v327 = vpop.f32.mrf.mxu0
    %v328 = vadd.f32 %v254, %v327
    %v329 = vpop.f32.mrf.mxu0
    %330 = vmatprep.mubr.f32.mxu0 0.0
    %331 = vmatmul.mubr.f32.gmra.mxu0 %v155
    %v332 = vpop.f32.mrf.mxu0
    %v333 = vadd.f32 %v254, %v332
    %v334 = vpop.f32.mrf.mxu0
    %335 = vmatprep.mubr.f32.mxu0 0.0
    %336 = vmatmul.mubr.f32.gmra.mxu0 %v158
    %v337 = vpop.f32.mrf.mxu0
    %v338 = vadd.f32 %v254, %v337
    %v339 = vpop.f32.mrf.mxu0
    %340 = vdwg.mxu0
    %v341 = vld [vmem:[%s7] sm:$0xff]
    %v342 = vld [vmem:[%s7 + $0x8] sm:$0xff]
    %v343 = vld [vmem:[%s7 + $0x10] sm:$0xff]
    %v344 = vld [vmem:[%s7 + $0x18] sm:$0xff]
    %v345 = vld [vmem:[%s8] sm:$0x1]
    %v347 = vlaneseq
    %v348 = vshrl.u32 %v347, 7
    %v349 = vsub.s32 0, %v348
    %v350 = vrot.slane %v345, %v349
    %352 = vmatprep.subr.mxu0 0.0
    %353 = vmatpush1.msra.mxu0 0.0
    %354 = vmatprep.subr.mxu0 0.0
    %355 = vmatpush1.msra.mxu0 0.0
    %356 = vmatprep.subr.mxu0 0.0
    %357 = vmatpush1.msra.mxu0 0.0
    %358 = vmatprep.subr.mxu0 0.0
    %359 = vmatpush1.msra.mxu0 0.0
    %360 = vmatprep.subr.mxu0 0.0
    %361 = vmatpush1.msra.mxu0 0.0
    %362 = vmatprep.subr.mxu0 0.0
    %363 = vmatpush1.msra.mxu0 0.0
    %364 = vmatprep.subr.mxu0 0.0
    %365 = vmatpush1.msra.mxu0 0.0
    %366 = vmatprep.subr.mxu0 0.0
    %367 = vmatpush1.msra.mxu0 0.0
    %368 = vmatprep.subr.mxu0 0.0
    %369 = vmatpush1.msra.mxu0 0.0
    %370 = vmatprep.subr.mxu0 0.0
    %371 = vmatpush1.msra.mxu0 0.0
    %372 = vmatprep.subr.mxu0 0.0
    %373 = vmatpush1.msra.mxu0 0.0
    %374 = vmatprep.subr.mxu0 0.0
    %375 = vmatpush1.msra.mxu0 0.0
    %376 = vmatprep.subr.mxu0 0.0
    %377 = vmatpush1.msra.mxu0 %v344
    %378 = vmatprep.subr.mxu0 0.0
    %379 = vmatpush1.msra.mxu0 %v343
    %380 = vmatprep.subr.mxu0 0.0
    %381 = vmatpush1.msra.mxu0 %v342
    %382 = vmatprep.subr.mxu0 0.0
    %383 = vmatpush1.msra.mxu0 %v341
    %384 = vmatprep.subr.mxu0 0.0
    %385 = vmatpush2.msra.mxu0 0.0
    %386 = vmatprep.subr.mxu0 0.0
    %387 = vmatpush2.msra.mxu0 0.0
    %388 = vmatprep.subr.mxu0 0.0
    %389 = vmatpush2.msra.mxu0 0.0
    %390 = vmatprep.subr.mxu0 0.0
    %391 = vmatpush2.msra.mxu0 0.0
    %392 = vmatprep.subr.mxu0 0.0
    %393 = vmatpush2.msra.mxu0 0.0
    %394 = vmatprep.subr.mxu0 0.0
    %395 = vmatpush2.msra.mxu0 0.0
    %396 = vmatprep.subr.mxu0 0.0
    %397 = vmatpush2.msra.mxu0 0.0
    %398 = vmatprep.subr.mxu0 0.0
    %399 = vmatpush2.msra.mxu0 0.0
    %400 = vmatprep.subr.mxu0 0.0
    %401 = vmatpush2.msra.mxu0 0.0
    %402 = vmatprep.subr.mxu0 0.0
    %403 = vmatpush2.msra.mxu0 0.0
    %404 = vmatprep.subr.mxu0 0.0
    %405 = vmatpush2.msra.mxu0 0.0
    %406 = vmatprep.subr.mxu0 0.0
    %407 = vmatpush2.msra.mxu0 0.0
    %408 = vmatprep.subr.mxu0 0.0
    %409 = vmatpush2.msra.mxu0 0.0
    %410 = vmatprep.subr.mxu0 0.0
    %411 = vmatpush2.msra.mxu0 0.0
    %412 = vmatprep.subr.mxu0 0.0
    %413 = vmatpush2.msra.mxu0 0.0
    %414 = vmatprep.subr.mxu0 0.0
    %415 = vmatpush2.msra.mxu0 0.0
    %416 = vmatprep.mubr.f32.mxu0 0.0
    %417 = vmatmul.mubr.f32.gmra.mxu0 %v149
    %v418 = vpop.f32.mrf.mxu0
    %v419 = vadd.f32 %v350, %v418
    %v420 = vpop.f32.mrf.mxu0
    %421 = vmatprep.mubr.f32.mxu0 0.0
    %422 = vmatmul.mubr.f32.gmra.mxu0 %v152
    %v423 = vpop.f32.mrf.mxu0
    %v424 = vadd.f32 %v350, %v423
    %v425 = vpop.f32.mrf.mxu0
    %426 = vmatprep.mubr.f32.mxu0 0.0
    %427 = vmatmul.mubr.f32.gmra.mxu0 %v155
    %v428 = vpop.f32.mrf.mxu0
    %v429 = vadd.f32 %v350, %v428
    %v430 = vpop.f32.mrf.mxu0
    %431 = vmatprep.mubr.f32.mxu0 0.0
    %432 = vmatmul.mubr.f32.gmra.mxu0 %v158
    %v433 = vpop.f32.mrf.mxu0
    %v434 = vadd.f32 %v350, %v433
    %v435 = vpop.f32.mrf.mxu0
    %436 = vdwg.mxu0
    %vm437 = vcmask 64512
    %v439 = vsel %vm437, %v227, 0
    %v442 = vsel %vm437, %v232, 0
    %v445 = vsel %vm437, %v323, 0
    %v448 = vsel %vm437, %v328, 0
    %450 = vmatprep.subr.mxu0 0.0
    %451 = vmatpush1.xpose.msra.mxu0 0.0
    %452 = vmatprep.subr.mxu0 0.0
    %453 = vmatpush1.xpose.msra.mxu0 0.0
    %454 = vmatprep.subr.mxu0 0.0
    %455 = vmatpush1.xpose.msra.mxu0 0.0
    %456 = vmatprep.subr.mxu0 0.0
    %457 = vmatpush1.xpose.msra.mxu0 0.0
    %458 = vmatprep.subr.mxu0 0.0
    %459 = vmatpush1.xpose.msra.mxu0 0.0
    %460 = vmatprep.subr.mxu0 0.0
    %461 = vmatpush1.xpose.msra.mxu0 0.0
    %462 = vmatprep.subr.mxu0 0.0
    %463 = vmatpush1.xpose.msra.mxu0 0.0
    %464 = vmatprep.subr.mxu0 0.0
    %465 = vmatpush1.xpose.msra.mxu0 0.0
    %466 = vmatprep.subr.mxu0 0.0
    %467 = vmatpush1.xpose.msra.mxu0 0.0
    %468 = vmatprep.subr.mxu0 0.0
    %469 = vmatpush1.xpose.msra.mxu0 0.0
    %470 = vmatprep.subr.mxu0 0.0
    %471 = vmatpush1.xpose.msra.mxu0 0.0
    %472 = vmatprep.subr.mxu0 0.0
    %473 = vmatpush1.xpose.msra.mxu0 0.0
    %474 = vmatprep.subr.mxu0 0.0
    %475 = vmatpush1.xpose.msra.mxu0 0.0
    %476 = vmatprep.subr.mxu0 0.0
    %477 = vmatpush1.xpose.msra.mxu0 0.0
    %478 = vmatprep.subr.mxu0 0.0
    %479 = vmatpush1.xpose.msra.mxu0 %v448
    %480 = vmatprep.subr.mxu0 0.0
    %481 = vmatpush1.xpose.msra.mxu0 %v445
    %482 = vmatprep.subr.mxu0 0.0
    %483 = vmatpush2.xpose.msra.mxu0 0.0
    %484 = vmatprep.subr.mxu0 0.0
    %485 = vmatpush2.xpose.msra.mxu0 0.0
    %486 = vmatprep.subr.mxu0 0.0
    %487 = vmatpush2.xpose.msra.mxu0 0.0
    %488 = vmatprep.subr.mxu0 0.0
    %489 = vmatpush2.xpose.msra.mxu0 0.0
    %490 = vmatprep.subr.mxu0 0.0
    %491 = vmatpush2.xpose.msra.mxu0 0.0
    %492 = vmatprep.subr.mxu0 0.0
    %493 = vmatpush2.xpose.msra.mxu0 0.0
    %494 = vmatprep.subr.mxu0 0.0
    %495 = vmatpush2.xpose.msra.mxu0 0.0
    %496 = vmatprep.subr.mxu0 0.0
    %497 = vmatpush2.xpose.msra.mxu0 0.0
    %498 = vmatprep.subr.mxu0 0.0
    %499 = vmatpush2.xpose.msra.mxu0 0.0
    %500 = vmatprep.subr.mxu0 0.0
    %501 = vmatpush2.xpose.msra.mxu0 0.0
    %502 = vmatprep.subr.mxu0 0.0
    %503 = vmatpush2.xpose.msra.mxu0 0.0
    %504 = vmatprep.subr.mxu0 0.0
    %505 = vmatpush2.xpose.msra.mxu0 0.0
    %506 = vmatprep.subr.mxu0 0.0
    %507 = vmatpush2.xpose.msra.mxu0 0.0
    %508 = vmatprep.subr.mxu0 0.0
    %509 = vmatpush2.xpose.msra.mxu0 0.0
    %510 = vmatprep.subr.mxu0 0.0
    %511 = vmatpush2.xpose.msra.mxu0 0.0
    %512 = vmatprep.subr.mxu0 0.0
    %513 = vmatpush2.xpose.msra.mxu0 0.0
    %514 = vmatprep.mubr.f32.mxu0 0.0
    %515 = vmatmul.mubr.f32.gmra.mxu0 %v439
    %v516 = vpop.f32.mrf.mxu0
    %v517 = vadd.f32 0.0, %v516
    %v518 = vpop.f32.mrf.mxu0
    %519 = vmatprep.mubr.f32.mxu0 0.0
    %520 = vmatmul.mubr.f32.gmra.mxu0 %v442
    %v521 = vpop.f32.mrf.mxu0
    %v522 = vadd.f32 0.0, %v521
    %v523 = vpop.f32.mrf.mxu0
    %524 = vdwg.mxu0
    %v526 = vsel %vm437, %v237, 0
    %v529 = vsel %vm437, %v242, 0
    %v532 = vsel %vm437, %v333, 0
    %v535 = vsel %vm437, %v338, 0
    %537 = vmatprep.subr.mxu0 0.0
    %538 = vmatpush1.xpose.msra.mxu0 0.0
    %539 = vmatprep.subr.mxu0 0.0
    %540 = vmatpush1.xpose.msra.mxu0 0.0
    %541 = vmatprep.subr.mxu0 0.0
    %542 = vmatpush1.xpose.msra.mxu0 0.0
    %543 = vmatprep.subr.mxu0 0.0
    %544 = vmatpush1.xpose.msra.mxu0 0.0
    %545 = vmatprep.subr.mxu0 0.0
    %546 = vmatpush1.xpose.msra.mxu0 0.0
    %547 = vmatprep.subr.mxu0 0.0
    %548 = vmatpush1.xpose.msra.mxu0 0.0
    %549 = vmatprep.subr.mxu0 0.0
    %550 = vmatpush1.xpose.msra.mxu0 0.0
    %551 = vmatprep.subr.mxu0 0.0
    %552 = vmatpush1.xpose.msra.mxu0 0.0
    %553 = vmatprep.subr.mxu0 0.0
    %554 = vmatpush1.xpose.msra.mxu0 0.0
    %555 = vmatprep.subr.mxu0 0.0
    %556 = vmatpush1.xpose.msra.mxu0 0.0
    %557 = vmatprep.subr.mxu0 0.0
    %558 = vmatpush1.xpose.msra.mxu0 0.0
    %559 = vmatprep.subr.mxu0 0.0
    %560 = vmatpush1.xpose.msra.mxu0 0.0
    %561 = vmatprep.subr.mxu0 0.0
    %562 = vmatpush1.xpose.msra.mxu0 0.0
    %563 = vmatprep.subr.mxu0 0.0
    %564 = vmatpush1.xpose.msra.mxu0 0.0
    %565 = vmatprep.subr.mxu0 0.0
    %566 = vmatpush1.xpose.msra.mxu0 %v535
    %567 = vmatprep.subr.mxu0 0.0
    %568 = vmatpush1.xpose.msra.mxu0 %v532
    %569 = vmatprep.subr.mxu0 0.0
    %570 = vmatpush2.xpose.msra.mxu0 0.0
    %571 = vmatprep.subr.mxu0 0.0
    %572 = vmatpush2.xpose.msra.mxu0 0.0
    %573 = vmatprep.subr.mxu0 0.0
    %574 = vmatpush2.xpose.msra.mxu0 0.0
    %575 = vmatprep.subr.mxu0 0.0
    %576 = vmatpush2.xpose.msra.mxu0 0.0
    %577 = vmatprep.subr.mxu0 0.0
    %578 = vmatpush2.xpose.msra.mxu0 0.0
    %579 = vmatprep.subr.mxu0 0.0
    %580 = vmatpush2.xpose.msra.mxu0 0.0
    %581 = vmatprep.subr.mxu0 0.0
    %582 = vmatpush2.xpose.msra.mxu0 0.0
    %583 = vmatprep.subr.mxu0 0.0
    %584 = vmatpush2.xpose.msra.mxu0 0.0
    %585 = vmatprep.subr.mxu0 0.0
    %586 = vmatpush2.xpose.msra.mxu0 0.0
    %587 = vmatprep.subr.mxu0 0.0
    %588 = vmatpush2.xpose.msra.mxu0 0.0
    %589 = vmatprep.subr.mxu0 0.0
    %590 = vmatpush2.xpose.msra.mxu0 0.0
    %591 = vmatprep.subr.mxu0 0.0
    %592 = vmatpush2.xpose.msra.mxu0 0.0
    %593 = vmatprep.subr.mxu0 0.0
    %594 = vmatpush2.xpose.msra.mxu0 0.0
    %595 = vmatprep.subr.mxu0 0.0
    %596 = vmatpush2.xpose.msra.mxu0 0.0
    %597 = vmatprep.subr.mxu0 0.0
    %598 = vmatpush2.xpose.msra.mxu0 0.0
    %599 = vmatprep.subr.mxu0 0.0
    %600 = vmatpush2.xpose.msra.mxu0 0.0
    %601 = vmatprep.mubr.f32.mxu0 0.0
    %602 = vmatmul.mubr.f32.gmra.mxu0 %v526
    %v603 = vpop.f32.mrf.mxu0
    %v604 = vadd.f32 0.0, %v603
    %v605 = vpop.f32.mrf.mxu0
    %606 = vmatprep.mubr.f32.mxu0 0.0
    %607 = vmatmul.mubr.f32.gmra.mxu0 %v529
    %v608 = vpop.f32.mrf.mxu0
    %v609 = vadd.f32 0.0, %v608
    %v610 = vpop.f32.mrf.mxu0
    %611 = vdwg.mxu0
    %vm612 = vcmask 130048
    %v613 = vsel %vm612, %v517, -inf
    %614 = vmax.xlane.f32.xlu0 %v613
    %v615 = vpop.xlane.xlu0 %614
    %v616 = vsel %vm612, %v522, -inf
    %617 = vmax.xlane.f32.xlu0 %v616
    %v618 = vpop.xlane.xlu0 %617
    %v619 = vsel %vm612, %v604, -inf
    %620 = vmax.xlane.f32.xlu0 %v619
    %v621 = vpop.xlane.xlu0 %620
    %v622 = vsel %vm612, %v609, -inf
    %623 = vmax.xlane.f32.xlu0 %v622
    %v624 = vpop.xlane.xlu0 %623
    %v625 = vsub.f32 %v517, %v615
    %v626 = vsub.f32 %v522, %v618
    %v627 = vsub.f32 %v604, %v621
    %v628 = vsub.f32 %v609, %v624
    %v629 = vmul.f32 %v625, 1.442695
    %v630 = vpow.pop %v629
    %v631 = vmul.f32 %v626, 1.442695
    %v632 = vpow.pop %v631
    %v633 = vmul.f32 %v627, 1.442695
    %v634 = vpow.pop %v633
    %v635 = vmul.f32 %v628, 1.442695
    %v636 = vpow.pop %v635
    %v637 = vsel %vm612, %v630, 0.0
    %638 = vadd.xlane.f32.xlu0 %v637
    %v639 = vpop.xlane.xlu0 %638
    %v640 = vsel %vm612, %v632, 0.0
    %641 = vadd.xlane.f32.xlu0 %v640
    %v642 = vpop.xlane.xlu0 %641
    %v643 = vsel %vm612, %v634, 0.0
    %644 = vadd.xlane.f32.xlu0 %v643
    %v645 = vpop.xlane.xlu0 %644
    %v646 = vsel %vm612, %v636, 0.0
    %647 = vadd.xlane.f32.xlu0 %v646
    %v648 = vpop.xlane.xlu0 %647
    %v649 = vrcp.pop %v639
    %v650 = vrcp.pop %v642
    %v651 = vrcp.pop %v645
    %v652 = vrcp.pop %v648
    %v653 = vmul.f32 %v630, %v649
    %v654 = vmul.f32 %v632, %v650
    %v655 = vmul.f32 %v634, %v651
    %v656 = vmul.f32 %v636, %v652
    %v658 = vsel %vm612, %v653, 0
    %v661 = vsel %vm612, %v654, 0
    %663 = vmatprep.subr.mxu0 0.0
    %664 = vmatpush1.msra.mxu0 0.0
    %665 = vmatprep.subr.mxu0 0.0
    %666 = vmatpush1.msra.mxu0 0.0
    %667 = vmatprep.subr.mxu0 0.0
    %668 = vmatpush1.msra.mxu0 0.0
    %669 = vmatprep.subr.mxu0 0.0
    %670 = vmatpush1.msra.mxu0 0.0
    %671 = vmatprep.subr.mxu0 0.0
    %672 = vmatpush1.msra.mxu0 0.0
    %673 = vmatprep.subr.mxu0 0.0
    %674 = vmatpush1.msra.mxu0 0.0
    %675 = vmatprep.subr.mxu0 0.0
    %676 = vmatpush1.msra.mxu0 0.0
    %677 = vmatprep.subr.mxu0 0.0
    %678 = vmatpush1.msra.mxu0 0.0
    %679 = vmatprep.subr.mxu0 0.0
    %680 = vmatpush1.msra.mxu0 0.0
    %681 = vmatprep.subr.mxu0 0.0
    %682 = vmatpush1.msra.mxu0 0.0
    %683 = vmatprep.subr.mxu0 0.0
    %684 = vmatpush1.msra.mxu0 0.0
    %685 = vmatprep.subr.mxu0 0.0
    %686 = vmatpush1.msra.mxu0 0.0
    %687 = vmatprep.subr.mxu0 0.0
    %688 = vmatpush1.msra.mxu0 0.0
    %689 = vmatprep.subr.mxu0 0.0
    %690 = vmatpush1.msra.mxu0 0.0
    %691 = vmatprep.subr.mxu0 0.0
    %692 = vmatpush1.msra.mxu0 %v424
    %693 = vmatprep.subr.mxu0 0.0
    %694 = vmatpush1.msra.mxu0 %v419
    %695 = vmatprep.subr.mxu0 0.0
    %696 = vmatpush2.msra.mxu0 0.0
    %697 = vmatprep.subr.mxu0 0.0
    %698 = vmatpush2.msra.mxu0 0.0
    %699 = vmatprep.subr.mxu0 0.0
    %700 = vmatpush2.msra.mxu0 0.0
    %701 = vmatprep.subr.mxu0 0.0
    %702 = vmatpush2.msra.mxu0 0.0
    %703 = vmatprep.subr.mxu0 0.0
    %704 = vmatpush2.msra.mxu0 0.0
    %705 = vmatprep.subr.mxu0 0.0
    %706 = vmatpush2.msra.mxu0 0.0
    %707 = vmatprep.subr.mxu0 0.0
    %708 = vmatpush2.msra.mxu0 0.0
    %709 = vmatprep.subr.mxu0 0.0
    %710 = vmatpush2.msra.mxu0 0.0
    %711 = vmatprep.subr.mxu0 0.0
    %712 = vmatpush2.msra.mxu0 0.0
    %713 = vmatprep.subr.mxu0 0.0
    %714 = vmatpush2.msra.mxu0 0.0
    %715 = vmatprep.subr.mxu0 0.0
    %716 = vmatpush2.msra.mxu0 0.0
    %717 = vmatprep.subr.mxu0 0.0
    %718 = vmatpush2.msra.mxu0 0.0
    %719 = vmatprep.subr.mxu0 0.0
    %720 = vmatpush2.msra.mxu0 0.0
    %721 = vmatprep.subr.mxu0 0.0
    %722 = vmatpush2.msra.mxu0 0.0
    %723 = vmatprep.subr.mxu0 0.0
    %724 = vmatpush2.msra.mxu0 0.0
    %725 = vmatprep.subr.mxu0 0.0
    %726 = vmatpush2.msra.mxu0 0.0
    %727 = vmatprep.mubr.f32.mxu0 0.0
    %728 = vmatmul.mubr.f32.gmra.mxu0 %v658
    %v729 = vpop.f32.mrf.mxu0
    %v730 = vadd.f32 0.0, %v729
    %v731 = vpop.f32.mrf.mxu0
    %732 = vmatprep.mubr.f32.mxu0 0.0
    %733 = vmatmul.mubr.f32.gmra.mxu0 %v661
    %v734 = vpop.f32.mrf.mxu0
    %v735 = vadd.f32 0.0, %v734
    %v736 = vpop.f32.mrf.mxu0
    %737 = vdwg.mxu0
    %v739 = vsel %vm612, %v655, 0
    %v742 = vsel %vm612, %v656, 0
    %744 = vmatprep.subr.mxu0 0.0
    %745 = vmatpush1.msra.mxu0 0.0
    %746 = vmatprep.subr.mxu0 0.0
    %747 = vmatpush1.msra.mxu0 0.0
    %748 = vmatprep.subr.mxu0 0.0
    %749 = vmatpush1.msra.mxu0 0.0
    %750 = vmatprep.subr.mxu0 0.0
    %751 = vmatpush1.msra.mxu0 0.0
    %752 = vmatprep.subr.mxu0 0.0
    %753 = vmatpush1.msra.mxu0 0.0
    %754 = vmatprep.subr.mxu0 0.0
    %755 = vmatpush1.msra.mxu0 0.0
    %756 = vmatprep.subr.mxu0 0.0
    %757 = vmatpush1.msra.mxu0 0.0
    %758 = vmatprep.subr.mxu0 0.0
    %759 = vmatpush1.msra.mxu0 0.0
    %760 = vmatprep.subr.mxu0 0.0
    %761 = vmatpush1.msra.mxu0 0.0
    %762 = vmatprep.subr.mxu0 0.0
    %763 = vmatpush1.msra.mxu0 0.0
    %764 = vmatprep.subr.mxu0 0.0
    %765 = vmatpush1.msra.mxu0 0.0
    %766 = vmatprep.subr.mxu0 0.0
    %767 = vmatpush1.msra.mxu0 0.0
    %768 = vmatprep.subr.mxu0 0.0
    %769 = vmatpush1.msra.mxu0 0.0
    %770 = vmatprep.subr.mxu0 0.0
    %771 = vmatpush1.msra.mxu0 0.0
    %772 = vmatprep.subr.mxu0 0.0
    %773 = vmatpush1.msra.mxu0 %v434
    %774 = vmatprep.subr.mxu0 0.0
    %775 = vmatpush1.msra.mxu0 %v429
    %776 = vmatprep.subr.mxu0 0.0
    %777 = vmatpush2.msra.mxu0 0.0
    %778 = vmatprep.subr.mxu0 0.0
    %779 = vmatpush2.msra.mxu0 0.0
    %780 = vmatprep.subr.mxu0 0.0
    %781 = vmatpush2.msra.mxu0 0.0
    %782 = vmatprep.subr.mxu0 0.0
    %783 = vmatpush2.msra.mxu0 0.0
    %784 = vmatprep.subr.mxu0 0.0
    %785 = vmatpush2.msra.mxu0 0.0
    %786 = vmatprep.subr.mxu0 0.0
    %787 = vmatpush2.msra.mxu0 0.0
    %788 = vmatprep.subr.mxu0 0.0
    %789 = vmatpush2.msra.mxu0 0.0
    %790 = vmatprep.subr.mxu0 0.0
    %791 = vmatpush2.msra.mxu0 0.0
    %792 = vmatprep.subr.mxu0 0.0
    %793 = vmatpush2.msra.mxu0 0.0
    %794 = vmatprep.subr.mxu0 0.0
    %795 = vmatpush2.msra.mxu0 0.0
    %796 = vmatprep.subr.mxu0 0.0
    %797 = vmatpush2.msra.mxu0 0.0
    %798 = vmatprep.subr.mxu0 0.0
    %799 = vmatpush2.msra.mxu0 0.0
    %800 = vmatprep.subr.mxu0 0.0
    %801 = vmatpush2.msra.mxu0 0.0
    %802 = vmatprep.subr.mxu0 0.0
    %803 = vmatpush2.msra.mxu0 0.0
    %804 = vmatprep.subr.mxu0 0.0
    %805 = vmatpush2.msra.mxu0 0.0
    %806 = vmatprep.subr.mxu0 0.0
    %807 = vmatpush2.msra.mxu0 0.0
    %808 = vmatprep.mubr.f32.mxu0 0.0
    %809 = vmatmul.mubr.f32.gmra.mxu0 %v739
    %v810 = vpop.f32.mrf.mxu0
    %v811 = vadd.f32 0.0, %v810
    %v812 = vpop.f32.mrf.mxu0
    %813 = vmatprep.mubr.f32.mxu0 0.0
    %814 = vmatmul.mubr.f32.gmra.mxu0 %v742
    %v815 = vpop.f32.mrf.mxu0
    %v816 = vadd.f32 0.0, %v815
    %v817 = vpop.f32.mrf.mxu0
    %818 = vdwg.mxu0
    %v819 = vld [vmem:[%s9] sm:$0xff]
    %s820 = scalar_lea.vmem %s3, 32
    %v821 = vld [vmem:[%s820] sm:$0xff]
    %v822 = vld [vmem:[%s820 + $0x8] sm:$0xff]
    %v823 = vld [vmem:[%s820 + $0x10] sm:$0xff]
    %v824 = vld [vmem:[%s820 + $0x18] sm:$0xff]
    %s825 = scalar_lea.vmem %s4, 1
    %v826 = vld [vmem:[%s825] sm:$0x1]
    %v828 = vlaneseq
    %v829 = vshrl.u32 %v828, 7
    %v830 = vsub.s32 0, %v829
    %v831 = vrot.slane %v826, %v830
    %833 = vmatprep.subr.mxu0 0.0
    %834 = vmatpush1.msra.mxu0 0.0
    %835 = vmatprep.subr.mxu0 0.0
    %836 = vmatpush1.msra.mxu0 0.0
    %837 = vmatprep.subr.mxu0 0.0
    %838 = vmatpush1.msra.mxu0 0.0
    %839 = vmatprep.subr.mxu0 0.0
    %840 = vmatpush1.msra.mxu0 0.0
    %841 = vmatprep.subr.mxu0 0.0
    %842 = vmatpush1.msra.mxu0 0.0
    %843 = vmatprep.subr.mxu0 0.0
    %844 = vmatpush1.msra.mxu0 0.0
    %845 = vmatprep.subr.mxu0 0.0
    %846 = vmatpush1.msra.mxu0 0.0
    %847 = vmatprep.subr.mxu0 0.0
    %848 = vmatpush1.msra.mxu0 0.0
    %849 = vmatprep.subr.mxu0 0.0
    %850 = vmatpush1.msra.mxu0 0.0
    %851 = vmatprep.subr.mxu0 0.0
    %852 = vmatpush1.msra.mxu0 0.0
    %853 = vmatprep.subr.mxu0 0.0
    %854 = vmatpush1.msra.mxu0 0.0
    %855 = vmatprep.subr.mxu0 0.0
    %856 = vmatpush1.msra.mxu0 0.0
    %857 = vmatprep.subr.mxu0 0.0
    %858 = vmatpush1.msra.mxu0 %v824
    %859 = vmatprep.subr.mxu0 0.0
    %860 = vmatpush1.msra.mxu0 %v823
    %861 = vmatprep.subr.mxu0 0.0
    %862 = vmatpush1.msra.mxu0 %v822
    %863 = vmatprep.subr.mxu0 0.0
    %864 = vmatpush1.msra.mxu0 %v821
    %865 = vmatprep.subr.mxu0 0.0
    %866 = vmatpush2.msra.mxu0 0.0
    %867 = vmatprep.subr.mxu0 0.0
    %868 = vmatpush2.msra.mxu0 0.0
    %869 = vmatprep.subr.mxu0 0.0
    %870 = vmatpush2.msra.mxu0 0.0
    %871 = vmatprep.subr.mxu0 0.0
    %872 = vmatpush2.msra.mxu0 0.0
    %873 = vmatprep.subr.mxu0 0.0
    %874 = vmatpush2.msra.mxu0 0.0
    %875 = vmatprep.subr.mxu0 0.0
    %876 = vmatpush2.msra.mxu0 0.0
    %877 = vmatprep.subr.mxu0 0.0
    %878 = vmatpush2.msra.mxu0 0.0
    %879 = vmatprep.subr.mxu0 0.0
    %880 = vmatpush2.msra.mxu0 0.0
    %881 = vmatprep.subr.mxu0 0.0
    %882 = vmatpush2.msra.mxu0 0.0
    %883 = vmatprep.subr.mxu0 0.0
    %884 = vmatpush2.msra.mxu0 0.0
    %885 = vmatprep.subr.mxu0 0.0
    %886 = vmatpush2.msra.mxu0 0.0
    %887 = vmatprep.subr.mxu0 0.0
    %888 = vmatpush2.msra.mxu0 0.0
    %889 = vmatprep.subr.mxu0 0.0
    %890 = vmatpush2.msra.mxu0 0.0
    %891 = vmatprep.subr.mxu0 0.0
    %892 = vmatpush2.msra.mxu0 0.0
    %893 = vmatprep.subr.mxu0 0.0
    %894 = vmatpush2.msra.mxu0 0.0
    %895 = vmatprep.subr.mxu0 0.0
    %896 = vmatpush2.msra.mxu0 0.0
    %897 = vmatprep.mubr.f32.mxu0 0.0
    %898 = vmatmul.mubr.f32.gmra.mxu0 %v149
    %v899 = vpop.f32.mrf.mxu0
    %v900 = vadd.f32 %v831, %v899
    %v901 = vpop.f32.mrf.mxu0
    %902 = vmatprep.mubr.f32.mxu0 0.0
    %903 = vmatmul.mubr.f32.gmra.mxu0 %v152
    %v904 = vpop.f32.mrf.mxu0
    %v905 = vadd.f32 %v831, %v904
    %v906 = vpop.f32.mrf.mxu0
    %907 = vmatprep.mubr.f32.mxu0 0.0
    %908 = vmatmul.mubr.f32.gmra.mxu0 %v155
    %v909 = vpop.f32.mrf.mxu0
    %v910 = vadd.f32 %v831, %v909
    %v911 = vpop.f32.mrf.mxu0
    %912 = vmatprep.mubr.f32.mxu0 0.0
    %913 = vmatmul.mubr.f32.gmra.mxu0 %v158
    %v914 = vpop.f32.mrf.mxu0
    %v915 = vadd.f32 %v831, %v914
    %v916 = vpop.f32.mrf.mxu0
    %917 = vdwg.mxu0
    %s918 = scalar_lea.vmem %s5, 32
    %v919 = vld [vmem:[%s918] sm:$0xff]
    %v920 = vld [vmem:[%s918 + $0x8] sm:$0xff]
    %v921 = vld [vmem:[%s918 + $0x10] sm:$0xff]
    %v922 = vld [vmem:[%s918 + $0x18] sm:$0xff]
    %s923 = scalar_lea.vmem %s6, 1
    %v924 = vld [vmem:[%s923] sm:$0x1]
    %v926 = vlaneseq
    %v927 = vshrl.u32 %v926, 7
    %v928 = vsub.s32 0, %v927
    %v929 = vrot.slane %v924, %v928
    %931 = vmatprep.subr.mxu0 0.0
    %932 = vmatpush1.msra.mxu0 0.0
    %933 = vmatprep.subr.mxu0 0.0
    %934 = vmatpush1.msra.mxu0 0.0
    %935 = vmatprep.subr.mxu0 0.0
    %936 = vmatpush1.msra.mxu0 0.0
    %937 = vmatprep.subr.mxu0 0.0
    %938 = vmatpush1.msra.mxu0 0.0
    %939 = vmatprep.subr.mxu0 0.0
    %940 = vmatpush1.msra.mxu0 0.0
    %941 = vmatprep.subr.mxu0 0.0
    %942 = vmatpush1.msra.mxu0 0.0
    %943 = vmatprep.subr.mxu0 0.0
    %944 = vmatpush1.msra.mxu0 0.0
    %945 = vmatprep.subr.mxu0 0.0
    %946 = vmatpush1.msra.mxu0 0.0
    %947 = vmatprep.subr.mxu0 0.0
    %948 = vmatpush1.msra.mxu0 0.0
    %949 = vmatprep.subr.mxu0 0.0
    %950 = vmatpush1.msra.mxu0 0.0
    %951 = vmatprep.subr.mxu0 0.0
    %952 = vmatpush1.msra.mxu0 0.0
    %953 = vmatprep.subr.mxu0 0.0
    %954 = vmatpush1.msra.mxu0 0.0
    %955 = vmatprep.subr.mxu0 0.0
    %956 = vmatpush1.msra.mxu0 %v922
    %957 = vmatprep.subr.mxu0 0.0
    %958 = vmatpush1.msra.mxu0 %v921
    %959 = vmatprep.subr.mxu0 0.0
    %960 = vmatpush1.msra.mxu0 %v920
    %961 = vmatprep.subr.mxu0 0.0
    %962 = vmatpush1.msra.mxu0 %v919
    %963 = vmatprep.subr.mxu0 0.0
    %964 = vmatpush2.msra.mxu0 0.0
    %965 = vmatprep.subr.mxu0 0.0
    %966 = vmatpush2.msra.mxu0 0.0
    %967 = vmatprep.subr.mxu0 0.0
    %968 = vmatpush2.msra.mxu0 0.0
    %969 = vmatprep.subr.mxu0 0.0
    %970 = vmatpush2.msra.mxu0 0.0
    %971 = vmatprep.subr.mxu0 0.0
    %972 = vmatpush2.msra.mxu0 0.0
    %973 = vmatprep.subr.mxu0 0.0
    %974 = vmatpush2.msra.mxu0 0.0
    %975 = vmatprep.subr.mxu0 0.0
    %976 = vmatpush2.msra.mxu0 0.0
    %977 = vmatprep.subr.mxu0 0.0
    %978 = vmatpush2.msra.mxu0 0.0
    %979 = vmatprep.subr.mxu0 0.0
    %980 = vmatpush2.msra.mxu0 0.0
    %981 = vmatprep.subr.mxu0 0.0
    %982 = vmatpush2.msra.mxu0 0.0
    %983 = vmatprep.subr.mxu0 0.0
    %984 = vmatpush2.msra.mxu0 0.0
    %985 = vmatprep.subr.mxu0 0.0
    %986 = vmatpush2.msra.mxu0 0.0
    %987 = vmatprep.subr.mxu0 0.0
    %988 = vmatpush2.msra.mxu0 0.0
    %989 = vmatprep.subr.mxu0 0.0
    %990 = vmatpush2.msra.mxu0 0.0
    %991 = vmatprep.subr.mxu0 0.0
    %992 = vmatpush2.msra.mxu0 0.0
    %993 = vmatprep.subr.mxu0 0.0
    %994 = vmatpush2.msra.mxu0 0.0
    %995 = vmatprep.mubr.f32.mxu0 0.0
    %996 = vmatmul.mubr.f32.gmra.mxu0 %v149
    %v997 = vpop.f32.mrf.mxu0
    %v998 = vadd.f32 %v929, %v997
    %v999 = vpop.f32.mrf.mxu0
    %1000 = vmatprep.mubr.f32.mxu0 0.0
    %1001 = vmatmul.mubr.f32.gmra.mxu0 %v152
    %v1002 = vpop.f32.mrf.mxu0
    %v1003 = vadd.f32 %v929, %v1002
    %v1004 = vpop.f32.mrf.mxu0
    %1005 = vmatprep.mubr.f32.mxu0 0.0
    %1006 = vmatmul.mubr.f32.gmra.mxu0 %v155
    %v1007 = vpop.f32.mrf.mxu0
    %v1008 = vadd.f32 %v929, %v1007
    %v1009 = vpop.f32.mrf.mxu0
    %1010 = vmatprep.mubr.f32.mxu0 0.0
    %1011 = vmatmul.mubr.f32.gmra.mxu0 %v158
    %v1012 = vpop.f32.mrf.mxu0
    %v1013 = vadd.f32 %v929, %v1012
    %v1014 = vpop.f32.mrf.mxu0
    %1015 = vdwg.mxu0
    %s1016 = scalar_lea.vmem %s7, 32
    %v1017 = vld [vmem:[%s1016] sm:$0xff]
    %v1018 = vld [vmem:[%s1016 + $0x8] sm:$0xff]
    %v1019 = vld [vmem:[%s1016 + $0x10] sm:$0xff]
    %v1020 = vld [vmem:[%s1016 + $0x18] sm:$0xff]
    %s1021 = scalar_lea.vmem %s8, 1
    %v1022 = vld [vmem:[%s1021] sm:$0x1]
    %v1024 = vlaneseq
    %v1025 = vshrl.u32 %v1024, 7
    %v1026 = vsub.s32 0, %v1025
    %v1027 = vrot.slane %v1022, %v1026
    %1029 = vmatprep.subr.mxu0 0.0
    %1030 = vmatpush1.msra.mxu0 0.0
    %1031 = vmatprep.subr.mxu0 0.0
    %1032 = vmatpush1.msra.mxu0 0.0
    %1033 = vmatprep.subr.mxu0 0.0
    %1034 = vmatpush1.msra.mxu0 0.0
    %1035 = vmatprep.subr.mxu0 0.0
    %1036 = vmatpush1.msra.mxu0 0.0
    %1037 = vmatprep.subr.mxu0 0.0
    %1038 = vmatpush1.msra.mxu0 0.0
    %1039 = vmatprep.subr.mxu0 0.0
    %1040 = vmatpush1.msra.mxu0 0.0
    %1041 = vmatprep.subr.mxu0 0.0
    %1042 = vmatpush1.msra.mxu0 0.0
    %1043 = vmatprep.subr.mxu0 0.0
    %1044 = vmatpush1.msra.mxu0 0.0
    %1045 = vmatprep.subr.mxu0 0.0
    %1046 = vmatpush1.msra.mxu0 0.0
    %1047 = vmatprep.subr.mxu0 0.0
    %1048 = vmatpush1.msra.mxu0 0.0
    %1049 = vmatprep.subr.mxu0 0.0
    %1050 = vmatpush1.msra.mxu0 0.0
    %1051 = vmatprep.subr.mxu0 0.0
    %1052 = vmatpush1.msra.mxu0 0.0
    %1053 = vmatprep.subr.mxu0 0.0
    %1054 = vmatpush1.msra.mxu0 %v1020
    %1055 = vmatprep.subr.mxu0 0.0
    %1056 = vmatpush1.msra.mxu0 %v1019
    %1057 = vmatprep.subr.mxu0 0.0
    %1058 = vmatpush1.msra.mxu0 %v1018
    %1059 = vmatprep.subr.mxu0 0.0
    %1060 = vmatpush1.msra.mxu0 %v1017
    %1061 = vmatprep.subr.mxu0 0.0
    %1062 = vmatpush2.msra.mxu0 0.0
    %1063 = vmatprep.subr.mxu0 0.0
    %1064 = vmatpush2.msra.mxu0 0.0
    %1065 = vmatprep.subr.mxu0 0.0
    %1066 = vmatpush2.msra.mxu0 0.0
    %1067 = vmatprep.subr.mxu0 0.0
    %1068 = vmatpush2.msra.mxu0 0.0
    %1069 = vmatprep.subr.mxu0 0.0
    %1070 = vmatpush2.msra.mxu0 0.0
    %1071 = vmatprep.subr.mxu0 0.0
    %1072 = vmatpush2.msra.mxu0 0.0
    %1073 = vmatprep.subr.mxu0 0.0
    %1074 = vmatpush2.msra.mxu0 0.0
    %1075 = vmatprep.subr.mxu0 0.0
    %1076 = vmatpush2.msra.mxu0 0.0
    %1077 = vmatprep.subr.mxu0 0.0
    %1078 = vmatpush2.msra.mxu0 0.0
    %1079 = vmatprep.subr.mxu0 0.0
    %1080 = vmatpush2.msra.mxu0 0.0
    %1081 = vmatprep.subr.mxu0 0.0
    %1082 = vmatpush2.msra.mxu0 0.0
    %1083 = vmatprep.subr.mxu0 0.0
    %1084 = vmatpush2.msra.mxu0 0.0
    %1085 = vmatprep.subr.mxu0 0.0
    %1086 = vmatpush2.msra.mxu0 0.0
    %1087 = vmatprep.subr.mxu0 0.0
    %1088 = vmatpush2.msra.mxu0 0.0
    %1089 = vmatprep.subr.mxu0 0.0
    %1090 = vmatpush2.msra.mxu0 0.0
    %1091 = vmatprep.subr.mxu0 0.0
    %1092 = vmatpush2.msra.mxu0 0.0
    %1093 = vmatprep.mubr.f32.mxu0 0.0
    %1094 = vmatmul.mubr.f32.gmra.mxu0 %v149
    %v1095 = vpop.f32.mrf.mxu0
    %v1096 = vadd.f32 %v1027, %v1095
    %v1097 = vpop.f32.mrf.mxu0
    %1098 = vmatprep.mubr.f32.mxu0 0.0
    %1099 = vmatmul.mubr.f32.gmra.mxu0 %v152
    %v1100 = vpop.f32.mrf.mxu0
    %v1101 = vadd.f32 %v1027, %v1100
    %v1102 = vpop.f32.mrf.mxu0
    %1103 = vmatprep.mubr.f32.mxu0 0.0
    %1104 = vmatmul.mubr.f32.gmra.mxu0 %v155
    %v1105 = vpop.f32.mrf.mxu0
    %v1106 = vadd.f32 %v1027, %v1105
    %v1107 = vpop.f32.mrf.mxu0
    %1108 = vmatprep.mubr.f32.mxu0 0.0
    %1109 = vmatmul.mubr.f32.gmra.mxu0 %v158
    %v1110 = vpop.f32.mrf.mxu0
    %v1111 = vadd.f32 %v1027, %v1110
    %v1112 = vpop.f32.mrf.mxu0
    %1113 = vdwg.mxu0
    %v1115 = vsel %vm437, %v900, 0
    %v1118 = vsel %vm437, %v905, 0
    %v1121 = vsel %vm437, %v998, 0
    %v1124 = vsel %vm437, %v1003, 0
    %1126 = vmatprep.subr.mxu0 0.0
    %1127 = vmatpush1.xpose.msra.mxu0 0.0
    %1128 = vmatprep.subr.mxu0 0.0
    %1129 = vmatpush1.xpose.msra.mxu0 0.0
    %1130 = vmatprep.subr.mxu0 0.0
    %1131 = vmatpush1.xpose.msra.mxu0 0.0
    %1132 = vmatprep.subr.mxu0 0.0
    %1133 = vmatpush1.xpose.msra.mxu0 0.0
    %1134 = vmatprep.subr.mxu0 0.0
    %1135 = vmatpush1.xpose.msra.mxu0 0.0
    %1136 = vmatprep.subr.mxu0 0.0
    %1137 = vmatpush1.xpose.msra.mxu0 0.0
    %1138 = vmatprep.subr.mxu0 0.0
    %1139 = vmatpush1.xpose.msra.mxu0 0.0
    %1140 = vmatprep.subr.mxu0 0.0
    %1141 = vmatpush1.xpose.msra.mxu0 0.0
    %1142 = vmatprep.subr.mxu0 0.0
    %1143 = vmatpush1.xpose.msra.mxu0 0.0
    %1144 = vmatprep.subr.mxu0 0.0
    %1145 = vmatpush1.xpose.msra.mxu0 0.0
    %1146 = vmatprep.subr.mxu0 0.0
    %1147 = vmatpush1.xpose.msra.mxu0 0.0
    %1148 = vmatprep.subr.mxu0 0.0
    %1149 = vmatpush1.xpose.msra.mxu0 0.0
    %1150 = vmatprep.subr.mxu0 0.0
    %1151 = vmatpush1.xpose.msra.mxu0 0.0
    %1152 = vmatprep.subr.mxu0 0.0
    %1153 = vmatpush1.xpose.msra.mxu0 0.0
    %1154 = vmatprep.subr.mxu0 0.0
    %1155 = vmatpush1.xpose.msra.mxu0 %v1124
    %1156 = vmatprep.subr.mxu0 0.0
    %1157 = vmatpush1.xpose.msra.mxu0 %v1121
    %1158 = vmatprep.subr.mxu0 0.0
    %1159 = vmatpush2.xpose.msra.mxu0 0.0
    %1160 = vmatprep.subr.mxu0 0.0
    %1161 = vmatpush2.xpose.msra.mxu0 0.0
    %1162 = vmatprep.subr.mxu0 0.0
    %1163 = vmatpush2.xpose.msra.mxu0 0.0
    %1164 = vmatprep.subr.mxu0 0.0
    %1165 = vmatpush2.xpose.msra.mxu0 0.0
    %1166 = vmatprep.subr.mxu0 0.0
    %1167 = vmatpush2.xpose.msra.mxu0 0.0
    %1168 = vmatprep.subr.mxu0 0.0
    %1169 = vmatpush2.xpose.msra.mxu0 0.0
    %1170 = vmatprep.subr.mxu0 0.0
    %1171 = vmatpush2.xpose.msra.mxu0 0.0
    %1172 = vmatprep.subr.mxu0 0.0
    %1173 = vmatpush2.xpose.msra.mxu0 0.0
    %1174 = vmatprep.subr.mxu0 0.0
    %1175 = vmatpush2.xpose.msra.mxu0 0.0
    %1176 = vmatprep.subr.mxu0 0.0
    %1177 = vmatpush2.xpose.msra.mxu0 0.0
    %1178 = vmatprep.subr.mxu0 0.0
    %1179 = vmatpush2.xpose.msra.mxu0 0.0
    %1180 = vmatprep.subr.mxu0 0.0
    %1181 = vmatpush2.xpose.msra.mxu0 0.0
    %1182 = vmatprep.subr.mxu0 0.0
    %1183 = vmatpush2.xpose.msra.mxu0 0.0
    %1184 = vmatprep.subr.mxu0 0.0
    %1185 = vmatpush2.xpose.msra.mxu0 0.0
    %1186 = vmatprep.subr.mxu0 0.0
    %1187 = vmatpush2.xpose.msra.mxu0 0.0
    %1188 = vmatprep.subr.mxu0 0.0
    %1189 = vmatpush2.xpose.msra.mxu0 0.0
    %1190 = vmatprep.mubr.f32.mxu0 0.0
    %1191 = vmatmul.mubr.f32.gmra.mxu0 %v1115
    %v1192 = vpop.f32.mrf.mxu0
    %v1193 = vadd.f32 0.0, %v1192
    %v1194 = vpop.f32.mrf.mxu0
    %1195 = vmatprep.mubr.f32.mxu0 0.0
    %1196 = vmatmul.mubr.f32.gmra.mxu0 %v1118
    %v1197 = vpop.f32.mrf.mxu0
    %v1198 = vadd.f32 0.0, %v1197
    %v1199 = vpop.f32.mrf.mxu0
    %1200 = vdwg.mxu0
    %v1202 = vsel %vm437, %v910, 0
    %v1205 = vsel %vm437, %v915, 0
    %v1208 = vsel %vm437, %v1008, 0
    %v1211 = vsel %vm437, %v1013, 0
    %1213 = vmatprep.subr.mxu0 0.0
    %1214 = vmatpush1.xpose.msra.mxu0 0.0
    %1215 = vmatprep.subr.mxu0 0.0
    %1216 = vmatpush1.xpose.msra.mxu0 0.0
    %1217 = vmatprep.subr.mxu0 0.0
    %1218 = vmatpush1.xpose.msra.mxu0 0.0
    %1219 = vmatprep.subr.mxu0 0.0
    %1220 = vmatpush1.xpose.msra.mxu0 0.0
    %1221 = vmatprep.subr.mxu0 0.0
    %1222 = vmatpush1.xpose.msra.mxu0 0.0
    %1223 = vmatprep.subr.mxu0 0.0
    %1224 = vmatpush1.xpose.msra.mxu0 0.0
    %1225 = vmatprep.subr.mxu0 0.0
    %1226 = vmatpush1.xpose.msra.mxu0 0.0
    %1227 = vmatprep.subr.mxu0 0.0
    %1228 = vmatpush1.xpose.msra.mxu0 0.0
    %1229 = vmatprep.subr.mxu0 0.0
    %1230 = vmatpush1.xpose.msra.mxu0 0.0
    %1231 = vmatprep.subr.mxu0 0.0
    %1232 = vmatpush1.xpose.msra.mxu0 0.0
    %1233 = vmatprep.subr.mxu0 0.0
    %1234 = vmatpush1.xpose.msra.mxu0 0.0
    %1235 = vmatprep.subr.mxu0 0.0
    %1236 = vmatpush1.xpose.msra.mxu0 0.0
    %1237 = vmatprep.subr.mxu0 0.0
    %1238 = vmatpush1.xpose.msra.mxu0 0.0
    %1239 = vmatprep.subr.mxu0 0.0
    %1240 = vmatpush1.xpose.msra.mxu0 0.0
    %1241 = vmatprep.subr.mxu0 0.0
    %1242 = vmatpush1.xpose.msra.mxu0 %v1211
    %1243 = vmatprep.subr.mxu0 0.0
    %1244 = vmatpush1.xpose.msra.mxu0 %v1208
    %1245 = vmatprep.subr.mxu0 0.0
    %1246 = vmatpush2.xpose.msra.mxu0 0.0
    %1247 = vmatprep.subr.mxu0 0.0
    %1248 = vmatpush2.xpose.msra.mxu0 0.0
    %1249 = vmatprep.subr.mxu0 0.0
    %1250 = vmatpush2.xpose.msra.mxu0 0.0
    %1251 = vmatprep.subr.mxu0 0.0
    %1252 = vmatpush2.xpose.msra.mxu0 0.0
    %1253 = vmatprep.subr.mxu0 0.0
    %1254 = vmatpush2.xpose.msra.mxu0 0.0
    %1255 = vmatprep.subr.mxu0 0.0
    %1256 = vmatpush2.xpose.msra.mxu0 0.0
    %1257 = vmatprep.subr.mxu0 0.0
    %1258 = vmatpush2.xpose.msra.mxu0 0.0
    %1259 = vmatprep.subr.mxu0 0.0
    %1260 = vmatpush2.xpose.msra.mxu0 0.0
    %1261 = vmatprep.subr.mxu0 0.0
    %1262 = vmatpush2.xpose.msra.mxu0 0.0
    %1263 = vmatprep.subr.mxu0 0.0
    %1264 = vmatpush2.xpose.msra.mxu0 0.0
    %1265 = vmatprep.subr.mxu0 0.0
    %1266 = vmatpush2.xpose.msra.mxu0 0.0
    %1267 = vmatprep.subr.mxu0 0.0
    %1268 = vmatpush2.xpose.msra.mxu0 0.0
    %1269 = vmatprep.subr.mxu0 0.0
    %1270 = vmatpush2.xpose.msra.mxu0 0.0
    %1271 = vmatprep.subr.mxu0 0.0
    %1272 = vmatpush2.xpose.msra.mxu0 0.0
    %1273 = vmatprep.subr.mxu0 0.0
    %1274 = vmatpush2.xpose.msra.mxu0 0.0
    %1275 = vmatprep.subr.mxu0 0.0
    %1276 = vmatpush2.xpose.msra.mxu0 0.0
    %1277 = vmatprep.mubr.f32.mxu0 0.0
    %1278 = vmatmul.mubr.f32.gmra.mxu0 %v1202
    %v1279 = vpop.f32.mrf.mxu0
    %v1280 = vadd.f32 0.0, %v1279
    %v1281 = vpop.f32.mrf.mxu0
    %1282 = vmatprep.mubr.f32.mxu0 0.0
    %1283 = vmatmul.mubr.f32.gmra.mxu0 %v1205
    %v1284 = vpop.f32.mrf.mxu0
    %v1285 = vadd.f32 0.0, %v1284
    %v1286 = vpop.f32.mrf.mxu0
    %1287 = vdwg.mxu0
    %v1288 = vsel %vm612, %v1193, -inf
    %1289 = vmax.xlane.f32.xlu0 %v1288
    %v1290 = vpop.xlane.xlu0 %1289
    %v1291 = vsel %vm612, %v1198, -inf
    %1292 = vmax.xlane.f32.xlu0 %v1291
    %v1293 = vpop.xlane.xlu0 %1292
    %v1294 = vsel %vm612, %v1280, -inf
    %1295 = vmax.xlane.f32.xlu0 %v1294
    %v1296 = vpop.xlane.xlu0 %1295
    %v1297 = vsel %vm612, %v1285, -inf
    %1298 = vmax.xlane.f32.xlu0 %v1297
    %v1299 = vpop.xlane.xlu0 %1298
    %v1300 = vsub.f32 %v1193, %v1290
    %v1301 = vsub.f32 %v1198, %v1293
    %v1302 = vsub.f32 %v1280, %v1296
    %v1303 = vsub.f32 %v1285, %v1299
    %v1304 = vmul.f32 %v1300, 1.442695
    %v1305 = vpow.pop %v1304
    %v1306 = vmul.f32 %v1301, 1.442695
    %v1307 = vpow.pop %v1306
    %v1308 = vmul.f32 %v1302, 1.442695
    %v1309 = vpow.pop %v1308
    %v1310 = vmul.f32 %v1303, 1.442695
    %v1311 = vpow.pop %v1310
    %v1312 = vsel %vm612, %v1305, 0.0
    %1313 = vadd.xlane.f32.xlu0 %v1312
    %v1314 = vpop.xlane.xlu0 %1313
    %v1315 = vsel %vm612, %v1307, 0.0
    %1316 = vadd.xlane.f32.xlu0 %v1315
    %v1317 = vpop.xlane.xlu0 %1316
    %v1318 = vsel %vm612, %v1309, 0.0
    %1319 = vadd.xlane.f32.xlu0 %v1318
    %v1320 = vpop.xlane.xlu0 %1319
    %v1321 = vsel %vm612, %v1311, 0.0
    %1322 = vadd.xlane.f32.xlu0 %v1321
    %v1323 = vpop.xlane.xlu0 %1322
    %v1324 = vrcp.pop %v1314
    %v1325 = vrcp.pop %v1317
    %v1326 = vrcp.pop %v1320
    %v1327 = vrcp.pop %v1323
    %v1328 = vmul.f32 %v1305, %v1324
    %v1329 = vmul.f32 %v1307, %v1325
    %v1330 = vmul.f32 %v1309, %v1326
    %v1331 = vmul.f32 %v1311, %v1327
    %v1333 = vsel %vm612, %v1328, 0
    %v1336 = vsel %vm612, %v1329, 0
    %1338 = vmatprep.subr.mxu0 0.0
    %1339 = vmatpush1.msra.mxu0 0.0
    %1340 = vmatprep.subr.mxu0 0.0
    %1341 = vmatpush1.msra.mxu0 0.0
    %1342 = vmatprep.subr.mxu0 0.0
    %1343 = vmatpush1.msra.mxu0 0.0
    %1344 = vmatprep.subr.mxu0 0.0
    %1345 = vmatpush1.msra.mxu0 0.0
    %1346 = vmatprep.subr.mxu0 0.0
    %1347 = vmatpush1.msra.mxu0 0.0
    %1348 = vmatprep.subr.mxu0 0.0
    %1349 = vmatpush1.msra.mxu0 0.0
    %1350 = vmatprep.subr.mxu0 0.0
    %1351 = vmatpush1.msra.mxu0 0.0
    %1352 = vmatprep.subr.mxu0 0.0
    %1353 = vmatpush1.msra.mxu0 0.0
    %1354 = vmatprep.subr.mxu0 0.0
    %1355 = vmatpush1.msra.mxu0 0.0
    %1356 = vmatprep.subr.mxu0 0.0
    %1357 = vmatpush1.msra.mxu0 0.0
    %1358 = vmatprep.subr.mxu0 0.0
    %1359 = vmatpush1.msra.mxu0 0.0
    %1360 = vmatprep.subr.mxu0 0.0
    %1361 = vmatpush1.msra.mxu0 0.0
    %1362 = vmatprep.subr.mxu0 0.0
    %1363 = vmatpush1.msra.mxu0 0.0
    %1364 = vmatprep.subr.mxu0 0.0
    %1365 = vmatpush1.msra.mxu0 0.0
    %1366 = vmatprep.subr.mxu0 0.0
    %1367 = vmatpush1.msra.mxu0 %v1101
    %1368 = vmatprep.subr.mxu0 0.0
    %1369 = vmatpush1.msra.mxu0 %v1096
    %1370 = vmatprep.subr.mxu0 0.0
    %1371 = vmatpush2.msra.mxu0 0.0
    %1372 = vmatprep.subr.mxu0 0.0
    %1373 = vmatpush2.msra.mxu0 0.0
    %1374 = vmatprep.subr.mxu0 0.0
    %1375 = vmatpush2.msra.mxu0 0.0
    %1376 = vmatprep.subr.mxu0 0.0
    %1377 = vmatpush2.msra.mxu0 0.0
    %1378 = vmatprep.subr.mxu0 0.0
    %1379 = vmatpush2.msra.mxu0 0.0
    %1380 = vmatprep.subr.mxu0 0.0
    %1381 = vmatpush2.msra.mxu0 0.0
    %1382 = vmatprep.subr.mxu0 0.0
    %1383 = vmatpush2.msra.mxu0 0.0
    %1384 = vmatprep.subr.mxu0 0.0
    %1385 = vmatpush2.msra.mxu0 0.0
    %1386 = vmatprep.subr.mxu0 0.0
    %1387 = vmatpush2.msra.mxu0 0.0
    %1388 = vmatprep.subr.mxu0 0.0
    %1389 = vmatpush2.msra.mxu0 0.0
    %1390 = vmatprep.subr.mxu0 0.0
    %1391 = vmatpush2.msra.mxu0 0.0
    %1392 = vmatprep.subr.mxu0 0.0
    %1393 = vmatpush2.msra.mxu0 0.0
    %1394 = vmatprep.subr.mxu0 0.0
    %1395 = vmatpush2.msra.mxu0 0.0
    %1396 = vmatprep.subr.mxu0 0.0
    %1397 = vmatpush2.msra.mxu0 0.0
    %1398 = vmatprep.subr.mxu0 0.0
    %1399 = vmatpush2.msra.mxu0 0.0
    %1400 = vmatprep.subr.mxu0 0.0
    %1401 = vmatpush2.msra.mxu0 0.0
    %1402 = vmatprep.mubr.f32.mxu0 0.0
    %1403 = vmatmul.mubr.f32.gmra.mxu0 %v1333
    %v1404 = vpop.f32.mrf.mxu0
    %v1405 = vadd.f32 0.0, %v1404
    %v1406 = vpop.f32.mrf.mxu0
    %1407 = vmatprep.mubr.f32.mxu0 0.0
    %1408 = vmatmul.mubr.f32.gmra.mxu0 %v1336
    %v1409 = vpop.f32.mrf.mxu0
    %v1410 = vadd.f32 0.0, %v1409
    %v1411 = vpop.f32.mrf.mxu0
    %1412 = vdwg.mxu0
    %v1414 = vsel %vm612, %v1330, 0
    %v1417 = vsel %vm612, %v1331, 0
    %1419 = vmatprep.subr.mxu0 0.0
    %1420 = vmatpush1.msra.mxu0 0.0
    %1421 = vmatprep.subr.mxu0 0.0
    %1422 = vmatpush1.msra.mxu0 0.0
    %1423 = vmatprep.subr.mxu0 0.0
    %1424 = vmatpush1.msra.mxu0 0.0
    %1425 = vmatprep.subr.mxu0 0.0
    %1426 = vmatpush1.msra.mxu0 0.0
    %1427 = vmatprep.subr.mxu0 0.0
    %1428 = vmatpush1.msra.mxu0 0.0
    %1429 = vmatprep.subr.mxu0 0.0
    %1430 = vmatpush1.msra.mxu0 0.0
    %1431 = vmatprep.subr.mxu0 0.0
    %1432 = vmatpush1.msra.mxu0 0.0
    %1433 = vmatprep.subr.mxu0 0.0
    %1434 = vmatpush1.msra.mxu0 0.0
    %1435 = vmatprep.subr.mxu0 0.0
    %1436 = vmatpush1.msra.mxu0 0.0
    %1437 = vmatprep.subr.mxu0 0.0
    %1438 = vmatpush1.msra.mxu0 0.0
    %1439 = vmatprep.subr.mxu0 0.0
    %1440 = vmatpush1.msra.mxu0 0.0
    %1441 = vmatprep.subr.mxu0 0.0
    %1442 = vmatpush1.msra.mxu0 0.0
    %1443 = vmatprep.subr.mxu0 0.0
    %1444 = vmatpush1.msra.mxu0 0.0
    %1445 = vmatprep.subr.mxu0 0.0
    %1446 = vmatpush1.msra.mxu0 0.0
    %1447 = vmatprep.subr.mxu0 0.0
    %1448 = vmatpush1.msra.mxu0 %v1111
    %1449 = vmatprep.subr.mxu0 0.0
    %1450 = vmatpush1.msra.mxu0 %v1106
    %1451 = vmatprep.subr.mxu0 0.0
    %1452 = vmatpush2.msra.mxu0 0.0
    %1453 = vmatprep.subr.mxu0 0.0
    %1454 = vmatpush2.msra.mxu0 0.0
    %1455 = vmatprep.subr.mxu0 0.0
    %1456 = vmatpush2.msra.mxu0 0.0
    %1457 = vmatprep.subr.mxu0 0.0
    %1458 = vmatpush2.msra.mxu0 0.0
    %1459 = vmatprep.subr.mxu0 0.0
    %1460 = vmatpush2.msra.mxu0 0.0
    %1461 = vmatprep.subr.mxu0 0.0
    %1462 = vmatpush2.msra.mxu0 0.0
    %1463 = vmatprep.subr.mxu0 0.0
    %1464 = vmatpush2.msra.mxu0 0.0
    %1465 = vmatprep.subr.mxu0 0.0
    %1466 = vmatpush2.msra.mxu0 0.0
    %1467 = vmatprep.subr.mxu0 0.0
    %1468 = vmatpush2.msra.mxu0 0.0
    %1469 = vmatprep.subr.mxu0 0.0
    %1470 = vmatpush2.msra.mxu0 0.0
    %1471 = vmatprep.subr.mxu0 0.0
    %1472 = vmatpush2.msra.mxu0 0.0
    %1473 = vmatprep.subr.mxu0 0.0
    %1474 = vmatpush2.msra.mxu0 0.0
    %1475 = vmatprep.subr.mxu0 0.0
    %1476 = vmatpush2.msra.mxu0 0.0
    %1477 = vmatprep.subr.mxu0 0.0
    %1478 = vmatpush2.msra.mxu0 0.0
    %1479 = vmatprep.subr.mxu0 0.0
    %1480 = vmatpush2.msra.mxu0 0.0
    %1481 = vmatprep.subr.mxu0 0.0
    %1482 = vmatpush2.msra.mxu0 0.0
    %1483 = vmatprep.mubr.f32.mxu0 0.0
    %1484 = vmatmul.mubr.f32.gmra.mxu0 %v1414
    %v1485 = vpop.f32.mrf.mxu0
    %v1486 = vadd.f32 0.0, %v1485
    %v1487 = vpop.f32.mrf.mxu0
    %1488 = vmatprep.mubr.f32.mxu0 0.0
    %1489 = vmatmul.mubr.f32.gmra.mxu0 %v1417
    %v1490 = vpop.f32.mrf.mxu0
    %v1491 = vadd.f32 0.0, %v1490
    %v1492 = vpop.f32.mrf.mxu0
    %1493 = vdwg.mxu0
    %s1494 = scalar_lea.vmem %s9, 8
    %v1495 = vld [vmem:[%s1494] sm:$0xff]
    %v1497 = vsel %vm437, %v1405, 0
    %v1500 = vsel %vm437, %v1410, 0
    %v1503 = vsel %vm437, %v1486, 0
    %v1506 = vsel %vm437, %v1491, 0
    %1508 = vmatprep.subr.mxu0 0.0
    %1509 = vmatpush1.msra.mxu0 0.0
    %1510 = vmatprep.subr.mxu0 0.0
    %1511 = vmatpush1.msra.mxu0 0.0
    %1512 = vmatprep.subr.mxu0 0.0
    %1513 = vmatpush1.msra.mxu0 0.0
    %1514 = vmatprep.subr.mxu0 0.0
    %1515 = vmatpush1.msra.mxu0 0.0
    %1516 = vmatprep.subr.mxu0 0.0
    %1517 = vmatpush1.msra.mxu0 0.0
    %1518 = vmatprep.subr.mxu0 0.0
    %1519 = vmatpush1.msra.mxu0 0.0
    %1520 = vmatprep.subr.mxu0 0.0
    %1521 = vmatpush1.msra.mxu0 0.0
    %1522 = vmatprep.subr.mxu0 0.0
    %1523 = vmatpush1.msra.mxu0 0.0
    %1524 = vmatprep.subr.mxu0 0.0
    %1525 = vmatpush1.msra.mxu0 0.0
    %1526 = vmatprep.subr.mxu0 0.0
    %1527 = vmatpush1.msra.mxu0 0.0
    %1528 = vmatprep.subr.mxu0 0.0
    %1529 = vmatpush1.msra.mxu0 0.0
    %1530 = vmatprep.subr.mxu0 0.0
    %1531 = vmatpush1.msra.mxu0 0.0
    %1532 = vmatprep.subr.mxu0 0.0
    %1533 = vmatpush1.msra.mxu0 0.0
    %1534 = vmatprep.subr.mxu0 0.0
    %1535 = vmatpush1.msra.mxu0 0.0
    %1536 = vmatprep.subr.mxu0 0.0
    %1537 = vmatpush1.msra.mxu0 0.0
    %1538 = vmatprep.subr.mxu0 0.0
    %1539 = vmatpush1.msra.mxu0 %v1495
    %1540 = vmatprep.subr.mxu0 0.0
    %1541 = vmatpush2.msra.mxu0 0.0
    %1542 = vmatprep.subr.mxu0 0.0
    %1543 = vmatpush2.msra.mxu0 0.0
    %1544 = vmatprep.subr.mxu0 0.0
    %1545 = vmatpush2.msra.mxu0 0.0
    %1546 = vmatprep.subr.mxu0 0.0
    %1547 = vmatpush2.msra.mxu0 0.0
    %1548 = vmatprep.subr.mxu0 0.0
    %1549 = vmatpush2.msra.mxu0 0.0
    %1550 = vmatprep.subr.mxu0 0.0
    %1551 = vmatpush2.msra.mxu0 0.0
    %1552 = vmatprep.subr.mxu0 0.0
    %1553 = vmatpush2.msra.mxu0 0.0
    %1554 = vmatprep.subr.mxu0 0.0
    %1555 = vmatpush2.msra.mxu0 0.0
    %1556 = vmatprep.subr.mxu0 0.0
    %1557 = vmatpush2.msra.mxu0 0.0
    %1558 = vmatprep.subr.mxu0 0.0
    %1559 = vmatpush2.msra.mxu0 0.0
    %1560 = vmatprep.subr.mxu0 0.0
    %1561 = vmatpush2.msra.mxu0 0.0
    %1562 = vmatprep.subr.mxu0 0.0
    %1563 = vmatpush2.msra.mxu0 0.0
    %1564 = vmatprep.subr.mxu0 0.0
    %1565 = vmatpush2.msra.mxu0 0.0
    %1566 = vmatprep.subr.mxu0 0.0
    %1567 = vmatpush2.msra.mxu0 0.0
    %1568 = vmatprep.subr.mxu0 0.0
    %1569 = vmatpush2.msra.mxu0 0.0
    %1570 = vmatprep.subr.mxu0 0.0
    %1571 = vmatpush2.msra.mxu0 0.0
    %1572 = vmatprep.mubr.f32.mxu0 0.0
    %1573 = vmatmul.mubr.f32.gmra.mxu0 %v1497
    %v1574 = vpop.f32.mrf.mxu0
    %v1575 = vadd.f32 0.0, %v1574
    %v1576 = vpop.f32.mrf.mxu0
    %1577 = vmatprep.mubr.f32.mxu0 0.0
    %1578 = vmatmul.mubr.f32.gmra.mxu0 %v1500
    %v1579 = vpop.f32.mrf.mxu0
    %v1580 = vadd.f32 0.0, %v1579
    %v1581 = vpop.f32.mrf.mxu0
    %1582 = vmatprep.mubr.f32.mxu0 0.0
    %1583 = vmatmul.mubr.f32.gmra.mxu0 %v1503
    %v1584 = vpop.f32.mrf.mxu0
    %v1585 = vadd.f32 0.0, %v1584
    %v1586 = vpop.f32.mrf.mxu0
    %1587 = vmatprep.mubr.f32.mxu0 0.0
    %1588 = vmatmul.mubr.f32.gmra.mxu0 %v1506
    %v1589 = vpop.f32.mrf.mxu0
    %v1590 = vadd.f32 0.0, %v1589
    %v1591 = vpop.f32.mrf.mxu0
    %1592 = vdwg.mxu0
    %v1594 = vsel %vm437, %v730, 0
    %v1597 = vsel %vm437, %v735, 0
    %v1600 = vsel %vm437, %v811, 0
    %v1603 = vsel %vm437, %v816, 0
    %1605 = vmatprep.subr.mxu0 0.0
    %1606 = vmatpush1.msra.mxu0 0.0
    %1607 = vmatprep.subr.mxu0 0.0
    %1608 = vmatpush1.msra.mxu0 0.0
    %1609 = vmatprep.subr.mxu0 0.0
    %1610 = vmatpush1.msra.mxu0 0.0
    %1611 = vmatprep.subr.mxu0 0.0
    %1612 = vmatpush1.msra.mxu0 0.0
    %1613 = vmatprep.subr.mxu0 0.0
    %1614 = vmatpush1.msra.mxu0 0.0
    %1615 = vmatprep.subr.mxu0 0.0
    %1616 = vmatpush1.msra.mxu0 0.0
    %1617 = vmatprep.subr.mxu0 0.0
    %1618 = vmatpush1.msra.mxu0 0.0
    %1619 = vmatprep.subr.mxu0 0.0
    %1620 = vmatpush1.msra.mxu0 0.0
    %1621 = vmatprep.subr.mxu0 0.0
    %1622 = vmatpush1.msra.mxu0 0.0
    %1623 = vmatprep.subr.mxu0 0.0
    %1624 = vmatpush1.msra.mxu0 0.0
    %1625 = vmatprep.subr.mxu0 0.0
    %1626 = vmatpush1.msra.mxu0 0.0
    %1627 = vmatprep.subr.mxu0 0.0
    %1628 = vmatpush1.msra.mxu0 0.0
    %1629 = vmatprep.subr.mxu0 0.0
    %1630 = vmatpush1.msra.mxu0 0.0
    %1631 = vmatprep.subr.mxu0 0.0
    %1632 = vmatpush1.msra.mxu0 0.0
    %1633 = vmatprep.subr.mxu0 0.0
    %1634 = vmatpush1.msra.mxu0 0.0
    %1635 = vmatprep.subr.mxu0 0.0
    %1636 = vmatpush1.msra.mxu0 %v819
    %1637 = vmatprep.subr.mxu0 0.0
    %1638 = vmatpush2.msra.mxu0 0.0
    %1639 = vmatprep.subr.mxu0 0.0
    %1640 = vmatpush2.msra.mxu0 0.0
    %1641 = vmatprep.subr.mxu0 0.0
    %1642 = vmatpush2.msra.mxu0 0.0
    %1643 = vmatprep.subr.mxu0 0.0
    %1644 = vmatpush2.msra.mxu0 0.0
    %1645 = vmatprep.subr.mxu0 0.0
    %1646 = vmatpush2.msra.mxu0 0.0
    %1647 = vmatprep.subr.mxu0 0.0
    %1648 = vmatpush2.msra.mxu0 0.0
    %1649 = vmatprep.subr.mxu0 0.0
    %1650 = vmatpush2.msra.mxu0 0.0
    %1651 = vmatprep.subr.mxu0 0.0
    %1652 = vmatpush2.msra.mxu0 0.0
    %1653 = vmatprep.subr.mxu0 0.0
    %1654 = vmatpush2.msra.mxu0 0.0
    %1655 = vmatprep.subr.mxu0 0.0
    %1656 = vmatpush2.msra.mxu0 0.0
    %1657 = vmatprep.subr.mxu0 0.0
    %1658 = vmatpush2.msra.mxu0 0.0
    %1659 = vmatprep.subr.mxu0 0.0
    %1660 = vmatpush2.msra.mxu0 0.0
    %1661 = vmatprep.subr.mxu0 0.0
    %1662 = vmatpush2.msra.mxu0 0.0
    %1663 = vmatprep.subr.mxu0 0.0
    %1664 = vmatpush2.msra.mxu0 0.0
    %1665 = vmatprep.subr.mxu0 0.0
    %1666 = vmatpush2.msra.mxu0 0.0
    %1667 = vmatprep.subr.mxu0 0.0
    %1668 = vmatpush2.msra.mxu0 0.0
    %1669 = vmatprep.mubr.f32.mxu0 0.0
    %1670 = vmatmul.mubr.f32.gmra.mxu0 %v1594
    %v1671 = vpop.f32.mrf.mxu0
    %v1672 = vadd.f32 %v1575, %v1671
    %v1673 = vpop.f32.mrf.mxu0
    %1674 = vmatprep.mubr.f32.mxu0 0.0
    %1675 = vmatmul.mubr.f32.gmra.mxu0 %v1597
    %v1676 = vpop.f32.mrf.mxu0
    %v1677 = vadd.f32 %v1580, %v1676
    %v1678 = vpop.f32.mrf.mxu0
    %1679 = vmatprep.mubr.f32.mxu0 0.0
    %1680 = vmatmul.mubr.f32.gmra.mxu0 %v1600
    %v1681 = vpop.f32.mrf.mxu0
    %v1682 = vadd.f32 %v1585, %v1681
    %v1683 = vpop.f32.mrf.mxu0
    %1684 = vmatprep.mubr.f32.mxu0 0.0
    %1685 = vmatmul.mubr.f32.gmra.mxu0 %v1603
    %v1686 = vpop.f32.mrf.mxu0
    %v1687 = vadd.f32 %v1590, %v1686
    %v1688 = vpop.f32.mrf.mxu0
    %1689 = vdwg.mxu0
    %s1690 = scalar_lea.vmem %s3, 64
    %v1691 = vld [vmem:[%s1690] sm:$0xff]
    %v1692 = vld [vmem:[%s1690 + $0x8] sm:$0xff]
    %v1693 = vld [vmem:[%s1690 + $0x10] sm:$0xff]
    %v1694 = vld [vmem:[%s1690 + $0x18] sm:$0xff]
    %s1695 = scalar_lea.vmem %s4, 2
    %v1696 = vld [vmem:[%s1695] sm:$0x1]
    %v1698 = vlaneseq
    %v1699 = vshrl.u32 %v1698, 7
    %v1700 = vsub.s32 0, %v1699
    %v1701 = vrot.slane %v1696, %v1700
    %1703 = vmatprep.subr.mxu0 0.0
    %1704 = vmatpush1.msra.mxu0 0.0
    %1705 = vmatprep.subr.mxu0 0.0
    %1706 = vmatpush1.msra.mxu0 0.0
    %1707 = vmatprep.subr.mxu0 0.0
    %1708 = vmatpush1.msra.mxu0 0.0
    %1709 = vmatprep.subr.mxu0 0.0
    %1710 = vmatpush1.msra.mxu0 0.0
    %1711 = vmatprep.subr.mxu0 0.0
    %1712 = vmatpush1.msra.mxu0 0.0
    %1713 = vmatprep.subr.mxu0 0.0
    %1714 = vmatpush1.msra.mxu0 0.0
    %1715 = vmatprep.subr.mxu0 0.0
    %1716 = vmatpush1.msra.mxu0 0.0
    %1717 = vmatprep.subr.mxu0 0.0
    %1718 = vmatpush1.msra.mxu0 0.0
    %1719 = vmatprep.subr.mxu0 0.0
    %1720 = vmatpush1.msra.mxu0 0.0
    %1721 = vmatprep.subr.mxu0 0.0
    %1722 = vmatpush1.msra.mxu0 0.0
    %1723 = vmatprep.subr.mxu0 0.0
    %1724 = vmatpush1.msra.mxu0 0.0
    %1725 = vmatprep.subr.mxu0 0.0
    %1726 = vmatpush1.msra.mxu0 0.0
    %1727 = vmatprep.subr.mxu0 0.0
    %1728 = vmatpush1.msra.mxu0 %v1694
    %1729 = vmatprep.subr.mxu0 0.0
    %1730 = vmatpush1.msra.mxu0 %v1693
    %1731 = vmatprep.subr.mxu0 0.0
    %1732 = vmatpush1.msra.mxu0 %v1692
    %1733 = vmatprep.subr.mxu0 0.0
    %1734 = vmatpush1.msra.mxu0 %v1691
    %1735 = vmatprep.subr.mxu0 0.0
    %1736 = vmatpush2.msra.mxu0 0.0
    %1737 = vmatprep.subr.mxu0 0.0
    %1738 = vmatpush2.msra.mxu0 0.0
    %1739 = vmatprep.subr.mxu0 0.0
    %1740 = vmatpush2.msra.mxu0 0.0
    %1741 = vmatprep.subr.mxu0 0.0
    %1742 = vmatpush2.msra.mxu0 0.0
    %1743 = vmatprep.subr.mxu0 0.0
    %1744 = vmatpush2.msra.mxu0 0.0
    %1745 = vmatprep.subr.mxu0 0.0
    %1746 = vmatpush2.msra.mxu0 0.0
    %1747 = vmatprep.subr.mxu0 0.0
    %1748 = vmatpush2.msra.mxu0 0.0
    %1749 = vmatprep.subr.mxu0 0.0
    %1750 = vmatpush2.msra.mxu0 0.0
    %1751 = vmatprep.subr.mxu0 0.0
    %1752 = vmatpush2.msra.mxu0 0.0
    %1753 = vmatprep.subr.mxu0 0.0
    %1754 = vmatpush2.msra.mxu0 0.0
    %1755 = vmatprep.subr.mxu0 0.0
    %1756 = vmatpush2.msra.mxu0 0.0
    %1757 = vmatprep.subr.mxu0 0.0
    %1758 = vmatpush2.msra.mxu0 0.0
    %1759 = vmatprep.subr.mxu0 0.0
    %1760 = vmatpush2.msra.mxu0 0.0
    %1761 = vmatprep.subr.mxu0 0.0
    %1762 = vmatpush2.msra.mxu0 0.0
    %1763 = vmatprep.subr.mxu0 0.0
    %1764 = vmatpush2.msra.mxu0 0.0
    %1765 = vmatprep.subr.mxu0 0.0
    %1766 = vmatpush2.msra.mxu0 0.0
    %1767 = vmatprep.mubr.f32.mxu0 0.0
    %1768 = vmatmul.mubr.f32.gmra.mxu0 %v149
    %v1769 = vpop.f32.mrf.mxu0
    %v1770 = vadd.f32 %v1701, %v1769
    %v1771 = vpop.f32.mrf.mxu0
    %1772 = vmatprep.mubr.f32.mxu0 0.0
    %1773 = vmatmul.mubr.f32.gmra.mxu0 %v152
    %v1774 = vpop.f32.mrf.mxu0
    %v1775 = vadd.f32 %v1701, %v1774
    %v1776 = vpop.f32.mrf.mxu0
    %1777 = vmatprep.mubr.f32.mxu0 0.0
    %1778 = vmatmul.mubr.f32.gmra.mxu0 %v155
    %v1779 = vpop.f32.mrf.mxu0
    %v1780 = vadd.f32 %v1701, %v1779
    %v1781 = vpop.f32.mrf.mxu0
    %1782 = vmatprep.mubr.f32.mxu0 0.0
    %1783 = vmatmul.mubr.f32.gmra.mxu0 %v158
    %v1784 = vpop.f32.mrf.mxu0
    %v1785 = vadd.f32 %v1701, %v1784
    %v1786 = vpop.f32.mrf.mxu0
    %1787 = vdwg.mxu0
    %s1788 = scalar_lea.vmem %s5, 64
    %v1789 = vld [vmem:[%s1788] sm:$0xff]
    %v1790 = vld [vmem:[%s1788 + $0x8] sm:$0xff]
    %v1791 = vld [vmem:[%s1788 + $0x10] sm:$0xff]
    %v1792 = vld [vmem:[%s1788 + $0x18] sm:$0xff]
    %s1793 = scalar_lea.vmem %s6, 2
    %v1794 = vld [vmem:[%s1793] sm:$0x1]
    %v1796 = vlaneseq
    %v1797 = vshrl.u32 %v1796, 7
    %v1798 = vsub.s32 0, %v1797
    %v1799 = vrot.slane %v1794, %v1798
    %1801 = vmatprep.subr.mxu0 0.0
    %1802 = vmatpush1.msra.mxu0 0.0
    %1803 = vmatprep.subr.mxu0 0.0
    %1804 = vmatpush1.msra.mxu0 0.0
    %1805 = vmatprep.subr.mxu0 0.0
    %1806 = vmatpush1.msra.mxu0 0.0
    %1807 = vmatprep.subr.mxu0 0.0
    %1808 = vmatpush1.msra.mxu0 0.0
    %1809 = vmatprep.subr.mxu0 0.0
    %1810 = vmatpush1.msra.mxu0 0.0
    %1811 = vmatprep.subr.mxu0 0.0
    %1812 = vmatpush1.msra.mxu0 0.0
    %1813 = vmatprep.subr.mxu0 0.0
    %1814 = vmatpush1.msra.mxu0 0.0
    %1815 = vmatprep.subr.mxu0 0.0
    %1816 = vmatpush1.msra.mxu0 0.0
    %1817 = vmatprep.subr.mxu0 0.0
    %1818 = vmatpush1.msra.mxu0 0.0
    %1819 = vmatprep.subr.mxu0 0.0
    %1820 = vmatpush1.msra.mxu0 0.0
    %1821 = vmatprep.subr.mxu0 0.0
    %1822 = vmatpush1.msra.mxu0 0.0
    %1823 = vmatprep.subr.mxu0 0.0
    %1824 = vmatpush1.msra.mxu0 0.0
    %1825 = vmatprep.subr.mxu0 0.0
    %1826 = vmatpush1.msra.mxu0 %v1792
    %1827 = vmatprep.subr.mxu0 0.0
    %1828 = vmatpush1.msra.mxu0 %v1791
    %1829 = vmatprep.subr.mxu0 0.0
    %1830 = vmatpush1.msra.mxu0 %v1790
    %1831 = vmatprep.subr.mxu0 0.0
    %1832 = vmatpush1.msra.mxu0 %v1789
    %1833 = vmatprep.subr.mxu0 0.0
    %1834 = vmatpush2.msra.mxu0 0.0
    %1835 = vmatprep.subr.mxu0 0.0
    %1836 = vmatpush2.msra.mxu0 0.0
    %1837 = vmatprep.subr.mxu0 0.0
    %1838 = vmatpush2.msra.mxu0 0.0
    %1839 = vmatprep.subr.mxu0 0.0
    %1840 = vmatpush2.msra.mxu0 0.0
    %1841 = vmatprep.subr.mxu0 0.0
    %1842 = vmatpush2.msra.mxu0 0.0
    %1843 = vmatprep.subr.mxu0 0.0
    %1844 = vmatpush2.msra.mxu0 0.0
    %1845 = vmatprep.subr.mxu0 0.0
    %1846 = vmatpush2.msra.mxu0 0.0
    %1847 = vmatprep.subr.mxu0 0.0
    %1848 = vmatpush2.msra.mxu0 0.0
    %1849 = vmatprep.subr.mxu0 0.0
    %1850 = vmatpush2.msra.mxu0 0.0
    %1851 = vmatprep.subr.mxu0 0.0
    %1852 = vmatpush2.msra.mxu0 0.0
    %1853 = vmatprep.subr.mxu0 0.0
    %1854 = vmatpush2.msra.mxu0 0.0
    %1855 = vmatprep.subr.mxu0 0.0
    %1856 = vmatpush2.msra.mxu0 0.0
    %1857 = vmatprep.subr.mxu0 0.0
    %1858 = vmatpush2.msra.mxu0 0.0
    %1859 = vmatprep.subr.mxu0 0.0
    %1860 = vmatpush2.msra.mxu0 0.0
    %1861 = vmatprep.subr.mxu0 0.0
    %1862 = vmatpush2.msra.mxu0 0.0
    %1863 = vmatprep.subr.mxu0 0.0
    %1864 = vmatpush2.msra.mxu0 0.0
    %1865 = vmatprep.mubr.f32.mxu0 0.0
    %1866 = vmatmul.mubr.f32.gmra.mxu0 %v149
    %v1867 = vpop.f32.mrf.mxu0
    %v1868 = vadd.f32 %v1799, %v1867
    %v1869 = vpop.f32.mrf.mxu0
    %1870 = vmatprep.mubr.f32.mxu0 0.0
    %1871 = vmatmul.mubr.f32.gmra.mxu0 %v152
    %v1872 = vpop.f32.mrf.mxu0
    %v1873 = vadd.f32 %v1799, %v1872
    %v1874 = vpop.f32.mrf.mxu0
    %1875 = vmatprep.mubr.f32.mxu0 0.0
    %1876 = vmatmul.mubr.f32.gmra.mxu0 %v155
    %v1877 = vpop.f32.mrf.mxu0
    %v1878 = vadd.f32 %v1799, %v1877
    %v1879 = vpop.f32.mrf.mxu0
    %1880 = vmatprep.mubr.f32.mxu0 0.0
    %1881 = vmatmul.mubr.f32.gmra.mxu0 %v158
    %v1882 = vpop.f32.mrf.mxu0
    %v1883 = vadd.f32 %v1799, %v1882
    %v1884 = vpop.f32.mrf.mxu0
    %1885 = vdwg.mxu0
    %s1886 = scalar_lea.vmem %s7, 64
    %v1887 = vld [vmem:[%s1886] sm:$0xff]
    %v1888 = vld [vmem:[%s1886 + $0x8] sm:$0xff]
    %v1889 = vld [vmem:[%s1886 + $0x10] sm:$0xff]
    %v1890 = vld [vmem:[%s1886 + $0x18] sm:$0xff]
    %s1891 = scalar_lea.vmem %s8, 2
    %v1892 = vld [vmem:[%s1891] sm:$0x1]
    %v1894 = vlaneseq
    %v1895 = vshrl.u32 %v1894, 7
    %v1896 = vsub.s32 0, %v1895
    %v1897 = vrot.slane %v1892, %v1896
    %1899 = vmatprep.subr.mxu0 0.0
    %1900 = vmatpush1.msra.mxu0 0.0
    %1901 = vmatprep.subr.mxu0 0.0
    %1902 = vmatpush1.msra.mxu0 0.0
    %1903 = vmatprep.subr.mxu0 0.0
    %1904 = vmatpush1.msra.mxu0 0.0
    %1905 = vmatprep.subr.mxu0 0.0
    %1906 = vmatpush1.msra.mxu0 0.0
    %1907 = vmatprep.subr.mxu0 0.0
    %1908 = vmatpush1.msra.mxu0 0.0
    %1909 = vmatprep.subr.mxu0 0.0
    %1910 = vmatpush1.msra.mxu0 0.0
    %1911 = vmatprep.subr.mxu0 0.0
    %1912 = vmatpush1.msra.mxu0 0.0
    %1913 = vmatprep.subr.mxu0 0.0
    %1914 = vmatpush1.msra.mxu0 0.0
    %1915 = vmatprep.subr.mxu0 0.0
    %1916 = vmatpush1.msra.mxu0 0.0
    %1917 = vmatprep.subr.mxu0 0.0
    %1918 = vmatpush1.msra.mxu0 0.0
    %1919 = vmatprep.subr.mxu0 0.0
    %1920 = vmatpush1.msra.mxu0 0.0
    %1921 = vmatprep.subr.mxu0 0.0
    %1922 = vmatpush1.msra.mxu0 0.0
    %1923 = vmatprep.subr.mxu0 0.0
    %1924 = vmatpush1.msra.mxu0 %v1890
    %1925 = vmatprep.subr.mxu0 0.0
    %1926 = vmatpush1.msra.mxu0 %v1889
    %1927 = vmatprep.subr.mxu0 0.0
    %1928 = vmatpush1.msra.mxu0 %v1888
    %1929 = vmatprep.subr.mxu0 0.0
    %1930 = vmatpush1.msra.mxu0 %v1887
    %1931 = vmatprep.subr.mxu0 0.0
    %1932 = vmatpush2.msra.mxu0 0.0
    %1933 = vmatprep.subr.mxu0 0.0
    %1934 = vmatpush2.msra.mxu0 0.0
    %1935 = vmatprep.subr.mxu0 0.0
    %1936 = vmatpush2.msra.mxu0 0.0
    %1937 = vmatprep.subr.mxu0 0.0
    %1938 = vmatpush2.msra.mxu0 0.0
    %1939 = vmatprep.subr.mxu0 0.0
    %1940 = vmatpush2.msra.mxu0 0.0
    %1941 = vmatprep.subr.mxu0 0.0
    %1942 = vmatpush2.msra.mxu0 0.0
    %1943 = vmatprep.subr.mxu0 0.0
    %1944 = vmatpush2.msra.mxu0 0.0
    %1945 = vmatprep.subr.mxu0 0.0
    %1946 = vmatpush2.msra.mxu0 0.0
    %1947 = vmatprep.subr.mxu0 0.0
    %1948 = vmatpush2.msra.mxu0 0.0
    %1949 = vmatprep.subr.mxu0 0.0
    %1950 = vmatpush2.msra.mxu0 0.0
    %1951 = vmatprep.subr.mxu0 0.0
    %1952 = vmatpush2.msra.mxu0 0.0
    %1953 = vmatprep.subr.mxu0 0.0
    %1954 = vmatpush2.msra.mxu0 0.0
    %1955 = vmatprep.subr.mxu0 0.0
    %1956 = vmatpush2.msra.mxu0 0.0
    %1957 = vmatprep.subr.mxu0 0.0
    %1958 = vmatpush2.msra.mxu0 0.0
    %1959 = vmatprep.subr.mxu0 0.0
    %1960 = vmatpush2.msra.mxu0 0.0
    %1961 = vmatprep.subr.mxu0 0.0
    %1962 = vmatpush2.msra.mxu0 0.0
    %1963 = vmatprep.mubr.f32.mxu0 0.0
    %1964 = vmatmul.mubr.f32.gmra.mxu0 %v149
    %v1965 = vpop.f32.mrf.mxu0
    %v1966 = vadd.f32 %v1897, %v1965
    %v1967 = vpop.f32.mrf.mxu0
    %1968 = vmatprep.mubr.f32.mxu0 0.0
    %1969 = vmatmul.mubr.f32.gmra.mxu0 %v152
    %v1970 = vpop.f32.mrf.mxu0
    %v1971 = vadd.f32 %v1897, %v1970
    %v1972 = vpop.f32.mrf.mxu0
    %1973 = vmatprep.mubr.f32.mxu0 0.0
    %1974 = vmatmul.mubr.f32.gmra.mxu0 %v155
    %v1975 = vpop.f32.mrf.mxu0
    %v1976 = vadd.f32 %v1897, %v1975
    %v1977 = vpop.f32.mrf.mxu0
    %1978 = vmatprep.mubr.f32.mxu0 0.0
    %1979 = vmatmul.mubr.f32.gmra.mxu0 %v158
    %v1980 = vpop.f32.mrf.mxu0
    %v1981 = vadd.f32 %v1897, %v1980
    %v1982 = vpop.f32.mrf.mxu0
    %1983 = vdwg.mxu0
    %v1985 = vsel %vm437, %v1770, 0
    %v1988 = vsel %vm437, %v1775, 0
    %v1991 = vsel %vm437, %v1868, 0
    %v1994 = vsel %vm437, %v1873, 0
    %1996 = vmatprep.subr.mxu0 0.0
    %1997 = vmatpush1.xpose.msra.mxu0 0.0
    %1998 = vmatprep.subr.mxu0 0.0
    %1999 = vmatpush1.xpose.msra.mxu0 0.0
    %2000 = vmatprep.subr.mxu0 0.0
    %2001 = vmatpush1.xpose.msra.mxu0 0.0
    %2002 = vmatprep.subr.mxu0 0.0
    %2003 = vmatpush1.xpose.msra.mxu0 0.0
    %2004 = vmatprep.subr.mxu0 0.0
    %2005 = vmatpush1.xpose.msra.mxu0 0.0
    %2006 = vmatprep.subr.mxu0 0.0
    %2007 = vmatpush1.xpose.msra.mxu0 0.0
    %2008 = vmatprep.subr.mxu0 0.0
    %2009 = vmatpush1.xpose.msra.mxu0 0.0
    %2010 = vmatprep.subr.mxu0 0.0
    %2011 = vmatpush1.xpose.msra.mxu0 0.0
    %2012 = vmatprep.subr.mxu0 0.0
    %2013 = vmatpush1.xpose.msra.mxu0 0.0
    %2014 = vmatprep.subr.mxu0 0.0
    %2015 = vmatpush1.xpose.msra.mxu0 0.0
    %2016 = vmatprep.subr.mxu0 0.0
    %2017 = vmatpush1.xpose.msra.mxu0 0.0
    %2018 = vmatprep.subr.mxu0 0.0
    %2019 = vmatpush1.xpose.msra.mxu0 0.0
    %2020 = vmatprep.subr.mxu0 0.0
    %2021 = vmatpush1.xpose.msra.mxu0 0.0
    %2022 = vmatprep.subr.mxu0 0.0
    %2023 = vmatpush1.xpose.msra.mxu0 0.0
    %2024 = vmatprep.subr.mxu0 0.0
    %2025 = vmatpush1.xpose.msra.mxu0 %v1994
    %2026 = vmatprep.subr.mxu0 0.0
    %2027 = vmatpush1.xpose.msra.mxu0 %v1991
    %2028 = vmatprep.subr.mxu0 0.0
    %2029 = vmatpush2.xpose.msra.mxu0 0.0
    %2030 = vmatprep.subr.mxu0 0.0
    %2031 = vmatpush2.xpose.msra.mxu0 0.0
    %2032 = vmatprep.subr.mxu0 0.0
    %2033 = vmatpush2.xpose.msra.mxu0 0.0
    %2034 = vmatprep.subr.mxu0 0.0
    %2035 = vmatpush2.xpose.msra.mxu0 0.0
    %2036 = vmatprep.subr.mxu0 0.0
    %2037 = vmatpush2.xpose.msra.mxu0 0.0
    %2038 = vmatprep.subr.mxu0 0.0
    %2039 = vmatpush2.xpose.msra.mxu0 0.0
    %2040 = vmatprep.subr.mxu0 0.0
    %2041 = vmatpush2.xpose.msra.mxu0 0.0
    %2042 = vmatprep.subr.mxu0 0.0
    %2043 = vmatpush2.xpose.msra.mxu0 0.0
    %2044 = vmatprep.subr.mxu0 0.0
    %2045 = vmatpush2.xpose.msra.mxu0 0.0
    %2046 = vmatprep.subr.mxu0 0.0
    %2047 = vmatpush2.xpose.msra.mxu0 0.0
    %2048 = vmatprep.subr.mxu0 0.0
    %2049 = vmatpush2.xpose.msra.mxu0 0.0
    %2050 = vmatprep.subr.mxu0 0.0
    %2051 = vmatpush2.xpose.msra.mxu0 0.0
    %2052 = vmatprep.subr.mxu0 0.0
    %2053 = vmatpush2.xpose.msra.mxu0 0.0
    %2054 = vmatprep.subr.mxu0 0.0
    %2055 = vmatpush2.xpose.msra.mxu0 0.0
    %2056 = vmatprep.subr.mxu0 0.0
    %2057 = vmatpush2.xpose.msra.mxu0 0.0
    %2058 = vmatprep.subr.mxu0 0.0
    %2059 = vmatpush2.xpose.msra.mxu0 0.0
    %2060 = vmatprep.mubr.f32.mxu0 0.0
    %2061 = vmatmul.mubr.f32.gmra.mxu0 %v1985
    %v2062 = vpop.f32.mrf.mxu0
    %v2063 = vadd.f32 0.0, %v2062
    %v2064 = vpop.f32.mrf.mxu0
    %2065 = vmatprep.mubr.f32.mxu0 0.0
    %2066 = vmatmul.mubr.f32.gmra.mxu0 %v1988
    %v2067 = vpop.f32.mrf.mxu0
    %v2068 = vadd.f32 0.0, %v2067
    %v2069 = vpop.f32.mrf.mxu0
    %2070 = vdwg.mxu0
    %v2072 = vsel %vm437, %v1780, 0
    %v2075 = vsel %vm437, %v1785, 0
    %v2078 = vsel %vm437, %v1878, 0
    %v2081 = vsel %vm437, %v1883, 0
    %2083 = vmatprep.subr.mxu0 0.0
    %2084 = vmatpush1.xpose.msra.mxu0 0.0
    %2085 = vmatprep.subr.mxu0 0.0
    %2086 = vmatpush1.xpose.msra.mxu0 0.0
    %2087 = vmatprep.subr.mxu0 0.0
    %2088 = vmatpush1.xpose.msra.mxu0 0.0
    %2089 = vmatprep.subr.mxu0 0.0
    %2090 = vmatpush1.xpose.msra.mxu0 0.0
    %2091 = vmatprep.subr.mxu0 0.0
    %2092 = vmatpush1.xpose.msra.mxu0 0.0
    %2093 = vmatprep.subr.mxu0 0.0
    %2094 = vmatpush1.xpose.msra.mxu0 0.0
    %2095 = vmatprep.subr.mxu0 0.0
    %2096 = vmatpush1.xpose.msra.mxu0 0.0
    %2097 = vmatprep.subr.mxu0 0.0
    %2098 = vmatpush1.xpose.msra.mxu0 0.0
    %2099 = vmatprep.subr.mxu0 0.0
    %2100 = vmatpush1.xpose.msra.mxu0 0.0
    %2101 = vmatprep.subr.mxu0 0.0
    %2102 = vmatpush1.xpose.msra.mxu0 0.0
    %2103 = vmatprep.subr.mxu0 0.0
    %2104 = vmatpush1.xpose.msra.mxu0 0.0
    %2105 = vmatprep.subr.mxu0 0.0
    %2106 = vmatpush1.xpose.msra.mxu0 0.0
    %2107 = vmatprep.subr.mxu0 0.0
    %2108 = vmatpush1.xpose.msra.mxu0 0.0
    %2109 = vmatprep.subr.mxu0 0.0
    %2110 = vmatpush1.xpose.msra.mxu0 0.0
    %2111 = vmatprep.subr.mxu0 0.0
    %2112 = vmatpush1.xpose.msra.mxu0 %v2081
    %2113 = vmatprep.subr.mxu0 0.0
    %2114 = vmatpush1.xpose.msra.mxu0 %v2078
    %2115 = vmatprep.subr.mxu0 0.0
    %2116 = vmatpush2.xpose.msra.mxu0 0.0
    %2117 = vmatprep.subr.mxu0 0.0
    %2118 = vmatpush2.xpose.msra.mxu0 0.0
    %2119 = vmatprep.subr.mxu0 0.0
    %2120 = vmatpush2.xpose.msra.mxu0 0.0
    %2121 = vmatprep.subr.mxu0 0.0
    %2122 = vmatpush2.xpose.msra.mxu0 0.0
    %2123 = vmatprep.subr.mxu0 0.0
    %2124 = vmatpush2.xpose.msra.mxu0 0.0
    %2125 = vmatprep.subr.mxu0 0.0
    %2126 = vmatpush2.xpose.msra.mxu0 0.0
    %2127 = vmatprep.subr.mxu0 0.0
    %2128 = vmatpush2.xpose.msra.mxu0 0.0
    %2129 = vmatprep.subr.mxu0 0.0
    %2130 = vmatpush2.xpose.msra.mxu0 0.0
    %2131 = vmatprep.subr.mxu0 0.0
    %2132 = vmatpush2.xpose.msra.mxu0 0.0
    %2133 = vmatprep.subr.mxu0 0.0
    %2134 = vmatpush2.xpose.msra.mxu0 0.0
    %2135 = vmatprep.subr.mxu0 0.0
    %2136 = vmatpush2.xpose.msra.mxu0 0.0
    %2137 = vmatprep.subr.mxu0 0.0
    %2138 = vmatpush2.xpose.msra.mxu0 0.0
    %2139 = vmatprep.subr.mxu0 0.0
    %2140 = vmatpush2.xpose.msra.mxu0 0.0
    %2141 = vmatprep.subr.mxu0 0.0
    %2142 = vmatpush2.xpose.msra.mxu0 0.0
    %2143 = vmatprep.subr.mxu0 0.0
    %2144 = vmatpush2.xpose.msra.mxu0 0.0
    %2145 = vmatprep.subr.mxu0 0.0
    %2146 = vmatpush2.xpose.msra.mxu0 0.0
    %2147 = vmatprep.mubr.f32.mxu0 0.0
    %2148 = vmatmul.mubr.f32.gmra.mxu0 %v2072
    %v2149 = vpop.f32.mrf.mxu0
    %v2150 = vadd.f32 0.0, %v2149
    %v2151 = vpop.f32.mrf.mxu0
    %2152 = vmatprep.mubr.f32.mxu0 0.0
    %2153 = vmatmul.mubr.f32.gmra.mxu0 %v2075
    %v2154 = vpop.f32.mrf.mxu0
    %v2155 = vadd.f32 0.0, %v2154
    %v2156 = vpop.f32.mrf.mxu0
    %2157 = vdwg.mxu0
    %v2158 = vsel %vm612, %v2063, -inf
    %2159 = vmax.xlane.f32.xlu0 %v2158
    %v2160 = vpop.xlane.xlu0 %2159
    %v2161 = vsel %vm612, %v2068, -inf
    %2162 = vmax.xlane.f32.xlu0 %v2161
    %v2163 = vpop.xlane.xlu0 %2162
    %v2164 = vsel %vm612, %v2150, -inf
    %2165 = vmax.xlane.f32.xlu0 %v2164
    %v2166 = vpop.xlane.xlu0 %2165
    %v2167 = vsel %vm612, %v2155, -inf
    %2168 = vmax.xlane.f32.xlu0 %v2167
    %v2169 = vpop.xlane.xlu0 %2168
    %v2170 = vsub.f32 %v2063, %v2160
    %v2171 = vsub.f32 %v2068, %v2163
    %v2172 = vsub.f32 %v2150, %v2166
    %v2173 = vsub.f32 %v2155, %v2169
    %v2174 = vmul.f32 %v2170, 1.442695
    %v2175 = vpow.pop %v2174
    %v2176 = vmul.f32 %v2171, 1.442695
    %v2177 = vpow.pop %v2176
    %v2178 = vmul.f32 %v2172, 1.442695
    %v2179 = vpow.pop %v2178
    %v2180 = vmul.f32 %v2173, 1.442695
    %v2181 = vpow.pop %v2180
    %v2182 = vsel %vm612, %v2175, 0.0
    %2183 = vadd.xlane.f32.xlu0 %v2182
    %v2184 = vpop.xlane.xlu0 %2183
    %v2185 = vsel %vm612, %v2177, 0.0
    %2186 = vadd.xlane.f32.xlu0 %v2185
    %v2187 = vpop.xlane.xlu0 %2186
    %v2188 = vsel %vm612, %v2179, 0.0
    %2189 = vadd.xlane.f32.xlu0 %v2188
    %v2190 = vpop.xlane.xlu0 %2189
    %v2191 = vsel %vm612, %v2181, 0.0
    %2192 = vadd.xlane.f32.xlu0 %v2191
    %v2193 = vpop.xlane.xlu0 %2192
    %v2194 = vrcp.pop %v2184
    %v2195 = vrcp.pop %v2187
    %v2196 = vrcp.pop %v2190
    %v2197 = vrcp.pop %v2193
    %v2198 = vmul.f32 %v2175, %v2194
    %v2199 = vmul.f32 %v2177, %v2195
    %v2200 = vmul.f32 %v2179, %v2196
    %v2201 = vmul.f32 %v2181, %v2197
    %v2203 = vsel %vm612, %v2198, 0
    %v2206 = vsel %vm612, %v2199, 0
    %2208 = vmatprep.subr.mxu0 0.0
    %2209 = vmatpush1.msra.mxu0 0.0
    %2210 = vmatprep.subr.mxu0 0.0
    %2211 = vmatpush1.msra.mxu0 0.0
    %2212 = vmatprep.subr.mxu0 0.0
    %2213 = vmatpush1.msra.mxu0 0.0
    %2214 = vmatprep.subr.mxu0 0.0
    %2215 = vmatpush1.msra.mxu0 0.0
    %2216 = vmatprep.subr.mxu0 0.0
    %2217 = vmatpush1.msra.mxu0 0.0
    %2218 = vmatprep.subr.mxu0 0.0
    %2219 = vmatpush1.msra.mxu0 0.0
    %2220 = vmatprep.subr.mxu0 0.0
    %2221 = vmatpush1.msra.mxu0 0.0
    %2222 = vmatprep.subr.mxu0 0.0
    %2223 = vmatpush1.msra.mxu0 0.0
    %2224 = vmatprep.subr.mxu0 0.0
    %2225 = vmatpush1.msra.mxu0 0.0
    %2226 = vmatprep.subr.mxu0 0.0
    %2227 = vmatpush1.msra.mxu0 0.0
    %2228 = vmatprep.subr.mxu0 0.0
    %2229 = vmatpush1.msra.mxu0 0.0
    %2230 = vmatprep.subr.mxu0 0.0
    %2231 = vmatpush1.msra.mxu0 0.0
    %2232 = vmatprep.subr.mxu0 0.0
    %2233 = vmatpush1.msra.mxu0 0.0
    %2234 = vmatprep.subr.mxu0 0.0
    %2235 = vmatpush1.msra.mxu0 0.0
    %2236 = vmatprep.subr.mxu0 0.0
    %2237 = vmatpush1.msra.mxu0 %v1971
    %2238 = vmatprep.subr.mxu0 0.0
    %2239 = vmatpush1.msra.mxu0 %v1966
    %2240 = vmatprep.subr.mxu0 0.0
    %2241 = vmatpush2.msra.mxu0 0.0
    %2242 = vmatprep.subr.mxu0 0.0
    %2243 = vmatpush2.msra.mxu0 0.0
    %2244 = vmatprep.subr.mxu0 0.0
    %2245 = vmatpush2.msra.mxu0 0.0
    %2246 = vmatprep.subr.mxu0 0.0
    %2247 = vmatpush2.msra.mxu0 0.0
    %2248 = vmatprep.subr.mxu0 0.0
    %2249 = vmatpush2.msra.mxu0 0.0
    %2250 = vmatprep.subr.mxu0 0.0
    %2251 = vmatpush2.msra.mxu0 0.0
    %2252 = vmatprep.subr.mxu0 0.0
    %2253 = vmatpush2.msra.mxu0 0.0
    %2254 = vmatprep.subr.mxu0 0.0
    %2255 = vmatpush2.msra.mxu0 0.0
    %2256 = vmatprep.subr.mxu0 0.0
    %2257 = vmatpush2.msra.mxu0 0.0
    %2258 = vmatprep.subr.mxu0 0.0
    %2259 = vmatpush2.msra.mxu0 0.0
    %2260 = vmatprep.subr.mxu0 0.0
    %2261 = vmatpush2.msra.mxu0 0.0
    %2262 = vmatprep.subr.mxu0 0.0
    %2263 = vmatpush2.msra.mxu0 0.0
    %2264 = vmatprep.subr.mxu0 0.0
    %2265 = vmatpush2.msra.mxu0 0.0
    %2266 = vmatprep.subr.mxu0 0.0
    %2267 = vmatpush2.msra.mxu0 0.0
    %2268 = vmatprep.subr.mxu0 0.0
    %2269 = vmatpush2.msra.mxu0 0.0
    %2270 = vmatprep.subr.mxu0 0.0
    %2271 = vmatpush2.msra.mxu0 0.0
    %2272 = vmatprep.mubr.f32.mxu0 0.0
    %2273 = vmatmul.mubr.f32.gmra.mxu0 %v2203
    %v2274 = vpop.f32.mrf.mxu0
    %v2275 = vadd.f32 0.0, %v2274
    %v2276 = vpop.f32.mrf.mxu0
    %2277 = vmatprep.mubr.f32.mxu0 0.0
    %2278 = vmatmul.mubr.f32.gmra.mxu0 %v2206
    %v2279 = vpop.f32.mrf.mxu0
    %v2280 = vadd.f32 0.0, %v2279
    %v2281 = vpop.f32.mrf.mxu0
    %2282 = vdwg.mxu0
    %v2284 = vsel %vm612, %v2200, 0
    %v2287 = vsel %vm612, %v2201, 0
    %2289 = vmatprep.subr.mxu0 0.0
    %2290 = vmatpush1.msra.mxu0 0.0
    %2291 = vmatprep.subr.mxu0 0.0
    %2292 = vmatpush1.msra.mxu0 0.0
    %2293 = vmatprep.subr.mxu0 0.0
    %2294 = vmatpush1.msra.mxu0 0.0
    %2295 = vmatprep.subr.mxu0 0.0
    %2296 = vmatpush1.msra.mxu0 0.0
    %2297 = vmatprep.subr.mxu0 0.0
    %2298 = vmatpush1.msra.mxu0 0.0
    %2299 = vmatprep.subr.mxu0 0.0
    %2300 = vmatpush1.msra.mxu0 0.0
    %2301 = vmatprep.subr.mxu0 0.0
    %2302 = vmatpush1.msra.mxu0 0.0
    %2303 = vmatprep.subr.mxu0 0.0
    %2304 = vmatpush1.msra.mxu0 0.0
    %2305 = vmatprep.subr.mxu0 0.0
    %2306 = vmatpush1.msra.mxu0 0.0
    %2307 = vmatprep.subr.mxu0 0.0
    %2308 = vmatpush1.msra.mxu0 0.0
    %2309 = vmatprep.subr.mxu0 0.0
    %2310 = vmatpush1.msra.mxu0 0.0
    %2311 = vmatprep.subr.mxu0 0.0
    %2312 = vmatpush1.msra.mxu0 0.0
    %2313 = vmatprep.subr.mxu0 0.0
    %2314 = vmatpush1.msra.mxu0 0.0
    %2315 = vmatprep.subr.mxu0 0.0
    %2316 = vmatpush1.msra.mxu0 0.0
    %2317 = vmatprep.subr.mxu0 0.0
    %2318 = vmatpush1.msra.mxu0 %v1981
    %2319 = vmatprep.subr.mxu0 0.0
    %2320 = vmatpush1.msra.mxu0 %v1976
    %2321 = vmatprep.subr.mxu0 0.0
    %2322 = vmatpush2.msra.mxu0 0.0
    %2323 = vmatprep.subr.mxu0 0.0
    %2324 = vmatpush2.msra.mxu0 0.0
    %2325 = vmatprep.subr.mxu0 0.0
    %2326 = vmatpush2.msra.mxu0 0.0
    %2327 = vmatprep.subr.mxu0 0.0
    %2328 = vmatpush2.msra.mxu0 0.0
    %2329 = vmatprep.subr.mxu0 0.0
    %2330 = vmatpush2.msra.mxu0 0.0
    %2331 = vmatprep.subr.mxu0 0.0
    %2332 = vmatpush2.msra.mxu0 0.0
    %2333 = vmatprep.subr.mxu0 0.0
    %2334 = vmatpush2.msra.mxu0 0.0
    %2335 = vmatprep.subr.mxu0 0.0
    %2336 = vmatpush2.msra.mxu0 0.0
    %2337 = vmatprep.subr.mxu0 0.0
    %2338 = vmatpush2.msra.mxu0 0.0
    %2339 = vmatprep.subr.mxu0 0.0
    %2340 = vmatpush2.msra.mxu0 0.0
    %2341 = vmatprep.subr.mxu0 0.0
    %2342 = vmatpush2.msra.mxu0 0.0
    %2343 = vmatprep.subr.mxu0 0.0
    %2344 = vmatpush2.msra.mxu0 0.0
    %2345 = vmatprep.subr.mxu0 0.0
    %2346 = vmatpush2.msra.mxu0 0.0
    %2347 = vmatprep.subr.mxu0 0.0
    %2348 = vmatpush2.msra.mxu0 0.0
    %2349 = vmatprep.subr.mxu0 0.0
    %2350 = vmatpush2.msra.mxu0 0.0
    %2351 = vmatprep.subr.mxu0 0.0
    %2352 = vmatpush2.msra.mxu0 0.0
    %2353 = vmatprep.mubr.f32.mxu0 0.0
    %2354 = vmatmul.mubr.f32.gmra.mxu0 %v2284
    %v2355 = vpop.f32.mrf.mxu0
    %v2356 = vadd.f32 0.0, %v2355
    %v2357 = vpop.f32.mrf.mxu0
    %2358 = vmatprep.mubr.f32.mxu0 0.0
    %2359 = vmatmul.mubr.f32.gmra.mxu0 %v2287
    %v2360 = vpop.f32.mrf.mxu0
    %v2361 = vadd.f32 0.0, %v2360
    %v2362 = vpop.f32.mrf.mxu0
    %2363 = vdwg.mxu0
    %s2364 = scalar_lea.vmem %s9, 16
    %v2365 = vld [vmem:[%s2364] sm:$0xff]
    %v2367 = vsel %vm437, %v2275, 0
    %v2370 = vsel %vm437, %v2280, 0
    %v2373 = vsel %vm437, %v2356, 0
    %v2376 = vsel %vm437, %v2361, 0
    %2378 = vmatprep.subr.mxu0 0.0
    %2379 = vmatpush1.msra.mxu0 0.0
    %2380 = vmatprep.subr.mxu0 0.0
    %2381 = vmatpush1.msra.mxu0 0.0
    %2382 = vmatprep.subr.mxu0 0.0
    %2383 = vmatpush1.msra.mxu0 0.0
    %2384 = vmatprep.subr.mxu0 0.0
    %2385 = vmatpush1.msra.mxu0 0.0
    %2386 = vmatprep.subr.mxu0 0.0
    %2387 = vmatpush1.msra.mxu0 0.0
    %2388 = vmatprep.subr.mxu0 0.0
    %2389 = vmatpush1.msra.mxu0 0.0
    %2390 = vmatprep.subr.mxu0 0.0
    %2391 = vmatpush1.msra.mxu0 0.0
    %2392 = vmatprep.subr.mxu0 0.0
    %2393 = vmatpush1.msra.mxu0 0.0
    %2394 = vmatprep.subr.mxu0 0.0
    %2395 = vmatpush1.msra.mxu0 0.0
    %2396 = vmatprep.subr.mxu0 0.0
    %2397 = vmatpush1.msra.mxu0 0.0
    %2398 = vmatprep.subr.mxu0 0.0
    %2399 = vmatpush1.msra.mxu0 0.0
    %2400 = vmatprep.subr.mxu0 0.0
    %2401 = vmatpush1.msra.mxu0 0.0
    %2402 = vmatprep.subr.mxu0 0.0
    %2403 = vmatpush1.msra.mxu0 0.0
    %2404 = vmatprep.subr.mxu0 0.0
    %2405 = vmatpush1.msra.mxu0 0.0
    %2406 = vmatprep.subr.mxu0 0.0
    %2407 = vmatpush1.msra.mxu0 0.0
    %2408 = vmatprep.subr.mxu0 0.0
    %2409 = vmatpush1.msra.mxu0 %v2365
    %2410 = vmatprep.subr.mxu0 0.0
    %2411 = vmatpush2.msra.mxu0 0.0
    %2412 = vmatprep.subr.mxu0 0.0
    %2413 = vmatpush2.msra.mxu0 0.0
    %2414 = vmatprep.subr.mxu0 0.0
    %2415 = vmatpush2.msra.mxu0 0.0
    %2416 = vmatprep.subr.mxu0 0.0
    %2417 = vmatpush2.msra.mxu0 0.0
    %2418 = vmatprep.subr.mxu0 0.0
    %2419 = vmatpush2.msra.mxu0 0.0
    %2420 = vmatprep.subr.mxu0 0.0
    %2421 = vmatpush2.msra.mxu0 0.0
    %2422 = vmatprep.subr.mxu0 0.0
    %2423 = vmatpush2.msra.mxu0 0.0
    %2424 = vmatprep.subr.mxu0 0.0
    %2425 = vmatpush2.msra.mxu0 0.0
    %2426 = vmatprep.subr.mxu0 0.0
    %2427 = vmatpush2.msra.mxu0 0.0
    %2428 = vmatprep.subr.mxu0 0.0
    %2429 = vmatpush2.msra.mxu0 0.0
    %2430 = vmatprep.subr.mxu0 0.0
    %2431 = vmatpush2.msra.mxu0 0.0
    %2432 = vmatprep.subr.mxu0 0.0
    %2433 = vmatpush2.msra.mxu0 0.0
    %2434 = vmatprep.subr.mxu0 0.0
    %2435 = vmatpush2.msra.mxu0 0.0
    %2436 = vmatprep.subr.mxu0 0.0
    %2437 = vmatpush2.msra.mxu0 0.0
    %2438 = vmatprep.subr.mxu0 0.0
    %2439 = vmatpush2.msra.mxu0 0.0
    %2440 = vmatprep.subr.mxu0 0.0
    %2441 = vmatpush2.msra.mxu0 0.0
    %2442 = vmatprep.mubr.f32.mxu0 0.0
    %2443 = vmatmul.mubr.f32.gmra.mxu0 %v2367
    %v2444 = vpop.f32.mrf.mxu0
    %v2445 = vadd.f32 0.0, %v2444
    %v2446 = vpop.f32.mrf.mxu0
    %2447 = vmatprep.mubr.f32.mxu0 0.0
    %2448 = vmatmul.mubr.f32.gmra.mxu0 %v2370
    %v2449 = vpop.f32.mrf.mxu0
    %v2450 = vadd.f32 0.0, %v2449
    %v2451 = vpop.f32.mrf.mxu0
    %2452 = vmatprep.mubr.f32.mxu0 0.0
    %2453 = vmatmul.mubr.f32.gmra.mxu0 %v2373
    %v2454 = vpop.f32.mrf.mxu0
    %v2455 = vadd.f32 0.0, %v2454
    %v2456 = vpop.f32.mrf.mxu0
    %2457 = vmatprep.mubr.f32.mxu0 0.0
    %2458 = vmatmul.mubr.f32.gmra.mxu0 %v2376
    %v2459 = vpop.f32.mrf.mxu0
    %v2460 = vadd.f32 0.0, %v2459
    %v2461 = vpop.f32.mrf.mxu0
    %2462 = vdwg.mxu0
    %v2463 = vadd.f32 %v1672, %v2445
    %v2464 = vadd.f32 %v1677, %v2450
    %v2465 = vadd.f32 %v1682, %v2455
    %v2466 = vadd.f32 %v1687, %v2460
    %s2467 = scalar_lea.vmem %s3, 96
    %v2468 = vld [vmem:[%s2467] sm:$0xff]
    %v2469 = vld [vmem:[%s2467 + $0x8] sm:$0xff]
    %v2470 = vld [vmem:[%s2467 + $0x10] sm:$0xff]
    %v2471 = vld [vmem:[%s2467 + $0x18] sm:$0xff]
    %s2472 = scalar_lea.vmem %s4, 3
    %v2473 = vld [vmem:[%s2472] sm:$0x1]
    %v2475 = vlaneseq
    %v2476 = vshrl.u32 %v2475, 7
    %v2477 = vsub.s32 0, %v2476
    %v2478 = vrot.slane %v2473, %v2477
    %2480 = vmatprep.subr.mxu0 0.0
    %2481 = vmatpush1.msra.mxu0 0.0
    %2482 = vmatprep.subr.mxu0 0.0
    %2483 = vmatpush1.msra.mxu0 0.0
    %2484 = vmatprep.subr.mxu0 0.0
    %2485 = vmatpush1.msra.mxu0 0.0
    %2486 = vmatprep.subr.mxu0 0.0
    %2487 = vmatpush1.msra.mxu0 0.0
    %2488 = vmatprep.subr.mxu0 0.0
    %2489 = vmatpush1.msra.mxu0 0.0
    %2490 = vmatprep.subr.mxu0 0.0
    %2491 = vmatpush1.msra.mxu0 0.0
    %2492 = vmatprep.subr.mxu0 0.0
    %2493 = vmatpush1.msra.mxu0 0.0
    %2494 = vmatprep.subr.mxu0 0.0
    %2495 = vmatpush1.msra.mxu0 0.0
    %2496 = vmatprep.subr.mxu0 0.0
    %2497 = vmatpush1.msra.mxu0 0.0
    %2498 = vmatprep.subr.mxu0 0.0
    %2499 = vmatpush1.msra.mxu0 0.0
    %2500 = vmatprep.subr.mxu0 0.0
    %2501 = vmatpush1.msra.mxu0 0.0
    %2502 = vmatprep.subr.mxu0 0.0
    %2503 = vmatpush1.msra.mxu0 0.0
    %2504 = vmatprep.subr.mxu0 0.0
    %2505 = vmatpush1.msra.mxu0 %v2471
    %2506 = vmatprep.subr.mxu0 0.0
    %2507 = vmatpush1.msra.mxu0 %v2470
    %2508 = vmatprep.subr.mxu0 0.0
    %2509 = vmatpush1.msra.mxu0 %v2469
    %2510 = vmatprep.subr.mxu0 0.0
    %2511 = vmatpush1.msra.mxu0 %v2468
    %2512 = vmatprep.subr.mxu0 0.0
    %2513 = vmatpush2.msra.mxu0 0.0
    %2514 = vmatprep.subr.mxu0 0.0
    %2515 = vmatpush2.msra.mxu0 0.0
    %2516 = vmatprep.subr.mxu0 0.0
    %2517 = vmatpush2.msra.mxu0 0.0
    %2518 = vmatprep.subr.mxu0 0.0
    %2519 = vmatpush2.msra.mxu0 0.0
    %2520 = vmatprep.subr.mxu0 0.0
    %2521 = vmatpush2.msra.mxu0 0.0
    %2522 = vmatprep.subr.mxu0 0.0
    %2523 = vmatpush2.msra.mxu0 0.0
    %2524 = vmatprep.subr.mxu0 0.0
    %2525 = vmatpush2.msra.mxu0 0.0
    %2526 = vmatprep.subr.mxu0 0.0
    %2527 = vmatpush2.msra.mxu0 0.0
    %2528 = vmatprep.subr.mxu0 0.0
    %2529 = vmatpush2.msra.mxu0 0.0
    %2530 = vmatprep.subr.mxu0 0.0
    %2531 = vmatpush2.msra.mxu0 0.0
    %2532 = vmatprep.subr.mxu0 0.0
    %2533 = vmatpush2.msra.mxu0 0.0
    %2534 = vmatprep.subr.mxu0 0.0
    %2535 = vmatpush2.msra.mxu0 0.0
    %2536 = vmatprep.subr.mxu0 0.0
    %2537 = vmatpush2.msra.mxu0 0.0
    %2538 = vmatprep.subr.mxu0 0.0
    %2539 = vmatpush2.msra.mxu0 0.0
    %2540 = vmatprep.subr.mxu0 0.0
    %2541 = vmatpush2.msra.mxu0 0.0
    %2542 = vmatprep.subr.mxu0 0.0
    %2543 = vmatpush2.msra.mxu0 0.0
    %2544 = vmatprep.mubr.f32.mxu0 0.0
    %2545 = vmatmul.mubr.f32.gmra.mxu0 %v149
    %v2546 = vpop.f32.mrf.mxu0
    %v2547 = vadd.f32 %v2478, %v2546
    %v2548 = vpop.f32.mrf.mxu0
    %2549 = vmatprep.mubr.f32.mxu0 0.0
    %2550 = vmatmul.mubr.f32.gmra.mxu0 %v152
    %v2551 = vpop.f32.mrf.mxu0
    %v2552 = vadd.f32 %v2478, %v2551
    %v2553 = vpop.f32.mrf.mxu0
    %2554 = vmatprep.mubr.f32.mxu0 0.0
    %2555 = vmatmul.mubr.f32.gmra.mxu0 %v155
    %v2556 = vpop.f32.mrf.mxu0
    %v2557 = vadd.f32 %v2478, %v2556
    %v2558 = vpop.f32.mrf.mxu0
    %2559 = vmatprep.mubr.f32.mxu0 0.0
    %2560 = vmatmul.mubr.f32.gmra.mxu0 %v158
    %v2561 = vpop.f32.mrf.mxu0
    %v2562 = vadd.f32 %v2478, %v2561
    %v2563 = vpop.f32.mrf.mxu0
    %2564 = vdwg.mxu0
    %s2565 = scalar_lea.vmem %s5, 96
    %v2566 = vld [vmem:[%s2565] sm:$0xff]
    %v2567 = vld [vmem:[%s2565 + $0x8] sm:$0xff]
    %v2568 = vld [vmem:[%s2565 + $0x10] sm:$0xff]
    %v2569 = vld [vmem:[%s2565 + $0x18] sm:$0xff]
    %s2570 = scalar_lea.vmem %s6, 3
    %v2571 = vld [vmem:[%s2570] sm:$0x1]
    %v2573 = vlaneseq
    %v2574 = vshrl.u32 %v2573, 7
    %v2575 = vsub.s32 0, %v2574
    %v2576 = vrot.slane %v2571, %v2575
    %2578 = vmatprep.subr.mxu0 0.0
    %2579 = vmatpush1.msra.mxu0 0.0
    %2580 = vmatprep.subr.mxu0 0.0
    %2581 = vmatpush1.msra.mxu0 0.0
    %2582 = vmatprep.subr.mxu0 0.0
    %2583 = vmatpush1.msra.mxu0 0.0
    %2584 = vmatprep.subr.mxu0 0.0
    %2585 = vmatpush1.msra.mxu0 0.0
    %2586 = vmatprep.subr.mxu0 0.0
    %2587 = vmatpush1.msra.mxu0 0.0
    %2588 = vmatprep.subr.mxu0 0.0
    %2589 = vmatpush1.msra.mxu0 0.0
    %2590 = vmatprep.subr.mxu0 0.0
    %2591 = vmatpush1.msra.mxu0 0.0
    %2592 = vmatprep.subr.mxu0 0.0
    %2593 = vmatpush1.msra.mxu0 0.0
    %2594 = vmatprep.subr.mxu0 0.0
    %2595 = vmatpush1.msra.mxu0 0.0
    %2596 = vmatprep.subr.mxu0 0.0
    %2597 = vmatpush1.msra.mxu0 0.0
    %2598 = vmatprep.subr.mxu0 0.0
    %2599 = vmatpush1.msra.mxu0 0.0
    %2600 = vmatprep.subr.mxu0 0.0
    %2601 = vmatpush1.msra.mxu0 0.0
    %2602 = vmatprep.subr.mxu0 0.0
    %2603 = vmatpush1.msra.mxu0 %v2569
    %2604 = vmatprep.subr.mxu0 0.0
    %2605 = vmatpush1.msra.mxu0 %v2568
    %2606 = vmatprep.subr.mxu0 0.0
    %2607 = vmatpush1.msra.mxu0 %v2567
    %2608 = vmatprep.subr.mxu0 0.0
    %2609 = vmatpush1.msra.mxu0 %v2566
    %2610 = vmatprep.subr.mxu0 0.0
    %2611 = vmatpush2.msra.mxu0 0.0
    %2612 = vmatprep.subr.mxu0 0.0
    %2613 = vmatpush2.msra.mxu0 0.0
    %2614 = vmatprep.subr.mxu0 0.0
    %2615 = vmatpush2.msra.mxu0 0.0
    %2616 = vmatprep.subr.mxu0 0.0
    %2617 = vmatpush2.msra.mxu0 0.0
    %2618 = vmatprep.subr.mxu0 0.0
    %2619 = vmatpush2.msra.mxu0 0.0
    %2620 = vmatprep.subr.mxu0 0.0
    %2621 = vmatpush2.msra.mxu0 0.0
    %2622 = vmatprep.subr.mxu0 0.0
    %2623 = vmatpush2.msra.mxu0 0.0
    %2624 = vmatprep.subr.mxu0 0.0
    %2625 = vmatpush2.msra.mxu0 0.0
    %2626 = vmatprep.subr.mxu0 0.0
    %2627 = vmatpush2.msra.mxu0 0.0
    %2628 = vmatprep.subr.mxu0 0.0
    %2629 = vmatpush2.msra.mxu0 0.0
    %2630 = vmatprep.subr.mxu0 0.0
    %2631 = vmatpush2.msra.mxu0 0.0
    %2632 = vmatprep.subr.mxu0 0.0
    %2633 = vmatpush2.msra.mxu0 0.0
    %2634 = vmatprep.subr.mxu0 0.0
    %2635 = vmatpush2.msra.mxu0 0.0
    %2636 = vmatprep.subr.mxu0 0.0
    %2637 = vmatpush2.msra.mxu0 0.0
    %2638 = vmatprep.subr.mxu0 0.0
    %2639 = vmatpush2.msra.mxu0 0.0
    %2640 = vmatprep.subr.mxu0 0.0
    %2641 = vmatpush2.msra.mxu0 0.0
    %2642 = vmatprep.mubr.f32.mxu0 0.0
    %2643 = vmatmul.mubr.f32.gmra.mxu0 %v149
    %v2644 = vpop.f32.mrf.mxu0
    %v2645 = vadd.f32 %v2576, %v2644
    %v2646 = vpop.f32.mrf.mxu0
    %2647 = vmatprep.mubr.f32.mxu0 0.0
    %2648 = vmatmul.mubr.f32.gmra.mxu0 %v152
    %v2649 = vpop.f32.mrf.mxu0
    %v2650 = vadd.f32 %v2576, %v2649
    %v2651 = vpop.f32.mrf.mxu0
    %2652 = vmatprep.mubr.f32.mxu0 0.0
    %2653 = vmatmul.mubr.f32.gmra.mxu0 %v155
    %v2654 = vpop.f32.mrf.mxu0
    %v2655 = vadd.f32 %v2576, %v2654
    %v2656 = vpop.f32.mrf.mxu0
    %2657 = vmatprep.mubr.f32.mxu0 0.0
    %2658 = vmatmul.mubr.f32.gmra.mxu0 %v158
    %v2659 = vpop.f32.mrf.mxu0
    %v2660 = vadd.f32 %v2576, %v2659
    %v2661 = vpop.f32.mrf.mxu0
    %2662 = vdwg.mxu0
    %s2663 = scalar_lea.vmem %s7, 96
    %v2664 = vld [vmem:[%s2663] sm:$0xff]
    %v2665 = vld [vmem:[%s2663 + $0x8] sm:$0xff]
    %v2666 = vld [vmem:[%s2663 + $0x10] sm:$0xff]
    %v2667 = vld [vmem:[%s2663 + $0x18] sm:$0xff]
    %s2668 = scalar_lea.vmem %s8, 3
    %v2669 = vld [vmem:[%s2668] sm:$0x1]
    %v2671 = vlaneseq
    %v2672 = vshrl.u32 %v2671, 7
    %v2673 = vsub.s32 0, %v2672
    %v2674 = vrot.slane %v2669, %v2673
    %2676 = vmatprep.subr.mxu0 0.0
    %2677 = vmatpush1.msra.mxu0 0.0
    %2678 = vmatprep.subr.mxu0 0.0
    %2679 = vmatpush1.msra.mxu0 0.0
    %2680 = vmatprep.subr.mxu0 0.0
    %2681 = vmatpush1.msra.mxu0 0.0
    %2682 = vmatprep.subr.mxu0 0.0
    %2683 = vmatpush1.msra.mxu0 0.0
    %2684 = vmatprep.subr.mxu0 0.0
    %2685 = vmatpush1.msra.mxu0 0.0
    %2686 = vmatprep.subr.mxu0 0.0
    %2687 = vmatpush1.msra.mxu0 0.0
    %2688 = vmatprep.subr.mxu0 0.0
    %2689 = vmatpush1.msra.mxu0 0.0
    %2690 = vmatprep.subr.mxu0 0.0
    %2691 = vmatpush1.msra.mxu0 0.0
    %2692 = vmatprep.subr.mxu0 0.0
    %2693 = vmatpush1.msra.mxu0 0.0
    %2694 = vmatprep.subr.mxu0 0.0
    %2695 = vmatpush1.msra.mxu0 0.0
    %2696 = vmatprep.subr.mxu0 0.0
    %2697 = vmatpush1.msra.mxu0 0.0
    %2698 = vmatprep.subr.mxu0 0.0
    %2699 = vmatpush1.msra.mxu0 0.0
    %2700 = vmatprep.subr.mxu0 0.0
    %2701 = vmatpush1.msra.mxu0 %v2667
    %2702 = vmatprep.subr.mxu0 0.0
    %2703 = vmatpush1.msra.mxu0 %v2666
    %2704 = vmatprep.subr.mxu0 0.0
    %2705 = vmatpush1.msra.mxu0 %v2665
    %2706 = vmatprep.subr.mxu0 0.0
    %2707 = vmatpush1.msra.mxu0 %v2664
    %2708 = vmatprep.subr.mxu0 0.0
    %2709 = vmatpush2.msra.mxu0 0.0
    %2710 = vmatprep.subr.mxu0 0.0
    %2711 = vmatpush2.msra.mxu0 0.0
    %2712 = vmatprep.subr.mxu0 0.0
    %2713 = vmatpush2.msra.mxu0 0.0
    %2714 = vmatprep.subr.mxu0 0.0
    %2715 = vmatpush2.msra.mxu0 0.0
    %2716 = vmatprep.subr.mxu0 0.0
    %2717 = vmatpush2.msra.mxu0 0.0
    %2718 = vmatprep.subr.mxu0 0.0
    %2719 = vmatpush2.msra.mxu0 0.0
    %2720 = vmatprep.subr.mxu0 0.0
    %2721 = vmatpush2.msra.mxu0 0.0
    %2722 = vmatprep.subr.mxu0 0.0
    %2723 = vmatpush2.msra.mxu0 0.0
    %2724 = vmatprep.subr.mxu0 0.0
    %2725 = vmatpush2.msra.mxu0 0.0
    %2726 = vmatprep.subr.mxu0 0.0
    %2727 = vmatpush2.msra.mxu0 0.0
    %2728 = vmatprep.subr.mxu0 0.0
    %2729 = vmatpush2.msra.mxu0 0.0
    %2730 = vmatprep.subr.mxu0 0.0
    %2731 = vmatpush2.msra.mxu0 0.0
    %2732 = vmatprep.subr.mxu0 0.0
    %2733 = vmatpush2.msra.mxu0 0.0
    %2734 = vmatprep.subr.mxu0 0.0
    %2735 = vmatpush2.msra.mxu0 0.0
    %2736 = vmatprep.subr.mxu0 0.0
    %2737 = vmatpush2.msra.mxu0 0.0
    %2738 = vmatprep.subr.mxu0 0.0
    %2739 = vmatpush2.msra.mxu0 0.0
    %2740 = vmatprep.mubr.f32.mxu0 0.0
    %2741 = vmatmul.mubr.f32.gmra.mxu0 %v149
    %v2742 = vpop.f32.mrf.mxu0
    %v2743 = vadd.f32 %v2674, %v2742
    %v2744 = vpop.f32.mrf.mxu0
    %2745 = vmatprep.mubr.f32.mxu0 0.0
    %2746 = vmatmul.mubr.f32.gmra.mxu0 %v152
    %v2747 = vpop.f32.mrf.mxu0
    %v2748 = vadd.f32 %v2674, %v2747
    %v2749 = vpop.f32.mrf.mxu0
    %2750 = vmatprep.mubr.f32.mxu0 0.0
    %2751 = vmatmul.mubr.f32.gmra.mxu0 %v155
    %v2752 = vpop.f32.mrf.mxu0
    %v2753 = vadd.f32 %v2674, %v2752
    %v2754 = vpop.f32.mrf.mxu0
    %2755 = vmatprep.mubr.f32.mxu0 0.0
    %2756 = vmatmul.mubr.f32.gmra.mxu0 %v158
    %v2757 = vpop.f32.mrf.mxu0
    %v2758 = vadd.f32 %v2674, %v2757
    %v2759 = vpop.f32.mrf.mxu0
    %2760 = vdwg.mxu0
    %v2762 = vsel %vm437, %v2547, 0
    %v2765 = vsel %vm437, %v2552, 0
    %v2768 = vsel %vm437, %v2645, 0
    %v2771 = vsel %vm437, %v2650, 0
    %2773 = vmatprep.subr.mxu0 0.0
    %2774 = vmatpush1.xpose.msra.mxu0 0.0
    %2775 = vmatprep.subr.mxu0 0.0
    %2776 = vmatpush1.xpose.msra.mxu0 0.0
    %2777 = vmatprep.subr.mxu0 0.0
    %2778 = vmatpush1.xpose.msra.mxu0 0.0
    %2779 = vmatprep.subr.mxu0 0.0
    %2780 = vmatpush1.xpose.msra.mxu0 0.0
    %2781 = vmatprep.subr.mxu0 0.0
    %2782 = vmatpush1.xpose.msra.mxu0 0.0
    %2783 = vmatprep.subr.mxu0 0.0
    %2784 = vmatpush1.xpose.msra.mxu0 0.0
    %2785 = vmatprep.subr.mxu0 0.0
    %2786 = vmatpush1.xpose.msra.mxu0 0.0
    %2787 = vmatprep.subr.mxu0 0.0
    %2788 = vmatpush1.xpose.msra.mxu0 0.0
    %2789 = vmatprep.subr.mxu0 0.0
    %2790 = vmatpush1.xpose.msra.mxu0 0.0
    %2791 = vmatprep.subr.mxu0 0.0
    %2792 = vmatpush1.xpose.msra.mxu0 0.0
    %2793 = vmatprep.subr.mxu0 0.0
    %2794 = vmatpush1.xpose.msra.mxu0 0.0
    %2795 = vmatprep.subr.mxu0 0.0
    %2796 = vmatpush1.xpose.msra.mxu0 0.0
    %2797 = vmatprep.subr.mxu0 0.0
    %2798 = vmatpush1.xpose.msra.mxu0 0.0
    %2799 = vmatprep.subr.mxu0 0.0
    %2800 = vmatpush1.xpose.msra.mxu0 0.0
    %2801 = vmatprep.subr.mxu0 0.0
    %2802 = vmatpush1.xpose.msra.mxu0 %v2771
    %2803 = vmatprep.subr.mxu0 0.0
    %2804 = vmatpush1.xpose.msra.mxu0 %v2768
    %2805 = vmatprep.subr.mxu0 0.0
    %2806 = vmatpush2.xpose.msra.mxu0 0.0
    %2807 = vmatprep.subr.mxu0 0.0
    %2808 = vmatpush2.xpose.msra.mxu0 0.0
    %2809 = vmatprep.subr.mxu0 0.0
    %2810 = vmatpush2.xpose.msra.mxu0 0.0
    %2811 = vmatprep.subr.mxu0 0.0
    %2812 = vmatpush2.xpose.msra.mxu0 0.0
    %2813 = vmatprep.subr.mxu0 0.0
    %2814 = vmatpush2.xpose.msra.mxu0 0.0
    %2815 = vmatprep.subr.mxu0 0.0
    %2816 = vmatpush2.xpose.msra.mxu0 0.0
    %2817 = vmatprep.subr.mxu0 0.0
    %2818 = vmatpush2.xpose.msra.mxu0 0.0
    %2819 = vmatprep.subr.mxu0 0.0
    %2820 = vmatpush2.xpose.msra.mxu0 0.0
    %2821 = vmatprep.subr.mxu0 0.0
    %2822 = vmatpush2.xpose.msra.mxu0 0.0
    %2823 = vmatprep.subr.mxu0 0.0
    %2824 = vmatpush2.xpose.msra.mxu0 0.0
    %2825 = vmatprep.subr.mxu0 0.0
    %2826 = vmatpush2.xpose.msra.mxu0 0.0
    %2827 = vmatprep.subr.mxu0 0.0
    %2828 = vmatpush2.xpose.msra.mxu0 0.0
    %2829 = vmatprep.subr.mxu0 0.0
    %2830 = vmatpush2.xpose.msra.mxu0 0.0
    %2831 = vmatprep.subr.mxu0 0.0
    %2832 = vmatpush2.xpose.msra.mxu0 0.0
    %2833 = vmatprep.subr.mxu0 0.0
    %2834 = vmatpush2.xpose.msra.mxu0 0.0
    %2835 = vmatprep.subr.mxu0 0.0
    %2836 = vmatpush2.xpose.msra.mxu0 0.0
    %2837 = vmatprep.mubr.f32.mxu0 0.0
    %2838 = vmatmul.mubr.f32.gmra.mxu0 %v2762
    %v2839 = vpop.f32.mrf.mxu0
    %v2840 = vadd.f32 0.0, %v2839
    %v2841 = vpop.f32.mrf.mxu0
    %2842 = vmatprep.mubr.f32.mxu0 0.0
    %2843 = vmatmul.mubr.f32.gmra.mxu0 %v2765
    %v2844 = vpop.f32.mrf.mxu0
    %v2845 = vadd.f32 0.0, %v2844
    %v2846 = vpop.f32.mrf.mxu0
    %2847 = vdwg.mxu0
    %v2849 = vsel %vm437, %v2557, 0
    %v2852 = vsel %vm437, %v2562, 0
    %v2855 = vsel %vm437, %v2655, 0
    %v2858 = vsel %vm437, %v2660, 0
    %2860 = vmatprep.subr.mxu0 0.0
    %2861 = vmatpush1.xpose.msra.mxu0 0.0
    %2862 = vmatprep.subr.mxu0 0.0
    %2863 = vmatpush1.xpose.msra.mxu0 0.0
    %2864 = vmatprep.subr.mxu0 0.0
    %2865 = vmatpush1.xpose.msra.mxu0 0.0
    %2866 = vmatprep.subr.mxu0 0.0
    %2867 = vmatpush1.xpose.msra.mxu0 0.0
    %2868 = vmatprep.subr.mxu0 0.0
    %2869 = vmatpush1.xpose.msra.mxu0 0.0
    %2870 = vmatprep.subr.mxu0 0.0
    %2871 = vmatpush1.xpose.msra.mxu0 0.0
    %2872 = vmatprep.subr.mxu0 0.0
    %2873 = vmatpush1.xpose.msra.mxu0 0.0
    %2874 = vmatprep.subr.mxu0 0.0
    %2875 = vmatpush1.xpose.msra.mxu0 0.0
    %2876 = vmatprep.subr.mxu0 0.0
    %2877 = vmatpush1.xpose.msra.mxu0 0.0
    %2878 = vmatprep.subr.mxu0 0.0
    %2879 = vmatpush1.xpose.msra.mxu0 0.0
    %2880 = vmatprep.subr.mxu0 0.0
    %2881 = vmatpush1.xpose.msra.mxu0 0.0
    %2882 = vmatprep.subr.mxu0 0.0
    %2883 = vmatpush1.xpose.msra.mxu0 0.0
    %2884 = vmatprep.subr.mxu0 0.0
    %2885 = vmatpush1.xpose.msra.mxu0 0.0
    %2886 = vmatprep.subr.mxu0 0.0
    %2887 = vmatpush1.xpose.msra.mxu0 0.0
    %2888 = vmatprep.subr.mxu0 0.0
    %2889 = vmatpush1.xpose.msra.mxu0 %v2858
    %2890 = vmatprep.subr.mxu0 0.0
    %2891 = vmatpush1.xpose.msra.mxu0 %v2855
    %2892 = vmatprep.subr.mxu0 0.0
    %2893 = vmatpush2.xpose.msra.mxu0 0.0
    %2894 = vmatprep.subr.mxu0 0.0
    %2895 = vmatpush2.xpose.msra.mxu0 0.0
    %2896 = vmatprep.subr.mxu0 0.0
    %2897 = vmatpush2.xpose.msra.mxu0 0.0
    %2898 = vmatprep.subr.mxu0 0.0
    %2899 = vmatpush2.xpose.msra.mxu0 0.0
    %2900 = vmatprep.subr.mxu0 0.0
    %2901 = vmatpush2.xpose.msra.mxu0 0.0
    %2902 = vmatprep.subr.mxu0 0.0
    %2903 = vmatpush2.xpose.msra.mxu0 0.0
    %2904 = vmatprep.subr.mxu0 0.0
    %2905 = vmatpush2.xpose.msra.mxu0 0.0
    %2906 = vmatprep.subr.mxu0 0.0
    %2907 = vmatpush2.xpose.msra.mxu0 0.0
    %2908 = vmatprep.subr.mxu0 0.0
    %2909 = vmatpush2.xpose.msra.mxu0 0.0
    %2910 = vmatprep.subr.mxu0 0.0
    %2911 = vmatpush2.xpose.msra.mxu0 0.0
    %2912 = vmatprep.subr.mxu0 0.0
    %2913 = vmatpush2.xpose.msra.mxu0 0.0
    %2914 = vmatprep.subr.mxu0 0.0
    %2915 = vmatpush2.xpose.msra.mxu0 0.0
    %2916 = vmatprep.subr.mxu0 0.0
    %2917 = vmatpush2.xpose.msra.mxu0 0.0
    %2918 = vmatprep.subr.mxu0 0.0
    %2919 = vmatpush2.xpose.msra.mxu0 0.0
    %2920 = vmatprep.subr.mxu0 0.0
    %2921 = vmatpush2.xpose.msra.mxu0 0.0
    %2922 = vmatprep.subr.mxu0 0.0
    %2923 = vmatpush2.xpose.msra.mxu0 0.0
    %2924 = vmatprep.mubr.f32.mxu0 0.0
    %2925 = vmatmul.mubr.f32.gmra.mxu0 %v2849
    %v2926 = vpop.f32.mrf.mxu0
    %v2927 = vadd.f32 0.0, %v2926
    %v2928 = vpop.f32.mrf.mxu0
    %2929 = vmatprep.mubr.f32.mxu0 0.0
    %2930 = vmatmul.mubr.f32.gmra.mxu0 %v2852
    %v2931 = vpop.f32.mrf.mxu0
    %v2932 = vadd.f32 0.0, %v2931
    %v2933 = vpop.f32.mrf.mxu0
    %2934 = vdwg.mxu0
    %v2935 = vsel %vm612, %v2840, -inf
    %2936 = vmax.xlane.f32.xlu0 %v2935
    %v2937 = vpop.xlane.xlu0 %2936
    %v2938 = vsel %vm612, %v2845, -inf
    %2939 = vmax.xlane.f32.xlu0 %v2938
    %v2940 = vpop.xlane.xlu0 %2939
    %v2941 = vsel %vm612, %v2927, -inf
    %2942 = vmax.xlane.f32.xlu0 %v2941
    %v2943 = vpop.xlane.xlu0 %2942
    %v2944 = vsel %vm612, %v2932, -inf
    %2945 = vmax.xlane.f32.xlu0 %v2944
    %v2946 = vpop.xlane.xlu0 %2945
    %v2947 = vsub.f32 %v2840, %v2937
    %v2948 = vsub.f32 %v2845, %v2940
    %v2949 = vsub.f32 %v2927, %v2943
    %v2950 = vsub.f32 %v2932, %v2946
    %v2951 = vmul.f32 %v2947, 1.442695
    %v2952 = vpow.pop %v2951
    %v2953 = vmul.f32 %v2948, 1.442695
    %v2954 = vpow.pop %v2953
    %v2955 = vmul.f32 %v2949, 1.442695
    %v2956 = vpow.pop %v2955
    %v2957 = vmul.f32 %v2950, 1.442695
    %v2958 = vpow.pop %v2957
    %v2959 = vsel %vm612, %v2952, 0.0
    %2960 = vadd.xlane.f32.xlu0 %v2959
    %v2961 = vpop.xlane.xlu0 %2960
    %v2962 = vsel %vm612, %v2954, 0.0
    %2963 = vadd.xlane.f32.xlu0 %v2962
    %v2964 = vpop.xlane.xlu0 %2963
    %v2965 = vsel %vm612, %v2956, 0.0
    %2966 = vadd.xlane.f32.xlu0 %v2965
    %v2967 = vpop.xlane.xlu0 %2966
    %v2968 = vsel %vm612, %v2958, 0.0
    %2969 = vadd.xlane.f32.xlu0 %v2968
    %v2970 = vpop.xlane.xlu0 %2969
    %v2971 = vrcp.pop %v2961
    %v2972 = vrcp.pop %v2964
    %v2973 = vrcp.pop %v2967
    %v2974 = vrcp.pop %v2970
    %v2975 = vmul.f32 %v2952, %v2971
    %v2976 = vmul.f32 %v2954, %v2972
    %v2977 = vmul.f32 %v2956, %v2973
    %v2978 = vmul.f32 %v2958, %v2974
    %v2980 = vsel %vm612, %v2975, 0
    %v2983 = vsel %vm612, %v2976, 0
    %2985 = vmatprep.subr.mxu0 0.0
    %2986 = vmatpush1.msra.mxu0 0.0
    %2987 = vmatprep.subr.mxu0 0.0
    %2988 = vmatpush1.msra.mxu0 0.0
    %2989 = vmatprep.subr.mxu0 0.0
    %2990 = vmatpush1.msra.mxu0 0.0
    %2991 = vmatprep.subr.mxu0 0.0
    %2992 = vmatpush1.msra.mxu0 0.0
    %2993 = vmatprep.subr.mxu0 0.0
    %2994 = vmatpush1.msra.mxu0 0.0
    %2995 = vmatprep.subr.mxu0 0.0
    %2996 = vmatpush1.msra.mxu0 0.0
    %2997 = vmatprep.subr.mxu0 0.0
    %2998 = vmatpush1.msra.mxu0 0.0
    %2999 = vmatprep.subr.mxu0 0.0
    %3000 = vmatpush1.msra.mxu0 0.0
    %3001 = vmatprep.subr.mxu0 0.0
    %3002 = vmatpush1.msra.mxu0 0.0
    %3003 = vmatprep.subr.mxu0 0.0
    %3004 = vmatpush1.msra.mxu0 0.0
    %3005 = vmatprep.subr.mxu0 0.0
    %3006 = vmatpush1.msra.mxu0 0.0
    %3007 = vmatprep.subr.mxu0 0.0
    %3008 = vmatpush1.msra.mxu0 0.0
    %3009 = vmatprep.subr.mxu0 0.0
    %3010 = vmatpush1.msra.mxu0 0.0
    %3011 = vmatprep.subr.mxu0 0.0
    %3012 = vmatpush1.msra.mxu0 0.0
    %3013 = vmatprep.subr.mxu0 0.0
    %3014 = vmatpush1.msra.mxu0 %v2748
    %3015 = vmatprep.subr.mxu0 0.0
    %3016 = vmatpush1.msra.mxu0 %v2743
    %3017 = vmatprep.subr.mxu0 0.0
    %3018 = vmatpush2.msra.mxu0 0.0
    %3019 = vmatprep.subr.mxu0 0.0
    %3020 = vmatpush2.msra.mxu0 0.0
    %3021 = vmatprep.subr.mxu0 0.0
    %3022 = vmatpush2.msra.mxu0 0.0
    %3023 = vmatprep.subr.mxu0 0.0
    %3024 = vmatpush2.msra.mxu0 0.0
    %3025 = vmatprep.subr.mxu0 0.0
    %3026 = vmatpush2.msra.mxu0 0.0
    %3027 = vmatprep.subr.mxu0 0.0
    %3028 = vmatpush2.msra.mxu0 0.0
    %3029 = vmatprep.subr.mxu0 0.0
    %3030 = vmatpush2.msra.mxu0 0.0
    %3031 = vmatprep.subr.mxu0 0.0
    %3032 = vmatpush2.msra.mxu0 0.0
    %3033 = vmatprep.subr.mxu0 0.0
    %3034 = vmatpush2.msra.mxu0 0.0
    %3035 = vmatprep.subr.mxu0 0.0
    %3036 = vmatpush2.msra.mxu0 0.0
    %3037 = vmatprep.subr.mxu0 0.0
    %3038 = vmatpush2.msra.mxu0 0.0
    %3039 = vmatprep.subr.mxu0 0.0
    %3040 = vmatpush2.msra.mxu0 0.0
    %3041 = vmatprep.subr.mxu0 0.0
    %3042 = vmatpush2.msra.mxu0 0.0
    %3043 = vmatprep.subr.mxu0 0.0
    %3044 = vmatpush2.msra.mxu0 0.0
    %3045 = vmatprep.subr.mxu0 0.0
    %3046 = vmatpush2.msra.mxu0 0.0
    %3047 = vmatprep.subr.mxu0 0.0
    %3048 = vmatpush2.msra.mxu0 0.0
    %3049 = vmatprep.mubr.f32.mxu0 0.0
    %3050 = vmatmul.mubr.f32.gmra.mxu0 %v2980
    %v3051 = vpop.f32.mrf.mxu0
    %v3052 = vadd.f32 0.0, %v3051
    %v3053 = vpop.f32.mrf.mxu0
    %3054 = vmatprep.mubr.f32.mxu0 0.0
    %3055 = vmatmul.mubr.f32.gmra.mxu0 %v2983
    %v3056 = vpop.f32.mrf.mxu0
    %v3057 = vadd.f32 0.0, %v3056
    %v3058 = vpop.f32.mrf.mxu0
    %3059 = vdwg.mxu0
    %v3061 = vsel %vm612, %v2977, 0
    %v3064 = vsel %vm612, %v2978, 0
    %3066 = vmatprep.subr.mxu0 0.0
    %3067 = vmatpush1.msra.mxu0 0.0
    %3068 = vmatprep.subr.mxu0 0.0
    %3069 = vmatpush1.msra.mxu0 0.0
    %3070 = vmatprep.subr.mxu0 0.0
    %3071 = vmatpush1.msra.mxu0 0.0
    %3072 = vmatprep.subr.mxu0 0.0
    %3073 = vmatpush1.msra.mxu0 0.0
    %3074 = vmatprep.subr.mxu0 0.0
    %3075 = vmatpush1.msra.mxu0 0.0
    %3076 = vmatprep.subr.mxu0 0.0
    %3077 = vmatpush1.msra.mxu0 0.0
    %3078 = vmatprep.subr.mxu0 0.0
    %3079 = vmatpush1.msra.mxu0 0.0
    %3080 = vmatprep.subr.mxu0 0.0
    %3081 = vmatpush1.msra.mxu0 0.0
    %3082 = vmatprep.subr.mxu0 0.0
    %3083 = vmatpush1.msra.mxu0 0.0
    %3084 = vmatprep.subr.mxu0 0.0
    %3085 = vmatpush1.msra.mxu0 0.0
    %3086 = vmatprep.subr.mxu0 0.0
    %3087 = vmatpush1.msra.mxu0 0.0
    %3088 = vmatprep.subr.mxu0 0.0
    %3089 = vmatpush1.msra.mxu0 0.0
    %3090 = vmatprep.subr.mxu0 0.0
    %3091 = vmatpush1.msra.mxu0 0.0
    %3092 = vmatprep.subr.mxu0 0.0
    %3093 = vmatpush1.msra.mxu0 0.0
    %3094 = vmatprep.subr.mxu0 0.0
    %3095 = vmatpush1.msra.mxu0 %v2758
    %3096 = vmatprep.subr.mxu0 0.0
    %3097 = vmatpush1.msra.mxu0 %v2753
    %3098 = vmatprep.subr.mxu0 0.0
    %3099 = vmatpush2.msra.mxu0 0.0
    %3100 = vmatprep.subr.mxu0 0.0
    %3101 = vmatpush2.msra.mxu0 0.0
    %3102 = vmatprep.subr.mxu0 0.0
    %3103 = vmatpush2.msra.mxu0 0.0
    %3104 = vmatprep.subr.mxu0 0.0
    %3105 = vmatpush2.msra.mxu0 0.0
    %3106 = vmatprep.subr.mxu0 0.0
    %3107 = vmatpush2.msra.mxu0 0.0
    %3108 = vmatprep.subr.mxu0 0.0
    %3109 = vmatpush2.msra.mxu0 0.0
    %3110 = vmatprep.subr.mxu0 0.0
    %3111 = vmatpush2.msra.mxu0 0.0
    %3112 = vmatprep.subr.mxu0 0.0
    %3113 = vmatpush2.msra.mxu0 0.0
    %3114 = vmatprep.subr.mxu0 0.0
    %3115 = vmatpush2.msra.mxu0 0.0
    %3116 = vmatprep.subr.mxu0 0.0
    %3117 = vmatpush2.msra.mxu0 0.0
    %3118 = vmatprep.subr.mxu0 0.0
    %3119 = vmatpush2.msra.mxu0 0.0
    %3120 = vmatprep.subr.mxu0 0.0
    %3121 = vmatpush2.msra.mxu0 0.0
    %3122 = vmatprep.subr.mxu0 0.0
    %3123 = vmatpush2.msra.mxu0 0.0
    %3124 = vmatprep.subr.mxu0 0.0
    %3125 = vmatpush2.msra.mxu0 0.0
    %3126 = vmatprep.subr.mxu0 0.0
    %3127 = vmatpush2.msra.mxu0 0.0
    %3128 = vmatprep.subr.mxu0 0.0
    %3129 = vmatpush2.msra.mxu0 0.0
    %3130 = vmatprep.mubr.f32.mxu0 0.0
    %3131 = vmatmul.mubr.f32.gmra.mxu0 %v3061
    %v3132 = vpop.f32.mrf.mxu0
    %v3133 = vadd.f32 0.0, %v3132
    %v3134 = vpop.f32.mrf.mxu0
    %3135 = vmatprep.mubr.f32.mxu0 0.0
    %3136 = vmatmul.mubr.f32.gmra.mxu0 %v3064
    %v3137 = vpop.f32.mrf.mxu0
    %v3138 = vadd.f32 0.0, %v3137
    %v3139 = vpop.f32.mrf.mxu0
    %3140 = vdwg.mxu0
    %s3141 = scalar_lea.vmem %s9, 24
    %v3142 = vld [vmem:[%s3141] sm:$0xff]
    %v3144 = vsel %vm437, %v3052, 0
    %v3147 = vsel %vm437, %v3057, 0
    %v3150 = vsel %vm437, %v3133, 0
    %v3153 = vsel %vm437, %v3138, 0
    %3155 = vmatprep.subr.mxu0 0.0
    %3156 = vmatpush1.msra.mxu0 0.0
    %3157 = vmatprep.subr.mxu0 0.0
    %3158 = vmatpush1.msra.mxu0 0.0
    %3159 = vmatprep.subr.mxu0 0.0
    %3160 = vmatpush1.msra.mxu0 0.0
    %3161 = vmatprep.subr.mxu0 0.0
    %3162 = vmatpush1.msra.mxu0 0.0
    %3163 = vmatprep.subr.mxu0 0.0
    %3164 = vmatpush1.msra.mxu0 0.0
    %3165 = vmatprep.subr.mxu0 0.0
    %3166 = vmatpush1.msra.mxu0 0.0
    %3167 = vmatprep.subr.mxu0 0.0
    %3168 = vmatpush1.msra.mxu0 0.0
    %3169 = vmatprep.subr.mxu0 0.0
    %3170 = vmatpush1.msra.mxu0 0.0
    %3171 = vmatprep.subr.mxu0 0.0
    %3172 = vmatpush1.msra.mxu0 0.0
    %3173 = vmatprep.subr.mxu0 0.0
    %3174 = vmatpush1.msra.mxu0 0.0
    %3175 = vmatprep.subr.mxu0 0.0
    %3176 = vmatpush1.msra.mxu0 0.0
    %3177 = vmatprep.subr.mxu0 0.0
    %3178 = vmatpush1.msra.mxu0 0.0
    %3179 = vmatprep.subr.mxu0 0.0
    %3180 = vmatpush1.msra.mxu0 0.0
    %3181 = vmatprep.subr.mxu0 0.0
    %3182 = vmatpush1.msra.mxu0 0.0
    %3183 = vmatprep.subr.mxu0 0.0
    %3184 = vmatpush1.msra.mxu0 0.0
    %3185 = vmatprep.subr.mxu0 0.0
    %3186 = vmatpush1.msra.mxu0 %v3142
    %3187 = vmatprep.subr.mxu0 0.0
    %3188 = vmatpush2.msra.mxu0 0.0
    %3189 = vmatprep.subr.mxu0 0.0
    %3190 = vmatpush2.msra.mxu0 0.0
    %3191 = vmatprep.subr.mxu0 0.0
    %3192 = vmatpush2.msra.mxu0 0.0
    %3193 = vmatprep.subr.mxu0 0.0
    %3194 = vmatpush2.msra.mxu0 0.0
    %3195 = vmatprep.subr.mxu0 0.0
    %3196 = vmatpush2.msra.mxu0 0.0
    %3197 = vmatprep.subr.mxu0 0.0
    %3198 = vmatpush2.msra.mxu0 0.0
    %3199 = vmatprep.subr.mxu0 0.0
    %3200 = vmatpush2.msra.mxu0 0.0
    %3201 = vmatprep.subr.mxu0 0.0
    %3202 = vmatpush2.msra.mxu0 0.0
    %3203 = vmatprep.subr.mxu0 0.0
    %3204 = vmatpush2.msra.mxu0 0.0
    %3205 = vmatprep.subr.mxu0 0.0
    %3206 = vmatpush2.msra.mxu0 0.0
    %3207 = vmatprep.subr.mxu0 0.0
    %3208 = vmatpush2.msra.mxu0 0.0
    %3209 = vmatprep.subr.mxu0 0.0
    %3210 = vmatpush2.msra.mxu0 0.0
    %3211 = vmatprep.subr.mxu0 0.0
    %3212 = vmatpush2.msra.mxu0 0.0
    %3213 = vmatprep.subr.mxu0 0.0
    %3214 = vmatpush2.msra.mxu0 0.0
    %3215 = vmatprep.subr.mxu0 0.0
    %3216 = vmatpush2.msra.mxu0 0.0
    %3217 = vmatprep.subr.mxu0 0.0
    %3218 = vmatpush2.msra.mxu0 0.0
    %3219 = vmatprep.mubr.f32.mxu0 0.0
    %3220 = vmatmul.mubr.f32.gmra.mxu0 %v3144
    %v3221 = vpop.f32.mrf.mxu0
    %v3222 = vadd.f32 0.0, %v3221
    %v3223 = vpop.f32.mrf.mxu0
    %3224 = vmatprep.mubr.f32.mxu0 0.0
    %3225 = vmatmul.mubr.f32.gmra.mxu0 %v3147
    %v3226 = vpop.f32.mrf.mxu0
    %v3227 = vadd.f32 0.0, %v3226
    %v3228 = vpop.f32.mrf.mxu0
    %3229 = vmatprep.mubr.f32.mxu0 0.0
    %3230 = vmatmul.mubr.f32.gmra.mxu0 %v3150
    %v3231 = vpop.f32.mrf.mxu0
    %v3232 = vadd.f32 0.0, %v3231
    %v3233 = vpop.f32.mrf.mxu0
    %3234 = vmatprep.mubr.f32.mxu0 0.0
    %3235 = vmatmul.mubr.f32.gmra.mxu0 %v3153
    %v3236 = vpop.f32.mrf.mxu0
    %v3237 = vadd.f32 0.0, %v3236
    %v3238 = vpop.f32.mrf.mxu0
    %3239 = vdwg.mxu0
    %v3240 = vadd.f32 %v2463, %v3222
    %v3241 = vadd.f32 %v2464, %v3227
    %v3242 = vadd.f32 %v2465, %v3232
    %v3243 = vadd.f32 %v2466, %v3237
    %v3244 = vadd.f32 %v57, %v3240
    %v3245 = vadd.f32 %v58, %v3241
    %v3246 = vadd.f32 %v59, %v3242
    %v3247 = vadd.f32 %v60, %v3243
    %v3248 = vld [vmem:[%s10] sm:$0x1]
    %v3250 = vlaneseq
    %v3251 = vshrl.u32 %v3250, 7
    %v3252 = vsub.s32 0, %v3251
    %v3253 = vrot.slane %v3248, %v3252
    %v3255 = vadd.f32 %v3244, %v3253
    %v3256 = vadd.f32 %v3245, %v3253
    %v3257 = vadd.f32 %v3246, %v3253
    %v3258 = vadd.f32 %v3247, %v3253
    %v3259 = vld [vmem:[%s11] sm:$0x1]
    %v3260 = vld [vmem:[%s12] sm:$0x1]
    %v3261 = vsel %vm63, %v3255, 0.0
    %3262 = vadd.xlane.f32.xlu0 %v3261
    %v3263 = vpop.xlane.xlu0 %3262
    %v3264 = vsel %vm63, %v3256, 0.0
    %3265 = vadd.xlane.f32.xlu0 %v3264
    %v3266 = vpop.xlane.xlu0 %3265
    %v3267 = vsel %vm63, %v3257, 0.0
    %3268 = vadd.xlane.f32.xlu0 %v3267
    %v3269 = vpop.xlane.xlu0 %3268
    %v3270 = vsel %vm63, %v3258, 0.0
    %3271 = vadd.xlane.f32.xlu0 %v3270
    %v3272 = vpop.xlane.xlu0 %3271
    %v3273 = vmul.f32 %v3263, %v76
    %v3274 = vmul.f32 %v3266, %v76
    %v3275 = vmul.f32 %v3269, %v76
    %v3276 = vmul.f32 %v3272, %v76
    %v3277 = vsub.f32 %v3255, %v3273
    %v3278 = vsub.f32 %v3256, %v3274
    %v3279 = vsub.f32 %v3257, %v3275
    %v3280 = vsub.f32 %v3258, %v3276
    %v3281 = vmul.f32 %v3277, %v3277
    %v3282 = vmul.f32 %v3278, %v3278
    %v3283 = vmul.f32 %v3279, %v3279
    %v3284 = vmul.f32 %v3280, %v3280
    %v3285 = vsel %vm63, %v3281, 0.0
    %3286 = vadd.xlane.f32.xlu0 %v3285
    %v3287 = vpop.xlane.xlu0 %3286
    %v3288 = vsel %vm63, %v3282, 0.0
    %3289 = vadd.xlane.f32.xlu0 %v3288
    %v3290 = vpop.xlane.xlu0 %3289
    %v3291 = vsel %vm63, %v3283, 0.0
    %3292 = vadd.xlane.f32.xlu0 %v3291
    %v3293 = vpop.xlane.xlu0 %3292
    %v3294 = vsel %vm63, %v3284, 0.0
    %3295 = vadd.xlane.f32.xlu0 %v3294
    %v3296 = vpop.xlane.xlu0 %3295
    %v3297 = vmul.f32 %v3287, %v76
    %v3298 = vmul.f32 %v3290, %v76
    %v3299 = vmul.f32 %v3293, %v76
    %v3300 = vmul.f32 %v3296, %v76
    %v3301 = vadd.f32 %v3297, 1e-05
    %v3302 = vadd.f32 %v3298, 1e-05
    %v3303 = vadd.f32 %v3299, 1e-05
    %v3304 = vadd.f32 %v3300, 1e-05
    %v3305 = vrsqrt.pop %v3301
    %v3306 = vrsqrt.pop %v3302
    %v3307 = vrsqrt.pop %v3303
    %v3308 = vrsqrt.pop %v3304
    %v3309 = vmul.f32 %v3277, %v3305
    %v3310 = vmul.f32 %v3278, %v3306
    %v3311 = vmul.f32 %v3279, %v3307
    %v3312 = vmul.f32 %v3280, %v3308
    %v3314 = vlaneseq
    %v3315 = vshrl.u32 %v3314, 7
    %v3316 = vsub.s32 0, %v3315
    %v3317 = vrot.slane %v3259, %v3316
    %v3319 = vmul.f32 %v3309, %v3317
    %v3320 = vmul.f32 %v3310, %v3317
    %v3321 = vmul.f32 %v3311, %v3317
    %v3322 = vmul.f32 %v3312, %v3317
    %v3324 = vlaneseq
    %v3325 = vshrl.u32 %v3324, 7
    %v3326 = vsub.s32 0, %v3325
    %v3327 = vrot.slane %v3260, %v3326
    %v3329 = vadd.f32 %v3319, %v3327
    %v3330 = vadd.f32 %v3320, %v3327
    %v3331 = vadd.f32 %v3321, %v3327
    %v3332 = vadd.f32 %v3322, %v3327
    %v3333 = vld [vmem:[%s13] sm:$0xff]
    %v3334 = vld [vmem:[%s13 + $0x8] sm:$0xff]
    %v3335 = vld [vmem:[%s13 + $0x10] sm:$0xff]
    %v3336 = vld [vmem:[%s13 + $0x18] sm:$0xff]
    %v3337 = vld [vmem:[%s14] sm:$0x1]
    %v3339 = vlaneseq
    %v3340 = vshrl.u32 %v3339, 7
    %v3341 = vsub.s32 0, %v3340
    %v3342 = vrot.slane %v3337, %v3341
    %v3345 = vsel %vm63, %v3329, 0
    %v3348 = vsel %vm63, %v3330, 0
    %v3351 = vsel %vm63, %v3331, 0
    %v3354 = vsel %vm63, %v3332, 0
    %3356 = vmatprep.subr.mxu0 0.0
    %3357 = vmatpush1.msra.mxu0 0.0
    %3358 = vmatprep.subr.mxu0 0.0
    %3359 = vmatpush1.msra.mxu0 0.0
    %3360 = vmatprep.subr.mxu0 0.0
    %3361 = vmatpush1.msra.mxu0 0.0
    %3362 = vmatprep.subr.mxu0 0.0
    %3363 = vmatpush1.msra.mxu0 0.0
    %3364 = vmatprep.subr.mxu0 0.0
    %3365 = vmatpush1.msra.mxu0 0.0
    %3366 = vmatprep.subr.mxu0 0.0
    %3367 = vmatpush1.msra.mxu0 0.0
    %3368 = vmatprep.subr.mxu0 0.0
    %3369 = vmatpush1.msra.mxu0 0.0
    %3370 = vmatprep.subr.mxu0 0.0
    %3371 = vmatpush1.msra.mxu0 0.0
    %3372 = vmatprep.subr.mxu0 0.0
    %3373 = vmatpush1.msra.mxu0 0.0
    %3374 = vmatprep.subr.mxu0 0.0
    %3375 = vmatpush1.msra.mxu0 0.0
    %3376 = vmatprep.subr.mxu0 0.0
    %3377 = vmatpush1.msra.mxu0 0.0
    %3378 = vmatprep.subr.mxu0 0.0
    %3379 = vmatpush1.msra.mxu0 0.0
    %3380 = vmatprep.subr.mxu0 0.0
    %3381 = vmatpush1.msra.mxu0 %v3336
    %3382 = vmatprep.subr.mxu0 0.0
    %3383 = vmatpush1.msra.mxu0 %v3335
    %3384 = vmatprep.subr.mxu0 0.0
    %3385 = vmatpush1.msra.mxu0 %v3334
    %3386 = vmatprep.subr.mxu0 0.0
    %3387 = vmatpush1.msra.mxu0 %v3333
    %3388 = vmatprep.subr.mxu0 0.0
    %3389 = vmatpush2.msra.mxu0 0.0
    %3390 = vmatprep.subr.mxu0 0.0
    %3391 = vmatpush2.msra.mxu0 0.0
    %3392 = vmatprep.subr.mxu0 0.0
    %3393 = vmatpush2.msra.mxu0 0.0
    %3394 = vmatprep.subr.mxu0 0.0
    %3395 = vmatpush2.msra.mxu0 0.0
    %3396 = vmatprep.subr.mxu0 0.0
    %3397 = vmatpush2.msra.mxu0 0.0
    %3398 = vmatprep.subr.mxu0 0.0
    %3399 = vmatpush2.msra.mxu0 0.0
    %3400 = vmatprep.subr.mxu0 0.0
    %3401 = vmatpush2.msra.mxu0 0.0
    %3402 = vmatprep.subr.mxu0 0.0
    %3403 = vmatpush2.msra.mxu0 0.0
    %3404 = vmatprep.subr.mxu0 0.0
    %3405 = vmatpush2.msra.mxu0 0.0
    %3406 = vmatprep.subr.mxu0 0.0
    %3407 = vmatpush2.msra.mxu0 0.0
    %3408 = vmatprep.subr.mxu0 0.0
    %3409 = vmatpush2.msra.mxu0 0.0
    %3410 = vmatprep.subr.mxu0 0.0
    %3411 = vmatpush2.msra.mxu0 0.0
    %3412 = vmatprep.subr.mxu0 0.0
    %3413 = vmatpush2.msra.mxu0 0.0
    %3414 = vmatprep.subr.mxu0 0.0
    %3415 = vmatpush2.msra.mxu0 0.0
    %3416 = vmatprep.subr.mxu0 0.0
    %3417 = vmatpush2.msra.mxu0 0.0
    %3418 = vmatprep.subr.mxu0 0.0
    %3419 = vmatpush2.msra.mxu0 0.0
    %3420 = vmatprep.mubr.f32.mxu0 0.0
    %3421 = vmatmul.mubr.f32.gmra.mxu0 %v3345
    %v3422 = vpop.f32.mrf.mxu0
    %v3423 = vadd.f32 %v3342, %v3422
    %v3424 = vpop.f32.mrf.mxu0
    %3425 = vmatprep.mubr.f32.mxu0 0.0
    %3426 = vmatmul.mubr.f32.gmra.mxu0 %v3348
    %v3427 = vpop.f32.mrf.mxu0
    %v3428 = vadd.f32 %v3342, %v3427
    %v3429 = vpop.f32.mrf.mxu0
    %3430 = vmatprep.mubr.f32.mxu0 0.0
    %3431 = vmatmul.mubr.f32.gmra.mxu0 %v3351
    %v3432 = vpop.f32.mrf.mxu0
    %v3433 = vadd.f32 %v3342, %v3432
    %v3434 = vpop.f32.mrf.mxu0
    %3435 = vmatprep.mubr.f32.mxu0 0.0
    %3436 = vmatmul.mubr.f32.gmra.mxu0 %v3354
    %v3437 = vpop.f32.mrf.mxu0
    %v3438 = vadd.f32 %v3342, %v3437
    %v3439 = vpop.f32.mrf.mxu0
    %3440 = vdwg.mxu0
    %v3441 = vmul.f32 %v3423, 0.5
    %v3442 = vmul.f32 %v3428, 0.5
    %v3443 = vmul.f32 %v3433, 0.5
    %v3444 = vmul.f32 %v3438, 0.5
    %v3445 = vmul.f32 %v3423, 0.70710677
    %v3446 = vmul.f32 %v3428, 0.70710677
    %v3447 = vmul.f32 %v3433, 0.70710677
    %v3448 = vmul.f32 %v3438, 0.70710677
    %v3449 = verf.f32.pop %v3445
    %v3450 = verf.f32.pop %v3446
    %v3451 = verf.f32.pop %v3447
    %v3452 = verf.f32.pop %v3448
    %v3453 = vadd.f32 %v3449, 1.0
    %v3454 = vadd.f32 %v3450, 1.0
    %v3455 = vadd.f32 %v3451, 1.0
    %v3456 = vadd.f32 %v3452, 1.0
    %v3457 = vmul.f32 %v3441, %v3453
    %v3458 = vmul.f32 %v3442, %v3454
    %v3459 = vmul.f32 %v3443, %v3455
    %v3460 = vmul.f32 %v3444, %v3456
    %v3461 = vld [vmem:[%s15] sm:$0xff]
    %v3462 = vld [vmem:[%s15 + $0x8] sm:$0xff]
    %v3463 = vld [vmem:[%s15 + $0x10] sm:$0xff]
    %v3464 = vld [vmem:[%s15 + $0x18] sm:$0xff]
    %v3465 = vld [vmem:[%s15 + $0x20] sm:$0xff]
    %v3466 = vld [vmem:[%s15 + $0x28] sm:$0xff]
    %v3467 = vld [vmem:[%s15 + $0x30] sm:$0xff]
    %v3468 = vld [vmem:[%s15 + $0x38] sm:$0xff]
    %v3469 = vld [vmem:[%s15 + $0x40] sm:$0xff]
    %v3470 = vld [vmem:[%s15 + $0x48] sm:$0xff]
    %v3471 = vld [vmem:[%s15 + $0x50] sm:$0xff]
    %v3472 = vld [vmem:[%s15 + $0x58] sm:$0xff]
    %v3473 = vld [vmem:[%s15 + $0x60] sm:$0xff]
    %v3474 = vld [vmem:[%s15 + $0x68] sm:$0xff]
    %v3475 = vld [vmem:[%s15 + $0x70] sm:$0xff]
    %v3476 = vld [vmem:[%s15 + $0x78] sm:$0xff]
    %v3477 = vld [vmem:[%s16] sm:$0x1]
    %v3479 = vlaneseq
    %v3480 = vshrl.u32 %v3479, 7
    %v3481 = vsub.s32 0, %v3480
    %v3482 = vrot.slane %v3477, %v3481
    %3484 = vmatprep.subr.mxu0 0.0
    %3485 = vmatpush1.msra.mxu0 %v3476
    %3486 = vmatprep.subr.mxu0 0.0
    %3487 = vmatpush1.msra.mxu0 %v3475
    %3488 = vmatprep.subr.mxu0 0.0
    %3489 = vmatpush1.msra.mxu0 %v3474
    %3490 = vmatprep.subr.mxu0 0.0
    %3491 = vmatpush1.msra.mxu0 %v3473
    %3492 = vmatprep.subr.mxu0 0.0
    %3493 = vmatpush1.msra.mxu0 %v3472
    %3494 = vmatprep.subr.mxu0 0.0
    %3495 = vmatpush1.msra.mxu0 %v3471
    %3496 = vmatprep.subr.mxu0 0.0
    %3497 = vmatpush1.msra.mxu0 %v3470
    %3498 = vmatprep.subr.mxu0 0.0
    %3499 = vmatpush1.msra.mxu0 %v3469
    %3500 = vmatprep.subr.mxu0 0.0
    %3501 = vmatpush1.msra.mxu0 %v3468
    %3502 = vmatprep.subr.mxu0 0.0
    %3503 = vmatpush1.msra.mxu0 %v3467
    %3504 = vmatprep.subr.mxu0 0.0
    %3505 = vmatpush1.msra.mxu0 %v3466
    %3506 = vmatprep.subr.mxu0 0.0
    %3507 = vmatpush1.msra.mxu0 %v3465
    %3508 = vmatprep.subr.mxu0 0.0
    %3509 = vmatpush1.msra.mxu0 %v3464
    %3510 = vmatprep.subr.mxu0 0.0
    %3511 = vmatpush1.msra.mxu0 %v3463
    %3512 = vmatprep.subr.mxu0 0.0
    %3513 = vmatpush1.msra.mxu0 %v3462
    %3514 = vmatprep.subr.mxu0 0.0
    %3515 = vmatpush1.msra.mxu0 %v3461
    %3516 = vmatprep.subr.mxu0 0.0
    %3517 = vmatpush2.msra.mxu0 0.0
    %3518 = vmatprep.subr.mxu0 0.0
    %3519 = vmatpush2.msra.mxu0 0.0
    %3520 = vmatprep.subr.mxu0 0.0
    %3521 = vmatpush2.msra.mxu0 0.0
    %3522 = vmatprep.subr.mxu0 0.0
    %3523 = vmatpush2.msra.mxu0 0.0
    %3524 = vmatprep.subr.mxu0 0.0
    %3525 = vmatpush2.msra.mxu0 0.0
    %3526 = vmatprep.subr.mxu0 0.0
    %3527 = vmatpush2.msra.mxu0 0.0
    %3528 = vmatprep.subr.mxu0 0.0
    %3529 = vmatpush2.msra.mxu0 0.0
    %3530 = vmatprep.subr.mxu0 0.0
    %3531 = vmatpush2.msra.mxu0 0.0
    %3532 = vmatprep.subr.mxu0 0.0
    %3533 = vmatpush2.msra.mxu0 0.0
    %3534 = vmatprep.subr.mxu0 0.0
    %3535 = vmatpush2.msra.mxu0 0.0
    %3536 = vmatprep.subr.mxu0 0.0
    %3537 = vmatpush2.msra.mxu0 0.0
    %3538 = vmatprep.subr.mxu0 0.0
    %3539 = vmatpush2.msra.mxu0 0.0
    %3540 = vmatprep.subr.mxu0 0.0
    %3541 = vmatpush2.msra.mxu0 0.0
    %3542 = vmatprep.subr.mxu0 0.0
    %3543 = vmatpush2.msra.mxu0 0.0
    %3544 = vmatprep.subr.mxu0 0.0
    %3545 = vmatpush2.msra.mxu0 0.0
    %3546 = vmatprep.subr.mxu0 0.0
    %3547 = vmatpush2.msra.mxu0 0.0
    %3548 = vmatprep.mubr.f32.mxu0 0.0
    %3549 = vmatmul.mubr.f32.gmra.mxu0 %v3457
    %v3550 = vpop.f32.mrf.mxu0
    %v3551 = vadd.f32 %v3482, %v3550
    %v3552 = vpop.f32.mrf.mxu0
    %3553 = vmatprep.mubr.f32.mxu0 0.0
    %3554 = vmatmul.mubr.f32.gmra.mxu0 %v3458
    %v3555 = vpop.f32.mrf.mxu0
    %v3556 = vadd.f32 %v3482, %v3555
    %v3557 = vpop.f32.mrf.mxu0
    %3558 = vmatprep.mubr.f32.mxu0 0.0
    %3559 = vmatmul.mubr.f32.gmra.mxu0 %v3459
    %v3560 = vpop.f32.mrf.mxu0
    %v3561 = vadd.f32 %v3482, %v3560
    %v3562 = vpop.f32.mrf.mxu0
    %3563 = vmatprep.mubr.f32.mxu0 0.0
    %3564 = vmatmul.mubr.f32.gmra.mxu0 %v3460
    %v3565 = vpop.f32.mrf.mxu0
    %v3566 = vadd.f32 %v3482, %v3565
    %v3567 = vpop.f32.mrf.mxu0
    %3568 = vdwg.mxu0
    %v3569 = vadd.f32 %v3255, %v3551
    %v3570 = vadd.f32 %v3256, %v3556
    %v3571 = vadd.f32 %v3257, %v3561
    %v3572 = vadd.f32 %v3258, %v3566
    %3573 = vst.msk [vmem:[#allocation2] sm:$0xff] %vm63, %v3569
    %3574 = vst.msk [vmem:[#allocation2 + $0x8] sm:$0xff] %vm63, %v3570
    %3575 = vst.msk [vmem:[#allocation2 + $0x10] sm:$0xff] %vm63, %v3571
    %3576 = vst.msk [vmem:[#allocation2 + $0x18] sm:$0xff] %vm63, %v3572
    // Predicated region
    $region70: #{tpu_custom_call.1} parent=1 // pred_check
      _
    $region71: #{tpu_custom_call.1} parent=1 // pred_check_branch
      %3578 = sbr.rel (0) target = $region73
    $region72: #{tpu_custom_call.1} parent=1 // pred_region
      %s3580 = ssub.s32 512, 512
      %3581 = vsyncadd [#allocation3], %s3580
      %s3582 = sshll.u32 [#allocation2], 4
      %s3583 = int_to_ptr.vmem [resolvable:$true] %s3582
      %3588 = dma.vmem_to_hbm [thread:$0]  %s3583, 512, %s17, [#allocation3], 128, 128, 8
    $region73: #{tpu_custom_call.1} parent=1 // pred_fallthru
      _
    // Predicated region
    $region74: #{tpu_custom_call.1} parent=1 // pred_check
      _
    $region75: #{tpu_custom_call.1} parent=1 // pred_check_branch
      %3590 = sbr.rel (0) target = $region77
    $region76: #{tpu_custom_call.1} parent=1 // pred_region
      %3591 = dma.done [#allocation3], 512
    $region77: #{tpu_custom_call.1} parent=1 // pred_fallthru
      _
    %3592 = vsyncpa [#allocation3], 1

</llo_original>
